<compile_context>
chip_gen: v7x
topology: tpu7x:2x2x1
jax: 0.10.0
libtpu: 0.0.40
codegen_flags: <defaults>
</compile_context>

<pallas_src>
import functools

import jax
import jax.numpy as jnp
from jax.experimental import pallas as pl
from jax.experimental.pallas import tpu as pltpu

EPS = 1e-5


def _resnet_block_kernel(x_ref, w1_ref, p1_ref, w2_ref, p2_ref, o_ref,
                         pad_ref, colt_ref, *, H, W, C, compute_dtype):
    """Fused ResnetBlock forward for one image.

    x_ref : (1, C, H*W)  input, channels on sublanes, spatial on lanes (dense)
    wX_ref: (9*C, C)     conv weights, rows ordered (ky*3 + kx)*C + cin
    pX_ref: (3, C)       rows = [conv bias, IN gamma, IN beta]
    o_ref : (1, C, H*W)  output (x + conv_block(x))
    pad_ref : VMEM (H+2, W+2, C) f32   reflect-padded tile (reused twice)
    colt_ref: VMEM (9*C, H*W)    f32   transposed im2col buffer (reused twice)
    """
    HW = H * W

    x_cs = x_ref[0]                         # (C, HW), lane-dense load
    x_hwc = x_cs.T.reshape(H, W, C)         # (H, W, C) working layout

    def reflect_pad_to_scratch(v):
        # ReflectionPad2d(1): pad[i, j] = v[reflect(i-1), reflect(j-1)]
        pad_ref[1:H + 1, 1:W + 1, :] = v
        pad_ref[0:1, 1:W + 1, :] = v[1:2, :, :]               # top row
        pad_ref[H + 1:H + 2, 1:W + 1, :] = v[H - 2:H - 1, :, :]  # bottom row
        # columns (corners come for free since rows 0 / H+1 already filled)
        pad_ref[:, 0:1, :] = pad_ref[:, 2:3, :]
        pad_ref[:, W + 1:W + 2, :] = pad_ref[:, W - 1:W, :]

    def conv3x3(w_ref):
        # Pack the 9 shifted taps into colT (9*C, HW), then a single matmul
        # with K = 9*C (instead of nine K=C matmuls + 8 accumulator adds).
        padv = pad_ref[...]                 # (H+2, W+2, C)
        for ky in range(3):
            for kx in range(3):
                t = ky * 3 + kx
                tap = padv[ky:ky + H, kx:kx + W, :].reshape(HW, C)
                colt_ref[t * C:(t + 1) * C, :] = tap.T
        col = colt_ref[...].T               # (HW, 9*C)
        return jnp.dot(col.astype(compute_dtype), w_ref[...],
                       preferred_element_type=jnp.float32)   # (HW, C) f32

    def inst_norm_affine(acc, p_ref):
        # Single-pass InstanceNorm2d (biased var) + affine, per channel over
        # the spatial axis; conv bias added first (matches PyTorch ordering).
        b = p_ref[0:1, :]
        g = p_ref[1:2, :]
        bt = p_ref[2:3, :]
        acc = acc + b
        inv_n = 1.0 / HW
        mean = jnp.sum(acc, axis=0, keepdims=True) * inv_n
        msq = jnp.sum(acc * acc, axis=0, keepdims=True) * inv_n
        var = jnp.maximum(msq - mean * mean, 0.0)
        scale = g * jax.lax.rsqrt(var + EPS)
        shift = bt - mean * scale
        return acc * scale + shift

    # stage 1: reflect-pad -> conv1 -> IN1 -> ReLU
    reflect_pad_to_scratch(x_hwc)
    h = inst_norm_affine(conv3x3(w1_ref), p1_ref)
    h = jnp.maximum(h, 0.0)                 # (HW, C)

    # stage 2: reflect-pad -> conv2 -> IN2 -> residual add
    reflect_pad_to_scratch(h.reshape(H, W, C))
    y = inst_norm_affine(conv3x3(w2_ref), p2_ref)

    o_ref[0] = x_cs + y.T                   # (C, HW), lane-dense store


@functools.partial(jax.jit, static_argnames=("compute_dtype",))
def resnet_block_pallas(x_nchw, params, compute_dtype=jnp.float32):
    """x_nchw: (N, C, H, W) float32.  params: dict of weights (see init)."""
    N, C, H, W = x_nchw.shape
    HW = H * W
    x_flat = x_nchw.reshape(N, C, HW).astype(jnp.float32)   # free reshape

    def prep_w(w_hwio):          # (3,3,Cin,Cout) HWIO -> (9*Cin, Cout)
        return w_hwio.reshape(9 * C, C).astype(compute_dtype)

    w1 = prep_w(params["w1"])
    w2 = prep_w(params["w2"])
    p1 = jnp.stack([params["b1"], params["g1"], params["bt1"]]).astype(jnp.float32)
    p2 = jnp.stack([params["b2"], params["g2"], params["bt2"]]).astype(jnp.float32)

    kernel = functools.partial(_resnet_block_kernel, H=H, W=W, C=C,
                               compute_dtype=compute_dtype)

    out_flat = pl.pallas_call(
        kernel,
        out_shape=jax.ShapeDtypeStruct((N, C, HW), jnp.float32),
        grid_spec=pltpu.PrefetchScalarGridSpec(
            num_scalar_prefetch=0,
            grid=(N,),
            in_specs=[
                pl.BlockSpec((1, C, HW), lambda n: (n, 0, 0)),   # x
                pl.BlockSpec((9 * C, C), lambda n: (0, 0)),      # w1
                pl.BlockSpec((3, C), lambda n: (0, 0)),          # b1/g1/bt1
                pl.BlockSpec((9 * C, C), lambda n: (0, 0)),      # w2
                pl.BlockSpec((3, C), lambda n: (0, 0)),          # b2/g2/bt2
            ],
            out_specs=pl.BlockSpec((1, C, HW), lambda n: (n, 0, 0)),
            scratch_shapes=[
                pltpu.VMEM((H + 2, W + 2, C), jnp.float32),      # padded tile
                pltpu.VMEM((9 * C, HW), jnp.float32),            # im2col (T)
            ],
        ),
        compiler_params=pltpu.CompilerParams(
            dimension_semantics=("parallel",),
            vmem_limit_bytes=48 * 1024 * 1024,
        ),
    )(x_flat, w1, p1, w2, p2)

    return out_flat.reshape(N, C, H, W)


def resnet_block_reference(x_nchw, params, compute_dtype=jnp.float32):
    """Pure-JAX reference.  compute_dtype rounds conv operands (for bf16 check)."""
    x = jnp.transpose(x_nchw, (0, 2, 3, 1)).astype(jnp.float32)

    def conv_in(h, w_hwio, b, g, bt, relu):
        hp = jnp.pad(h, ((0, 0), (1, 1), (1, 1), (0, 0)), mode="reflect")
        y = jax.lax.conv_general_dilated(
            hp.astype(compute_dtype).astype(jnp.float32),
            w_hwio.astype(compute_dtype).astype(jnp.float32),
            window_strides=(1, 1), padding="VALID",
            dimension_numbers=("NHWC", "HWIO", "NHWC")) + b
        mean = jnp.mean(y, axis=(1, 2), keepdims=True)
        var = jnp.mean((y - mean) ** 2, axis=(1, 2), keepdims=True)
        y = (y - mean) * jax.lax.rsqrt(var + EPS) * g + bt
        return jnp.maximum(y, 0.0) if relu else y

    h = conv_in(x, params["w1"], params["b1"], params["g1"], params["bt1"], True)
    h = conv_in(h, params["w2"], params["b2"], params["g2"], params["bt2"], False)
    return jnp.transpose(x + h, (0, 3, 1, 2))


def init_params(key, dim):
    ks = jax.random.split(key, 8)
    scale = 1.0 / jnp.sqrt(9.0 * dim)
    return {
        # conv weights stored HWIO: (3, 3, Cin, Cout)
        "w1": jax.random.normal(ks[0], (3, 3, dim, dim), jnp.float32) * scale,
        "b1": jax.random.normal(ks[1], (dim,), jnp.float32) * 0.1,
        "g1": 1.0 + 0.1 * jax.random.normal(ks[2], (dim,), jnp.float32),
        "bt1": 0.1 * jax.random.normal(ks[3], (dim,), jnp.float32),
        "w2": jax.random.normal(ks[4], (3, 3, dim, dim), jnp.float32) * scale,
        "b2": jax.random.normal(ks[5], (dim,), jnp.float32) * 0.1,
        "g2": 1.0 + 0.1 * jax.random.normal(ks[6], (dim,), jnp.float32),
        "bt2": 0.1 * jax.random.normal(ks[7], (dim,), jnp.float32),
    }


if __name__ == "__main__":
    key = jax.random.PRNGKey(0)
    k_x, k_p = jax.random.split(key)

    N, C, H, W = 2, 4, 16, 16
    x = jax.random.normal(k_x, (N, C, H, W), jnp.float32)
    params = init_params(k_p, C)

    # f32 path: must match PyTorch-equivalent reference tightly.
    out = jax.block_until_ready(resnet_block_pallas(x, params))
    ref = jax.block_until_ready(resnet_block_reference(x, params))
    assert out.shape == (N, C, H, W)
    err = float(jnp.max(jnp.abs(out - ref)))
    assert jnp.allclose(out, ref, rtol=2e-4, atol=2e-4), err

    # bf16 MXU-operand path (f32 accumulation) vs a bf16-rounded reference.
    out_bf = jax.block_until_ready(
        resnet_block_pallas(x, params, compute_dtype=jnp.bfloat16))
    ref_bf = jax.block_until_ready(
        resnet_block_reference(x, params, compute_dtype=jnp.bfloat16))
    err_bf = float(jnp.max(jnp.abs(out_bf - ref_bf)))
    assert jnp.allclose(out_bf, ref_bf, rtol=2e-2, atol=2e-2), err_bf

    print("KERNEL_OK")
</pallas_src>

<mosaic_0001>
module attributes {stable_mosaic.version = 11 : i64} {
  func.func @_resnet_block_kernel(%arg0: i32, %arg1: memref<1x4x256xf32, #tpu.memory_space<vmem>>, %arg2: memref<36x4xf32, #tpu.memory_space<vmem>>, %arg3: memref<3x4xf32, #tpu.memory_space<vmem>>, %arg4: memref<36x4xf32, #tpu.memory_space<vmem>>, %arg5: memref<3x4xf32, #tpu.memory_space<vmem>>, %arg6: memref<1x4x256xf32, #tpu.memory_space<vmem>>, %arg7: memref<18x18x4xf32, #tpu.memory_space<vmem>>, %arg8: memref<36x256xf32, #tpu.memory_space<vmem>>) attributes {dimension_semantics = [#tpu.dimension_semantics<parallel>], iteration_bounds = array<i64: 2>, scalar_prefetch = 0 : i64, scratch_operands = 2 : i64, tpu.core_type = #tpu.core_type<tc>, window_params = [{transform_indices = @transform_0, window_bounds = array<i64: 1, 4, 256>}, {pipeline_mode = #tpu.pipeline_mode<synchronous>, transform_indices = @transform_1, window_bounds = array<i64: 36, 4>}, {pipeline_mode = #tpu.pipeline_mode<synchronous>, transform_indices = @transform_2, window_bounds = array<i64: 3, 4>}, {pipeline_mode = #tpu.pipeline_mode<synchronous>, transform_indices = @transform_3, window_bounds = array<i64: 36, 4>}, {pipeline_mode = #tpu.pipeline_mode<synchronous>, transform_indices = @transform_4, window_bounds = array<i64: 3, 4>}, {transform_indices = @transform_5, window_bounds = array<i64: 1, 4, 256>}]} {
    %c0 = arith.constant 0 : index
    %c0_0 = arith.constant 0 : index
    %c0_1 = arith.constant 0 : index
    %0 = vector.load %arg1[%c0, %c0_0, %c0_1] : memref<1x4x256xf32, #tpu.memory_space<vmem>>, vector<1x4x256xf32>
    %1 = vector.shape_cast %0 : vector<1x4x256xf32> to vector<4x256xf32>
    %2 = tpu.transpose %1, [1, 0] : vector<4x256xf32> -> vector<256x4xf32>
    %3 = vector.shape_cast %2 : vector<256x4xf32> to vector<16x16x4xf32>
    %c1 = arith.constant 1 : index
    %c1_2 = arith.constant 1 : index
    %c0_3 = arith.constant 0 : index
    %4 = vector.load %arg7[%c1, %c1_2, %c0_3] : memref<18x18x4xf32, #tpu.memory_space<vmem>>, vector<16x16x4xf32>
    tpu.vector_store %arg7[%c1, %c1_2, %c0_3], %3 {strides = array<i32>} : memref<18x18x4xf32, #tpu.memory_space<vmem>>, vector<16x16x4xf32>,
    %5 = vector.extract_strided_slice %3 {offsets = [1, 0, 0], sizes = [1, 16, 4], strides = [1, 1, 1]} : vector<16x16x4xf32> to vector<1x16x4xf32>
    %c0_4 = arith.constant 0 : index
    %c1_5 = arith.constant 1 : index
    %c0_6 = arith.constant 0 : index
    %6 = vector.load %arg7[%c0_4, %c1_5, %c0_6] : memref<18x18x4xf32, #tpu.memory_space<vmem>>, vector<1x16x4xf32>
    tpu.vector_store %arg7[%c0_4, %c1_5, %c0_6], %5 {strides = array<i32>} : memref<18x18x4xf32, #tpu.memory_space<vmem>>, vector<1x16x4xf32>,
    %7 = vector.extract_strided_slice %3 {offsets = [14, 0, 0], sizes = [1, 16, 4], strides = [1, 1, 1]} : vector<16x16x4xf32> to vector<1x16x4xf32>
    %c17 = arith.constant 17 : index
    %c1_7 = arith.constant 1 : index
    %c0_8 = arith.constant 0 : index
    %8 = vector.load %arg7[%c17, %c1_7, %c0_8] : memref<18x18x4xf32, #tpu.memory_space<vmem>>, vector<1x16x4xf32>
    tpu.vector_store %arg7[%c17, %c1_7, %c0_8], %7 {strides = array<i32>} : memref<18x18x4xf32, #tpu.memory_space<vmem>>, vector<1x16x4xf32>,
    %c0_9 = arith.constant 0 : index
    %c2 = arith.constant 2 : index
    %c0_10 = arith.constant 0 : index
    %9 = vector.load %arg7[%c0_9, %c2, %c0_10] : memref<18x18x4xf32, #tpu.memory_space<vmem>>, vector<18x1x4xf32>
    %c0_11 = arith.constant 0 : index
    %c0_12 = arith.constant 0 : index
    %c0_13 = arith.constant 0 : index
    %10 = vector.load %arg7[%c0_11, %c0_12, %c0_13] : memref<18x18x4xf32, #tpu.memory_space<vmem>>, vector<18x1x4xf32>
    tpu.vector_store %arg7[%c0_11, %c0_12, %c0_13], %9 {strides = array<i32>} : memref<18x18x4xf32, #tpu.memory_space<vmem>>, vector<18x1x4xf32>,
    %c0_14 = arith.constant 0 : index
    %c15 = arith.constant 15 : index
    %c0_15 = arith.constant 0 : index
    %11 = vector.load %arg7[%c0_14, %c15, %c0_15] : memref<18x18x4xf32, #tpu.memory_space<vmem>>, vector<18x1x4xf32>
    %c0_16 = arith.constant 0 : index
    %c17_17 = arith.constant 17 : index
    %c0_18 = arith.constant 0 : index
    %12 = vector.load %arg7[%c0_16, %c17_17, %c0_18] : memref<18x18x4xf32, #tpu.memory_space<vmem>>, vector<18x1x4xf32>
    tpu.vector_store %arg7[%c0_16, %c17_17, %c0_18], %11 {strides = array<i32>} : memref<18x18x4xf32, #tpu.memory_space<vmem>>, vector<18x1x4xf32>,
    %c0_19 = arith.constant 0 : index
    %c0_20 = arith.constant 0 : index
    %c0_21 = arith.constant 0 : index
    %13 = vector.load %arg7[%c0_19, %c0_20, %c0_21] : memref<18x18x4xf32, #tpu.memory_space<vmem>>, vector<18x18x4xf32>
    %14 = vector.extract_strided_slice %13 {offsets = [0, 0, 0], sizes = [16, 16, 4], strides = [1, 1, 1]} : vector<18x18x4xf32> to vector<16x16x4xf32>
    %15 = vector.shape_cast %14 : vector<16x16x4xf32> to vector<256x4xf32>
    %16 = tpu.transpose %15, [1, 0] : vector<256x4xf32> -> vector<4x256xf32>
    %c0_22 = arith.constant 0 : index
    %c0_23 = arith.constant 0 : index
    %17 = vector.load %arg8[%c0_22, %c0_23] : memref<36x256xf32, #tpu.memory_space<vmem>>, vector<4x256xf32>
    tpu.vector_store %arg8[%c0_22, %c0_23], %16 {strides = array<i32>} : memref<36x256xf32, #tpu.memory_space<vmem>>, vector<4x256xf32>,
    %18 = vector.extract_strided_slice %13 {offsets = [0, 1, 0], sizes = [16, 16, 4], strides = [1, 1, 1]} : vector<18x18x4xf32> to vector<16x16x4xf32>
    %19 = vector.shape_cast %18 : vector<16x16x4xf32> to vector<256x4xf32>
    %20 = tpu.transpose %19, [1, 0] : vector<256x4xf32> -> vector<4x256xf32>
    %c4 = arith.constant 4 : index
    %c0_24 = arith.constant 0 : index
    %21 = vector.load %arg8[%c4, %c0_24] : memref<36x256xf32, #tpu.memory_space<vmem>>, vector<4x256xf32>
    tpu.vector_store %arg8[%c4, %c0_24], %20 {strides = array<i32>} : memref<36x256xf32, #tpu.memory_space<vmem>>, vector<4x256xf32>,
    %22 = vector.extract_strided_slice %13 {offsets = [0, 2, 0], sizes = [16, 16, 4], strides = [1, 1, 1]} : vector<18x18x4xf32> to vector<16x16x4xf32>
    %23 = vector.shape_cast %22 : vector<16x16x4xf32> to vector<256x4xf32>
    %24 = tpu.transpose %23, [1, 0] : vector<256x4xf32> -> vector<4x256xf32>
    %c8 = arith.constant 8 : index
    %c0_25 = arith.constant 0 : index
    %25 = vector.load %arg8[%c8, %c0_25] : memref<36x256xf32, #tpu.memory_space<vmem>>, vector<4x256xf32>
    tpu.vector_store %arg8[%c8, %c0_25], %24 {strides = array<i32>} : memref<36x256xf32, #tpu.memory_space<vmem>>, vector<4x256xf32>,
    %26 = vector.extract_strided_slice %13 {offsets = [1, 0, 0], sizes = [16, 16, 4], strides = [1, 1, 1]} : vector<18x18x4xf32> to vector<16x16x4xf32>
    %27 = vector.shape_cast %26 : vector<16x16x4xf32> to vector<256x4xf32>
    %28 = tpu.transpose %27, [1, 0] : vector<256x4xf32> -> vector<4x256xf32>
    %c12 = arith.constant 12 : index
    %c0_26 = arith.constant 0 : index
    %29 = vector.load %arg8[%c12, %c0_26] : memref<36x256xf32, #tpu.memory_space<vmem>>, vector<4x256xf32>
    tpu.vector_store %arg8[%c12, %c0_26], %28 {strides = array<i32>} : memref<36x256xf32, #tpu.memory_space<vmem>>, vector<4x256xf32>,
    %30 = vector.extract_strided_slice %13 {offsets = [1, 1, 0], sizes = [16, 16, 4], strides = [1, 1, 1]} : vector<18x18x4xf32> to vector<16x16x4xf32>
    %31 = vector.shape_cast %30 : vector<16x16x4xf32> to vector<256x4xf32>
    %32 = tpu.transpose %31, [1, 0] : vector<256x4xf32> -> vector<4x256xf32>
    %c16 = arith.constant 16 : index
    %c0_27 = arith.constant 0 : index
    %33 = vector.load %arg8[%c16, %c0_27] : memref<36x256xf32, #tpu.memory_space<vmem>>, vector<4x256xf32>
    tpu.vector_store %arg8[%c16, %c0_27], %32 {strides = array<i32>} : memref<36x256xf32, #tpu.memory_space<vmem>>, vector<4x256xf32>,
    %34 = vector.extract_strided_slice %13 {offsets = [1, 2, 0], sizes = [16, 16, 4], strides = [1, 1, 1]} : vector<18x18x4xf32> to vector<16x16x4xf32>
    %35 = vector.shape_cast %34 : vector<16x16x4xf32> to vector<256x4xf32>
    %36 = tpu.transpose %35, [1, 0] : vector<256x4xf32> -> vector<4x256xf32>
    %c20 = arith.constant 20 : index
    %c0_28 = arith.constant 0 : index
    %37 = vector.load %arg8[%c20, %c0_28] : memref<36x256xf32, #tpu.memory_space<vmem>>, vector<4x256xf32>
    tpu.vector_store %arg8[%c20, %c0_28], %36 {strides = array<i32>} : memref<36x256xf32, #tpu.memory_space<vmem>>, vector<4x256xf32>,
    %38 = vector.extract_strided_slice %13 {offsets = [2, 0, 0], sizes = [16, 16, 4], strides = [1, 1, 1]} : vector<18x18x4xf32> to vector<16x16x4xf32>
    %39 = vector.shape_cast %38 : vector<16x16x4xf32> to vector<256x4xf32>
    %40 = tpu.transpose %39, [1, 0] : vector<256x4xf32> -> vector<4x256xf32>
    %c24 = arith.constant 24 : index
    %c0_29 = arith.constant 0 : index
    %41 = vector.load %arg8[%c24, %c0_29] : memref<36x256xf32, #tpu.memory_space<vmem>>, vector<4x256xf32>
    tpu.vector_store %arg8[%c24, %c0_29], %40 {strides = array<i32>} : memref<36x256xf32, #tpu.memory_space<vmem>>, vector<4x256xf32>,
    %42 = vector.extract_strided_slice %13 {offsets = [2, 1, 0], sizes = [16, 16, 4], strides = [1, 1, 1]} : vector<18x18x4xf32> to vector<16x16x4xf32>
    %43 = vector.shape_cast %42 : vector<16x16x4xf32> to vector<256x4xf32>
    %44 = tpu.transpose %43, [1, 0] : vector<256x4xf32> -> vector<4x256xf32>
    %c28 = arith.constant 28 : index
    %c0_30 = arith.constant 0 : index
    %45 = vector.load %arg8[%c28, %c0_30] : memref<36x256xf32, #tpu.memory_space<vmem>>, vector<4x256xf32>
    tpu.vector_store %arg8[%c28, %c0_30], %44 {strides = array<i32>} : memref<36x256xf32, #tpu.memory_space<vmem>>, vector<4x256xf32>,
    %46 = vector.extract_strided_slice %13 {offsets = [2, 2, 0], sizes = [16, 16, 4], strides = [1, 1, 1]} : vector<18x18x4xf32> to vector<16x16x4xf32>
    %47 = vector.shape_cast %46 : vector<16x16x4xf32> to vector<256x4xf32>
    %48 = tpu.transpose %47, [1, 0] : vector<256x4xf32> -> vector<4x256xf32>
    %c32 = arith.constant 32 : index
    %c0_31 = arith.constant 0 : index
    %49 = vector.load %arg8[%c32, %c0_31] : memref<36x256xf32, #tpu.memory_space<vmem>>, vector<4x256xf32>
    tpu.vector_store %arg8[%c32, %c0_31], %48 {strides = array<i32>} : memref<36x256xf32, #tpu.memory_space<vmem>>, vector<4x256xf32>,
    %c0_32 = arith.constant 0 : index
    %c0_33 = arith.constant 0 : index
    %50 = vector.load %arg8[%c0_32, %c0_33] : memref<36x256xf32, #tpu.memory_space<vmem>>, vector<36x256xf32>
    %51 = tpu.transpose %50, [1, 0] : vector<36x256xf32> -> vector<256x36xf32>
    %c0_34 = arith.constant 0 : index
    %c0_35 = arith.constant 0 : index
    %52 = vector.load %arg2[%c0_34, %c0_35] : memref<36x4xf32, #tpu.memory_space<vmem>>, vector<36x4xf32>
    %cst = arith.constant dense<0.000000e+00> : vector<256x4xf32>
    %53 = tpu.matmul %51, %52, %cst {dimension_numbers = #tpu.dot_dimension_numbers<[1], [0], [0], [1], [0, 0, 1, 1], [], []>} : vector<256x36xf32>, vector<36x4xf32>, vector<256x4xf32> -> vector<256x4xf32>
    %c0_36 = arith.constant 0 : index
    %c0_37 = arith.constant 0 : index
    %54 = vector.load %arg3[%c0_36, %c0_37] : memref<3x4xf32, #tpu.memory_space<vmem>>, vector<1x4xf32>
    %c1_38 = arith.constant 1 : index
    %c0_39 = arith.constant 0 : index
    %55 = vector.load %arg3[%c1_38, %c0_39] : memref<3x4xf32, #tpu.memory_space<vmem>>, vector<1x4xf32>
    %c2_40 = arith.constant 2 : index
    %c0_41 = arith.constant 0 : index
    %56 = vector.load %arg3[%c2_40, %c0_41] : memref<3x4xf32, #tpu.memory_space<vmem>>, vector<1x4xf32>
    %57 = vector.broadcast %54 : vector<1x4xf32> to vector<256x4xf32>
    %58 = arith.addf %53, %57 : vector<256x4xf32>
    %cst_42 = arith.constant dense<0.000000e+00> : vector<4xf32>
    %59 = vector.multi_reduction <add>, %58, %cst_42 [0] : vector<256x4xf32> to vector<4xf32>
    %60 = vector.shape_cast %59 : vector<4xf32> to vector<1x4xf32>
    %cst_43 = arith.constant 3.906250e-03 : f32
    %61 = vector.broadcast %cst_43 : f32 to vector<1x4xf32>
    %62 = arith.mulf %60, %61 : vector<1x4xf32>
    %63 = arith.mulf %58, %58 : vector<256x4xf32>
    %cst_44 = arith.constant dense<0.000000e+00> : vector<4xf32>
    %64 = vector.multi_reduction <add>, %63, %cst_44 [0] : vector<256x4xf32> to vector<4xf32>
    %65 = vector.shape_cast %64 : vector<4xf32> to vector<1x4xf32>
    %cst_45 = arith.constant 3.906250e-03 : f32
    %66 = vector.broadcast %cst_45 : f32 to vector<1x4xf32>
    %67 = arith.mulf %65, %66 : vector<1x4xf32>
    %68 = arith.mulf %62, %62 : vector<1x4xf32>
    %69 = arith.subf %67, %68 : vector<1x4xf32>
    %cst_46 = arith.constant 0.000000e+00 : f32
    %70 = vector.broadcast %cst_46 : f32 to vector<1x4xf32>
    %71 = arith.maximumf %69, %70 : vector<1x4xf32>
    %cst_47 = arith.constant 9.99999974E-6 : f32
    %72 = vector.broadcast %cst_47 : f32 to vector<1x4xf32>
    %73 = arith.addf %71, %72 : vector<1x4xf32>
    %74 = math.rsqrt %73 : vector<1x4xf32>
    %75 = arith.mulf %55, %74 : vector<1x4xf32>
    %76 = arith.mulf %62, %75 : vector<1x4xf32>
    %77 = arith.subf %56, %76 : vector<1x4xf32>
    %78 = vector.broadcast %75 : vector<1x4xf32> to vector<256x4xf32>
    %79 = arith.mulf %58, %78 : vector<256x4xf32>
    %80 = vector.broadcast %77 : vector<1x4xf32> to vector<256x4xf32>
    %81 = arith.addf %79, %80 : vector<256x4xf32>
    %cst_48 = arith.constant 0.000000e+00 : f32
    %82 = vector.broadcast %cst_48 : f32 to vector<256x4xf32>
    %83 = arith.maximumf %81, %82 : vector<256x4xf32>
    %84 = vector.shape_cast %83 : vector<256x4xf32> to vector<16x16x4xf32>
    %c1_49 = arith.constant 1 : index
    %c1_50 = arith.constant 1 : index
    %c0_51 = arith.constant 0 : index
    %85 = vector.load %arg7[%c1_49, %c1_50, %c0_51] : memref<18x18x4xf32, #tpu.memory_space<vmem>>, vector<16x16x4xf32>
    tpu.vector_store %arg7[%c1_49, %c1_50, %c0_51], %84 {strides = array<i32>} : memref<18x18x4xf32, #tpu.memory_space<vmem>>, vector<16x16x4xf32>,
    %86 = vector.extract_strided_slice %84 {offsets = [1, 0, 0], sizes = [1, 16, 4], strides = [1, 1, 1]} : vector<16x16x4xf32> to vector<1x16x4xf32>
    %c0_52 = arith.constant 0 : index
    %c1_53 = arith.constant 1 : index
    %c0_54 = arith.constant 0 : index
    %87 = vector.load %arg7[%c0_52, %c1_53, %c0_54] : memref<18x18x4xf32, #tpu.memory_space<vmem>>, vector<1x16x4xf32>
    tpu.vector_store %arg7[%c0_52, %c1_53, %c0_54], %86 {strides = array<i32>} : memref<18x18x4xf32, #tpu.memory_space<vmem>>, vector<1x16x4xf32>,
    %88 = vector.extract_strided_slice %84 {offsets = [14, 0, 0], sizes = [1, 16, 4], strides = [1, 1, 1]} : vector<16x16x4xf32> to vector<1x16x4xf32>
    %c17_55 = arith.constant 17 : index
    %c1_56 = arith.constant 1 : index
    %c0_57 = arith.constant 0 : index
    %89 = vector.load %arg7[%c17_55, %c1_56, %c0_57] : memref<18x18x4xf32, #tpu.memory_space<vmem>>, vector<1x16x4xf32>
    tpu.vector_store %arg7[%c17_55, %c1_56, %c0_57], %88 {strides = array<i32>} : memref<18x18x4xf32, #tpu.memory_space<vmem>>, vector<1x16x4xf32>,
    %c0_58 = arith.constant 0 : index
    %c2_59 = arith.constant 2 : index
    %c0_60 = arith.constant 0 : index
    %90 = vector.load %arg7[%c0_58, %c2_59, %c0_60] : memref<18x18x4xf32, #tpu.memory_space<vmem>>, vector<18x1x4xf32>
    %c0_61 = arith.constant 0 : index
    %c0_62 = arith.constant 0 : index
    %c0_63 = arith.constant 0 : index
    %91 = vector.load %arg7[%c0_61, %c0_62, %c0_63] : memref<18x18x4xf32, #tpu.memory_space<vmem>>, vector<18x1x4xf32>
    tpu.vector_store %arg7[%c0_61, %c0_62, %c0_63], %90 {strides = array<i32>} : memref<18x18x4xf32, #tpu.memory_space<vmem>>, vector<18x1x4xf32>,
    %c0_64 = arith.constant 0 : index
    %c15_65 = arith.constant 15 : index
    %c0_66 = arith.constant 0 : index
    %92 = vector.load %arg7[%c0_64, %c15_65, %c0_66] : memref<18x18x4xf32, #tpu.memory_space<vmem>>, vector<18x1x4xf32>
    %c0_67 = arith.constant 0 : index
    %c17_68 = arith.constant 17 : index
    %c0_69 = arith.constant 0 : index
    %93 = vector.load %arg7[%c0_67, %c17_68, %c0_69] : memref<18x18x4xf32, #tpu.memory_space<vmem>>, vector<18x1x4xf32>
    tpu.vector_store %arg7[%c0_67, %c17_68, %c0_69], %92 {strides = array<i32>} : memref<18x18x4xf32, #tpu.memory_space<vmem>>, vector<18x1x4xf32>,
    %c0_70 = arith.constant 0 : index
    %c0_71 = arith.constant 0 : index
    %c0_72 = arith.constant 0 : index
    %94 = vector.load %arg7[%c0_70, %c0_71, %c0_72] : memref<18x18x4xf32, #tpu.memory_space<vmem>>, vector<18x18x4xf32>
    %95 = vector.extract_strided_slice %94 {offsets = [0, 0, 0], sizes = [16, 16, 4], strides = [1, 1, 1]} : vector<18x18x4xf32> to vector<16x16x4xf32>
    %96 = vector.shape_cast %95 : vector<16x16x4xf32> to vector<256x4xf32>
    %97 = tpu.transpose %96, [1, 0] : vector<256x4xf32> -> vector<4x256xf32>
    %c0_73 = arith.constant 0 : index
    %c0_74 = arith.constant 0 : index
    %98 = vector.load %arg8[%c0_73, %c0_74] : memref<36x256xf32, #tpu.memory_space<vmem>>, vector<4x256xf32>
    tpu.vector_store %arg8[%c0_73, %c0_74], %97 {strides = array<i32>} : memref<36x256xf32, #tpu.memory_space<vmem>>, vector<4x256xf32>,
    %99 = vector.extract_strided_slice %94 {offsets = [0, 1, 0], sizes = [16, 16, 4], strides = [1, 1, 1]} : vector<18x18x4xf32> to vector<16x16x4xf32>
    %100 = vector.shape_cast %99 : vector<16x16x4xf32> to vector<256x4xf32>
    %101 = tpu.transpose %100, [1, 0] : vector<256x4xf32> -> vector<4x256xf32>
    %c4_75 = arith.constant 4 : index
    %c0_76 = arith.constant 0 : index
    %102 = vector.load %arg8[%c4_75, %c0_76] : memref<36x256xf32, #tpu.memory_space<vmem>>, vector<4x256xf32>
    tpu.vector_store %arg8[%c4_75, %c0_76], %101 {strides = array<i32>} : memref<36x256xf32, #tpu.memory_space<vmem>>, vector<4x256xf32>,
    %103 = vector.extract_strided_slice %94 {offsets = [0, 2, 0], sizes = [16, 16, 4], strides = [1, 1, 1]} : vector<18x18x4xf32> to vector<16x16x4xf32>
    %104 = vector.shape_cast %103 : vector<16x16x4xf32> to vector<256x4xf32>
    %105 = tpu.transpose %104, [1, 0] : vector<256x4xf32> -> vector<4x256xf32>
    %c8_77 = arith.constant 8 : index
    %c0_78 = arith.constant 0 : index
    %106 = vector.load %arg8[%c8_77, %c0_78] : memref<36x256xf32, #tpu.memory_space<vmem>>, vector<4x256xf32>
    tpu.vector_store %arg8[%c8_77, %c0_78], %105 {strides = array<i32>} : memref<36x256xf32, #tpu.memory_space<vmem>>, vector<4x256xf32>,
    %107 = vector.extract_strided_slice %94 {offsets = [1, 0, 0], sizes = [16, 16, 4], strides = [1, 1, 1]} : vector<18x18x4xf32> to vector<16x16x4xf32>
    %108 = vector.shape_cast %107 : vector<16x16x4xf32> to vector<256x4xf32>
    %109 = tpu.transpose %108, [1, 0] : vector<256x4xf32> -> vector<4x256xf32>
    %c12_79 = arith.constant 12 : index
    %c0_80 = arith.constant 0 : index
    %110 = vector.load %arg8[%c12_79, %c0_80] : memref<36x256xf32, #tpu.memory_space<vmem>>, vector<4x256xf32>
    tpu.vector_store %arg8[%c12_79, %c0_80], %109 {strides = array<i32>} : memref<36x256xf32, #tpu.memory_space<vmem>>, vector<4x256xf32>,
    %111 = vector.extract_strided_slice %94 {offsets = [1, 1, 0], sizes = [16, 16, 4], strides = [1, 1, 1]} : vector<18x18x4xf32> to vector<16x16x4xf32>
    %112 = vector.shape_cast %111 : vector<16x16x4xf32> to vector<256x4xf32>
    %113 = tpu.transpose %112, [1, 0] : vector<256x4xf32> -> vector<4x256xf32>
    %c16_81 = arith.constant 16 : index
    %c0_82 = arith.constant 0 : index
    %114 = vector.load %arg8[%c16_81, %c0_82] : memref<36x256xf32, #tpu.memory_space<vmem>>, vector<4x256xf32>
    tpu.vector_store %arg8[%c16_81, %c0_82], %113 {strides = array<i32>} : memref<36x256xf32, #tpu.memory_space<vmem>>, vector<4x256xf32>,
    %115 = vector.extract_strided_slice %94 {offsets = [1, 2, 0], sizes = [16, 16, 4], strides = [1, 1, 1]} : vector<18x18x4xf32> to vector<16x16x4xf32>
    %116 = vector.shape_cast %115 : vector<16x16x4xf32> to vector<256x4xf32>
    %117 = tpu.transpose %116, [1, 0] : vector<256x4xf32> -> vector<4x256xf32>
    %c20_83 = arith.constant 20 : index
    %c0_84 = arith.constant 0 : index
    %118 = vector.load %arg8[%c20_83, %c0_84] : memref<36x256xf32, #tpu.memory_space<vmem>>, vector<4x256xf32>
    tpu.vector_store %arg8[%c20_83, %c0_84], %117 {strides = array<i32>} : memref<36x256xf32, #tpu.memory_space<vmem>>, vector<4x256xf32>,
    %119 = vector.extract_strided_slice %94 {offsets = [2, 0, 0], sizes = [16, 16, 4], strides = [1, 1, 1]} : vector<18x18x4xf32> to vector<16x16x4xf32>
    %120 = vector.shape_cast %119 : vector<16x16x4xf32> to vector<256x4xf32>
    %121 = tpu.transpose %120, [1, 0] : vector<256x4xf32> -> vector<4x256xf32>
    %c24_85 = arith.constant 24 : index
    %c0_86 = arith.constant 0 : index
    %122 = vector.load %arg8[%c24_85, %c0_86] : memref<36x256xf32, #tpu.memory_space<vmem>>, vector<4x256xf32>
    tpu.vector_store %arg8[%c24_85, %c0_86], %121 {strides = array<i32>} : memref<36x256xf32, #tpu.memory_space<vmem>>, vector<4x256xf32>,
    %123 = vector.extract_strided_slice %94 {offsets = [2, 1, 0], sizes = [16, 16, 4], strides = [1, 1, 1]} : vector<18x18x4xf32> to vector<16x16x4xf32>
    %124 = vector.shape_cast %123 : vector<16x16x4xf32> to vector<256x4xf32>
    %125 = tpu.transpose %124, [1, 0] : vector<256x4xf32> -> vector<4x256xf32>
    %c28_87 = arith.constant 28 : index
    %c0_88 = arith.constant 0 : index
    %126 = vector.load %arg8[%c28_87, %c0_88] : memref<36x256xf32, #tpu.memory_space<vmem>>, vector<4x256xf32>
    tpu.vector_store %arg8[%c28_87, %c0_88], %125 {strides = array<i32>} : memref<36x256xf32, #tpu.memory_space<vmem>>, vector<4x256xf32>,
    %127 = vector.extract_strided_slice %94 {offsets = [2, 2, 0], sizes = [16, 16, 4], strides = [1, 1, 1]} : vector<18x18x4xf32> to vector<16x16x4xf32>
    %128 = vector.shape_cast %127 : vector<16x16x4xf32> to vector<256x4xf32>
    %129 = tpu.transpose %128, [1, 0] : vector<256x4xf32> -> vector<4x256xf32>
    %c32_89 = arith.constant 32 : index
    %c0_90 = arith.constant 0 : index
    %130 = vector.load %arg8[%c32_89, %c0_90] : memref<36x256xf32, #tpu.memory_space<vmem>>, vector<4x256xf32>
    tpu.vector_store %arg8[%c32_89, %c0_90], %129 {strides = array<i32>} : memref<36x256xf32, #tpu.memory_space<vmem>>, vector<4x256xf32>,
    %c0_91 = arith.constant 0 : index
    %c0_92 = arith.constant 0 : index
    %131 = vector.load %arg8[%c0_91, %c0_92] : memref<36x256xf32, #tpu.memory_space<vmem>>, vector<36x256xf32>
    %132 = tpu.transpose %131, [1, 0] : vector<36x256xf32> -> vector<256x36xf32>
    %c0_93 = arith.constant 0 : index
    %c0_94 = arith.constant 0 : index
    %133 = vector.load %arg4[%c0_93, %c0_94] : memref<36x4xf32, #tpu.memory_space<vmem>>, vector<36x4xf32>
    %cst_95 = arith.constant dense<0.000000e+00> : vector<256x4xf32>
    %134 = tpu.matmul %132, %133, %cst_95 {dimension_numbers = #tpu.dot_dimension_numbers<[1], [0], [0], [1], [0, 0, 1, 1], [], []>} : vector<256x36xf32>, vector<36x4xf32>, vector<256x4xf32> -> vector<256x4xf32>
    %c0_96 = arith.constant 0 : index
    %c0_97 = arith.constant 0 : index
    %135 = vector.load %arg5[%c0_96, %c0_97] : memref<3x4xf32, #tpu.memory_space<vmem>>, vector<1x4xf32>
    %c1_98 = arith.constant 1 : index
    %c0_99 = arith.constant 0 : index
    %136 = vector.load %arg5[%c1_98, %c0_99] : memref<3x4xf32, #tpu.memory_space<vmem>>, vector<1x4xf32>
    %c2_100 = arith.constant 2 : index
    %c0_101 = arith.constant 0 : index
    %137 = vector.load %arg5[%c2_100, %c0_101] : memref<3x4xf32, #tpu.memory_space<vmem>>, vector<1x4xf32>
    %138 = vector.broadcast %135 : vector<1x4xf32> to vector<256x4xf32>
    %139 = arith.addf %134, %138 : vector<256x4xf32>
    %cst_102 = arith.constant dense<0.000000e+00> : vector<4xf32>
    %140 = vector.multi_reduction <add>, %139, %cst_102 [0] : vector<256x4xf32> to vector<4xf32>
    %141 = vector.shape_cast %140 : vector<4xf32> to vector<1x4xf32>
    %cst_103 = arith.constant 3.906250e-03 : f32
    %142 = vector.broadcast %cst_103 : f32 to vector<1x4xf32>
    %143 = arith.mulf %141, %142 : vector<1x4xf32>
    %144 = arith.mulf %139, %139 : vector<256x4xf32>
    %cst_104 = arith.constant dense<0.000000e+00> : vector<4xf32>
    %145 = vector.multi_reduction <add>, %144, %cst_104 [0] : vector<256x4xf32> to vector<4xf32>
    %146 = vector.shape_cast %145 : vector<4xf32> to vector<1x4xf32>
    %cst_105 = arith.constant 3.906250e-03 : f32
    %147 = vector.broadcast %cst_105 : f32 to vector<1x4xf32>
    %148 = arith.mulf %146, %147 : vector<1x4xf32>
    %149 = arith.mulf %143, %143 : vector<1x4xf32>
    %150 = arith.subf %148, %149 : vector<1x4xf32>
    %cst_106 = arith.constant 0.000000e+00 : f32
    %151 = vector.broadcast %cst_106 : f32 to vector<1x4xf32>
    %152 = arith.maximumf %150, %151 : vector<1x4xf32>
    %cst_107 = arith.constant 9.99999974E-6 : f32
    %153 = vector.broadcast %cst_107 : f32 to vector<1x4xf32>
    %154 = arith.addf %152, %153 : vector<1x4xf32>
    %155 = math.rsqrt %154 : vector<1x4xf32>
    %156 = arith.mulf %136, %155 : vector<1x4xf32>
    %157 = arith.mulf %143, %156 : vector<1x4xf32>
    %158 = arith.subf %137, %157 : vector<1x4xf32>
    %159 = vector.broadcast %156 : vector<1x4xf32> to vector<256x4xf32>
    %160 = arith.mulf %139, %159 : vector<256x4xf32>
    %161 = vector.broadcast %158 : vector<1x4xf32> to vector<256x4xf32>
    %162 = arith.addf %160, %161 : vector<256x4xf32>
    %163 = tpu.transpose %162, [1, 0] : vector<256x4xf32> -> vector<4x256xf32>
    %164 = arith.addf %1, %163 : vector<4x256xf32>
    %c0_108 = arith.constant 0 : index
    %c0_109 = arith.constant 0 : index
    %c0_110 = arith.constant 0 : index
    %165 = vector.load %arg6[%c0_108, %c0_109, %c0_110] : memref<1x4x256xf32, #tpu.memory_space<vmem>>, vector<1x4x256xf32>
    %166 = vector.shape_cast %165 : vector<1x4x256xf32> to vector<4x256xf32>
    %167 = vector.shape_cast %164 : vector<4x256xf32> to vector<1x4x256xf32>
    tpu.vector_store %arg6[%c0_108, %c0_109, %c0_110], %167 {strides = array<i32>} : memref<1x4x256xf32, #tpu.memory_space<vmem>>, vector<1x4x256xf32>,
    return
  }
  func.func @transform_0(%arg0: i32) -> (i32, i32, i32) {
    %c0_i32 = arith.constant 0 : i32
    %c0_i32_0 = arith.constant 0 : i32
    %c0_i32_1 = arith.constant 0 : i32
    return %arg0, %c0_i32, %c0_i32_0 : i32, i32, i32
  }
  func.func @transform_1(%arg0: i32) -> (i32, i32) {
    %c0_i32 = arith.constant 0 : i32
    %c0_i32_0 = arith.constant 0 : i32
    %c0_i32_1 = arith.constant 0 : i32
    return %c0_i32, %c0_i32_0 : i32, i32
  }
  func.func @transform_2(%arg0: i32) -> (i32, i32) {
    %c0_i32 = arith.constant 0 : i32
    %c0_i32_0 = arith.constant 0 : i32
    %c0_i32_1 = arith.constant 0 : i32
    return %c0_i32, %c0_i32_0 : i32, i32
  }
  func.func @transform_3(%arg0: i32) -> (i32, i32) {
    %c0_i32 = arith.constant 0 : i32
    %c0_i32_0 = arith.constant 0 : i32
    %c0_i32_1 = arith.constant 0 : i32
    return %c0_i32, %c0_i32_0 : i32, i32
  }
  func.func @transform_4(%arg0: i32) -> (i32, i32) {
    %c0_i32 = arith.constant 0 : i32
    %c0_i32_0 = arith.constant 0 : i32
    %c0_i32_1 = arith.constant 0 : i32
    return %c0_i32, %c0_i32_0 : i32, i32
  }
  func.func @transform_5(%arg0: i32) -> (i32, i32, i32) {
    %c0_i32 = arith.constant 0 : i32
    %c0_i32_0 = arith.constant 0 : i32
    %c0_i32_1 = arith.constant 0 : i32
    return %arg0, %c0_i32, %c0_i32_0 : i32, i32, i32
  }
}

</mosaic_0001>

<llo_original>
// kernel: resnet_block_pallas.1
$region0: #{resnet_block_pallas.1}
  #allocation0 [shape = 'u32[]', space=smem, size = 0x4, offset = 0x4, fixed_abs, tag = 'smem constant byte address 0x4 - core index']
  #allocation1 [shape = 'u32[144,128]{1,0:T(1,128)}', space=vmem, size = 0x12000, scoped, tag = 'internal scratch']
  #allocation2 [shape = 'f32[18,18,4]{2,1,0:T(8,128)}', space=vmem, size = 0x36000, scoped, tag = 'scratch operand']
  #allocation3 [shape = 'f32[36,256]{1,0:T(8,128)}', space=vmem, size = 0xa000, scoped, tag = 'scratch operand']
  %s0 = inlined_call_operand.vmem [shape: f32[2,4,256], index: 0, kind: input, shape index: {}]
  %s1 = inlined_call_operand.vmem [shape: f32[36,4], index: 1, kind: input, shape index: {}]
  %s2 = inlined_call_operand.vmem [shape: f32[3,4], index: 2, kind: input, shape index: {}]
  %s3 = inlined_call_operand.vmem [shape: f32[36,4], index: 3, kind: input, shape index: {}]
  %s4 = inlined_call_operand.vmem [shape: f32[3,4], index: 4, kind: input, shape index: {}]
  %s5 = inlined_call_operand.vmem [shape: f32[2,4,256], index: 5, kind: output, shape index: {}]
  %s6 = sld [smem:[#allocation0]]
  $region53: #{resnet_block_pallas.1} parent=0
    _
  %s8 = ssub.s32 1, %s6
  %s9 = scalar_select 0, %s8, %s6
  loop: start=0, step=1, limit=4
  $region2: #{resnet_block_pallas.1} parent=0 // loop_pre_header
    _
  $region3: #{resnet_block_pallas.1} parent=0 // loop_header
    %s11 = sphi 0, %s15
    %p12 = scmp.ge.s32.totalorder %s11, 4
    %s21 = sphi 0, %s23
    %s24 = sphi 0, %s21
    %s25 = sphi 0, %s24
    %s41 = sphi 0, %s25
    %s45 = sphi 0, %s45
    %s47 = sphi 0, %s45
    %s48 = sphi 0, %s47
    %s62 = sphi 0, %s48
    %s66 = sphi 0, %s66
    %s68 = sphi 0, %s66
    %s69 = sphi 0, %s68
    %s83 = sphi 0, %s69
    %s87 = sphi 0, %s87
    %s89 = sphi 0, %s87
    %s90 = sphi 0, %s89
    %s104 = sphi 0, %s90
    %s108 = sphi 0, %s108
    %s110 = sphi 0, %s108
    %s111 = sphi 0, %s110
    %s125 = sphi 0, %s111
    %s131 = sphi 0, %s133
    %s134 = sphi 0, %s131
    %s135 = sphi 0, %s134
    %s151 = sphi 0, %s135
  $region4: #{resnet_block_pallas.1} parent=0 // loop_header_branch
    %14 = sbr.rel (%p12) target = $region8
  $region5: #{resnet_block_pallas.1} parent=0 // loop_body
    %s16 = ssub.s32 %s11, 1
    %s17 = ssub.s32 %s11, 2
    %s18 = sadd.s32 %s11, 1
    %s19 = ssub.s32 %s11, %s18
    %p20 = scmp.eq.s32.totalorder %s19, 0
    %s22 = sadd.s32 %s21, 1
    %s23 = scalar_select %p20, %s21, %s22
    %p26 = pneg %p20
    %p27 = scmp.eq.s32.totalorder %s11, 1
    %p28 = por %p26, %p27
    %p29 = scmp.ne.s32.totalorder %s21, %s24
    %p30 = scmp.eq.s32.totalorder %s11, 0
    %p31 = por %p29, %p30
    %p32 = scmp.ne.s32.totalorder %s21, %s24
    %p33 = scmp.eq.s32.totalorder %s16, 1
    %p34 = por %p32, %p33
    %p35 = scmp.ne.s32.totalorder %s24, %s25
    %p36 = scmp.eq.s32.totalorder %s16, 0
    %p37 = por %p35, %p36
    %p38 = scmp.ne.s32.totalorder %s24, %s25
    %p39 = scmp.eq.s32.totalorder %s17, 1
    %p40 = por %p38, %p39
    %p42 = scmp.ne.s32.totalorder %s25, %s41
    %p43 = scmp.eq.s32.totalorder %s17, 0
    %p44 = por %p42, %p43
    %s46 = sadd.s32 %s45, 1
    %p49 = scmp.eq.s32.totalorder %s11, 1
    %p50 = scmp.ne.s32.totalorder %s45, %s47
    %p51 = scmp.eq.s32.totalorder %s11, 0
    %p52 = por %p50, %p51
    %p53 = scmp.ne.s32.totalorder %s45, %s47
    %p54 = scmp.eq.s32.totalorder %s16, 1
    %p55 = por %p53, %p54
    %p56 = scmp.ne.s32.totalorder %s47, %s48
    %p57 = scmp.eq.s32.totalorder %s16, 0
    %p58 = por %p56, %p57
    %p59 = scmp.ne.s32.totalorder %s47, %s48
    %p60 = scmp.eq.s32.totalorder %s17, 1
    %p61 = por %p59, %p60
    %p63 = scmp.ne.s32.totalorder %s48, %s62
    %p64 = scmp.eq.s32.totalorder %s17, 0
    %p65 = por %p63, %p64
    %s67 = sadd.s32 %s66, 1
    %p70 = scmp.eq.s32.totalorder %s11, 1
    %p71 = scmp.ne.s32.totalorder %s66, %s68
    %p72 = scmp.eq.s32.totalorder %s11, 0
    %p73 = por %p71, %p72
    %p74 = scmp.ne.s32.totalorder %s66, %s68
    %p75 = scmp.eq.s32.totalorder %s16, 1
    %p76 = por %p74, %p75
    %p77 = scmp.ne.s32.totalorder %s68, %s69
    %p78 = scmp.eq.s32.totalorder %s16, 0
    %p79 = por %p77, %p78
    %p80 = scmp.ne.s32.totalorder %s68, %s69
    %p81 = scmp.eq.s32.totalorder %s17, 1
    %p82 = por %p80, %p81
    %p84 = scmp.ne.s32.totalorder %s69, %s83
    %p85 = scmp.eq.s32.totalorder %s17, 0
    %p86 = por %p84, %p85
    %s88 = sadd.s32 %s87, 1
    %p91 = scmp.eq.s32.totalorder %s11, 1
    %p92 = scmp.ne.s32.totalorder %s87, %s89
    %p93 = scmp.eq.s32.totalorder %s11, 0
    %p94 = por %p92, %p93
    %p95 = scmp.ne.s32.totalorder %s87, %s89
    %p96 = scmp.eq.s32.totalorder %s16, 1
    %p97 = por %p95, %p96
    %p98 = scmp.ne.s32.totalorder %s89, %s90
    %p99 = scmp.eq.s32.totalorder %s16, 0
    %p100 = por %p98, %p99
    %p101 = scmp.ne.s32.totalorder %s89, %s90
    %p102 = scmp.eq.s32.totalorder %s17, 1
    %p103 = por %p101, %p102
    %p105 = scmp.ne.s32.totalorder %s90, %s104
    %p106 = scmp.eq.s32.totalorder %s17, 0
    %p107 = por %p105, %p106
    %s109 = sadd.s32 %s108, 1
    %p112 = scmp.eq.s32.totalorder %s11, 1
    %p113 = scmp.ne.s32.totalorder %s108, %s110
    %p114 = scmp.eq.s32.totalorder %s11, 0
    %p115 = por %p113, %p114
    %p116 = scmp.ne.s32.totalorder %s108, %s110
    %p117 = scmp.eq.s32.totalorder %s16, 1
    %p118 = por %p116, %p117
    %p119 = scmp.ne.s32.totalorder %s110, %s111
    %p120 = scmp.eq.s32.totalorder %s16, 0
    %p121 = por %p119, %p120
    %p122 = scmp.ne.s32.totalorder %s110, %s111
    %p123 = scmp.eq.s32.totalorder %s17, 1
    %p124 = por %p122, %p123
    %p126 = scmp.ne.s32.totalorder %s111, %s125
    %p127 = scmp.eq.s32.totalorder %s17, 0
    %p128 = por %p126, %p127
    %s129 = ssub.s32 %s11, %s18
    %p130 = scmp.eq.s32.totalorder %s129, 0
    %s132 = sadd.s32 %s131, 1
    %s133 = scalar_select %p130, %s131, %s132
    %p136 = pneg %p130
    %p137 = scmp.eq.s32.totalorder %s11, 1
    %p138 = por %p136, %p137
    %p139 = scmp.ne.s32.totalorder %s131, %s134
    %p140 = scmp.eq.s32.totalorder %s11, 0
    %p141 = por %p139, %p140
    %p142 = scmp.ne.s32.totalorder %s131, %s134
    %p143 = scmp.eq.s32.totalorder %s16, 1
    %p144 = por %p142, %p143
    %p145 = scmp.ne.s32.totalorder %s134, %s135
    %p146 = scmp.eq.s32.totalorder %s16, 0
    %p147 = por %p145, %p146
    %p148 = scmp.ne.s32.totalorder %s134, %s135
    %p149 = scmp.eq.s32.totalorder %s17, 1
    %p150 = por %p148, %p149
    %p152 = scmp.ne.s32.totalorder %s135, %s151
    %p153 = scmp.eq.s32.totalorder %s17, 0
    %p154 = por %p152, %p153
    %p155 = scmp.le.s32.totalorder 1, %s11
    %p156 = scmp.lt.s32.totalorder %s11, 3
    %p157 = pnand %p155, %p156
    %p158 = pneg %p157
    // Predicated region
    $region9: #{resnet_block_pallas.1} parent=5 // pred_check
      _
    $region10: #{resnet_block_pallas.1} parent=5 // pred_check_branch
      %160 = sbr.rel (%p157) target = $region12
    $region11: #{resnet_block_pallas.1} parent=5 // pred_region
      %s161 = ssub.s32 %s11, 1
      // Predicated region
      $region13: #{resnet_block_pallas.1} parent=11 // pred_check
        %p162 = pneg %p58
      $region14: #{resnet_block_pallas.1} parent=11 // pred_check_branch
        %164 = sbr.rel (%p162) target = $region16
      $region15: #{resnet_block_pallas.1} parent=11 // pred_region
        _
      $region16: #{resnet_block_pallas.1} parent=11 // pred_fallthru
        _
      // Predicated region
      $region17: #{resnet_block_pallas.1} parent=11 // pred_check
        %p165 = pneg %p79
      $region18: #{resnet_block_pallas.1} parent=11 // pred_check_branch
        %167 = sbr.rel (%p165) target = $region20
      $region19: #{resnet_block_pallas.1} parent=11 // pred_region
        _
      $region20: #{resnet_block_pallas.1} parent=11 // pred_fallthru
        _
      // Predicated region
      $region21: #{resnet_block_pallas.1} parent=11 // pred_check
        %p168 = pneg %p100
      $region22: #{resnet_block_pallas.1} parent=11 // pred_check_branch
        %170 = sbr.rel (%p168) target = $region24
      $region23: #{resnet_block_pallas.1} parent=11 // pred_region
        _
      $region24: #{resnet_block_pallas.1} parent=11 // pred_fallthru
        _
      // Predicated region
      $region25: #{resnet_block_pallas.1} parent=11 // pred_check
        %p171 = pneg %p121
      $region26: #{resnet_block_pallas.1} parent=11 // pred_check_branch
        %173 = sbr.rel (%p171) target = $region28
      $region27: #{resnet_block_pallas.1} parent=11 // pred_region
        _
      $region28: #{resnet_block_pallas.1} parent=11 // pred_fallthru
        _
    $region12: #{resnet_block_pallas.1} parent=5 // pred_fallthru
      _
    %p174 = scmp.lt.s32.totalorder %s11, 2
    // Predicated region
    $region29: #{resnet_block_pallas.1} parent=5 // pred_check
      %p175 = pneg %p174
    $region30: #{resnet_block_pallas.1} parent=5 // pred_check_branch
      %177 = sbr.rel (%p175) target = $region32
    $region31: #{resnet_block_pallas.1} parent=5 // pred_region
      // Predicated region
      $region33: #{resnet_block_pallas.1} parent=31 // pred_check
        %p178 = pneg %p31
      $region34: #{resnet_block_pallas.1} parent=31 // pred_check_branch
        %180 = sbr.rel (%p178) target = $region36
      $region35: #{resnet_block_pallas.1} parent=31 // pred_region
        %p181 = scmp.lt.s32.totalorder %s11, 1
        %s182 = scalar_select %p181, %s11, 1
        %s183 = smul.addr %s182, 2
        %s184 = smul.addr %s183, 4
        %s185 = scalar_lea.vmem %s0, %s184
      $region36: #{resnet_block_pallas.1} parent=31 // pred_fallthru
        _
    $region32: #{resnet_block_pallas.1} parent=5 // pred_fallthru
      _
    %p186 = scmp.le.s32.totalorder 1, %s11
    %p187 = scmp.lt.s32.totalorder %s11, 3
    %p188 = pnand %p186, %p187
    %p189 = pneg %p188
    // Predicated region
    $region37: #{resnet_block_pallas.1} parent=5 // pred_check
      _
    $region38: #{resnet_block_pallas.1} parent=5 // pred_check_branch
      %191 = sbr.rel (%p188) target = $region40
    $region39: #{resnet_block_pallas.1} parent=5 // pred_region
      %s192 = ssub.s32 %s11, 1
      %p193 = scmp.lt.s32.totalorder %s16, 1
      %s194 = scalar_select %p193, %s16, 1
      %s195 = smul.addr %s194, 2
      %s196 = smul.addr %s195, 4
      %s197 = scalar_lea.vmem %s0, %s196
      %p198 = pneg %p37
      %p199 = pneg %p34
      %p200 = pneg %p58
      %p201 = pneg %p55
      %p202 = pneg %p79
      %p203 = pneg %p76
      %p204 = pneg %p100
      %p205 = pneg %p97
      %p206 = pneg %p121
      %p207 = pneg %p118
      %p208 = pneg %p147
      %p209 = pneg %p144
      %p210 = scmp.lt.s32.totalorder %s16, 1
      %s211 = scalar_select %p210, %s16, 1
      %s212 = smul.addr %s211, 2
      %s213 = smul.addr %s212, 4
      %s214 = scalar_lea.vmem %s5, %s213
      %p215 = scmp.lt.s32.totalorder %s16, 1
      %s216 = scalar_select %p215, %s16, 1
      %s217 = smul.addr %s216, 2
      %s218 = smul.addr %s217, 4
      %s219 = scalar_lea.vmem %s0, %s218
      %p220 = scmp.lt.s32.totalorder %s16, 1
      %s221 = scalar_select %p220, %s16, 1
      %s222 = smul.addr %s221, 2
      %s223 = smul.addr %s222, 4
      %s224 = scalar_lea.vmem %s5, %s223
      %v225 = vld [vmem:[%s219] sm:$0xff]
      %v227 = vcombine.high %v225, %v225
      %229 = vxpose.xlu0.b32.start [1/16] %v225, 128
      %230 = vxpose.xlu0.b32.cont [2/16] 0.0, 128
      %231 = vxpose.xlu0.b32.cont [3/16] 0.0, 128
      %232 = vxpose.xlu0.b32.cont [4/16] 0.0, 128
      %233 = vxpose.xlu0.b32.cont [5/16] 0.0, 128
      %234 = vxpose.xlu0.b32.cont [6/16] 0.0, 128
      %235 = vxpose.xlu0.b32.cont [7/16] 0.0, 128
      %236 = vxpose.xlu0.b32.cont [8/16] 0.0, 128
      %237 = vxpose.xlu0.b32.cont [9/16] 0.0, 128
      %238 = vxpose.xlu0.b32.cont [10/16] 0.0, 128
      %239 = vxpose.xlu0.b32.cont [11/16] 0.0, 128
      %240 = vxpose.xlu0.b32.cont [12/16] 0.0, 128
      %241 = vxpose.xlu0.b32.cont [13/16] 0.0, 128
      %242 = vxpose.xlu0.b32.cont [14/16] 0.0, 128
      %243 = vxpose.xlu0.b32.cont [15/16] 0.0, 128
      %244 = vxpose.xlu0.b32.end [16/16] 0.0, 128
      %v245 = vpop.trf.xlu0
      %v246 = vpop.trf.xlu0
      %v247 = vpop.trf.xlu0
      %v248 = vpop.trf.xlu0
      %v249 = vpop.trf.xlu0
      %v250 = vpop.trf.xlu0
      %v251 = vpop.trf.xlu0
      %v252 = vpop.trf.xlu0
      %v253 = vpop.trf.xlu0
      %v254 = vpop.trf.xlu0
      %v255 = vpop.trf.xlu0
      %v256 = vpop.trf.xlu0
      %v257 = vpop.trf.xlu0
      %v258 = vpop.trf.xlu0
      %v259 = vpop.trf.xlu0
      %v260 = vpop.trf.xlu0
      %261 = vxpose.xlu0.b32.start [1/16] %v227, 128
      %262 = vxpose.xlu0.b32.cont [2/16] 0.0, 128
      %263 = vxpose.xlu0.b32.cont [3/16] 0.0, 128
      %264 = vxpose.xlu0.b32.cont [4/16] 0.0, 128
      %265 = vxpose.xlu0.b32.cont [5/16] 0.0, 128
      %266 = vxpose.xlu0.b32.cont [6/16] 0.0, 128
      %267 = vxpose.xlu0.b32.cont [7/16] 0.0, 128
      %268 = vxpose.xlu0.b32.cont [8/16] 0.0, 128
      %269 = vxpose.xlu0.b32.cont [9/16] 0.0, 128
      %270 = vxpose.xlu0.b32.cont [10/16] 0.0, 128
      %271 = vxpose.xlu0.b32.cont [11/16] 0.0, 128
      %272 = vxpose.xlu0.b32.cont [12/16] 0.0, 128
      %273 = vxpose.xlu0.b32.cont [13/16] 0.0, 128
      %274 = vxpose.xlu0.b32.cont [14/16] 0.0, 128
      %275 = vxpose.xlu0.b32.cont [15/16] 0.0, 128
      %276 = vxpose.xlu0.b32.end [16/16] 0.0, 128
      %v277 = vpop.trf.xlu0
      %v278 = vpop.trf.xlu0
      %v279 = vpop.trf.xlu0
      %v280 = vpop.trf.xlu0
      %v281 = vpop.trf.xlu0
      %v282 = vpop.trf.xlu0
      %v283 = vpop.trf.xlu0
      %v284 = vpop.trf.xlu0
      %v285 = vpop.trf.xlu0
      %v286 = vpop.trf.xlu0
      %v287 = vpop.trf.xlu0
      %v288 = vpop.trf.xlu0
      %v289 = vpop.trf.xlu0
      %v290 = vpop.trf.xlu0
      %v291 = vpop.trf.xlu0
      %v292 = vpop.trf.xlu0
      %s293 = scalar_lea.vmem [#allocation2], 24
      %vm294 = vcmask 31744
      %295 = vst.msk [vmem:[%s293 + $0x1] sm:$0xff] %vm294, %v245
      %296 = vst.msk [vmem:[%s293 + $0x9] sm:$0xff] %vm294, %v246
      %297 = vst.msk [vmem:[%s293 + $0x19] sm:$0xff] %vm294, %v247
      %298 = vst.msk [vmem:[%s293 + $0x21] sm:$0xff] %vm294, %v248
      %299 = vst.msk [vmem:[%s293 + $0x31] sm:$0xff] %vm294, %v249
      %300 = vst.msk [vmem:[%s293 + $0x39] sm:$0xff] %vm294, %v250
      %301 = vst.msk [vmem:[%s293 + $0x49] sm:$0xff] %vm294, %v251
      %302 = vst.msk [vmem:[%s293 + $0x51] sm:$0xff] %vm294, %v252
      %303 = vst.msk [vmem:[%s293 + $0x61] sm:$0xff] %vm294, %v253
      %304 = vst.msk [vmem:[%s293 + $0x69] sm:$0xff] %vm294, %v254
      %305 = vst.msk [vmem:[%s293 + $0x79] sm:$0xff] %vm294, %v255
      %306 = vst.msk [vmem:[%s293 + $0x81] sm:$0xff] %vm294, %v256
      %307 = vst.msk [vmem:[%s293 + $0x91] sm:$0xff] %vm294, %v257
      %308 = vst.msk [vmem:[%s293 + $0x99] sm:$0xff] %vm294, %v258
      %309 = vst.msk [vmem:[%s293 + $0xa9] sm:$0xff] %vm294, %v259
      %310 = vst.msk [vmem:[%s293 + $0xb1] sm:$0xff] %vm294, %v260
      %311 = vst.msk [vmem:[%s293 + $0xc1] sm:$0xff] %vm294, %v277
      %312 = vst.msk [vmem:[%s293 + $0xc9] sm:$0xff] %vm294, %v278
      %313 = vst.msk [vmem:[%s293 + $0xd9] sm:$0xff] %vm294, %v279
      %314 = vst.msk [vmem:[%s293 + $0xe1] sm:$0xff] %vm294, %v280
      %315 = vst.msk [vmem:[%s293 + $0xf1] sm:$0xff] %vm294, %v281
      %316 = vst.msk [vmem:[%s293 + $0xf9] sm:$0xff] %vm294, %v282
      %317 = vst.msk [vmem:[%s293 + $0x109] sm:$0xff] %vm294, %v283
      %318 = vst.msk [vmem:[%s293 + $0x111] sm:$0xff] %vm294, %v284
      %319 = vst.msk [vmem:[%s293 + $0x121] sm:$0xff] %vm294, %v285
      %320 = vst.msk [vmem:[%s293 + $0x129] sm:$0xff] %vm294, %v286
      %321 = vst.msk [vmem:[%s293 + $0x139] sm:$0xff] %vm294, %v287
      %322 = vst.msk [vmem:[%s293 + $0x141] sm:$0xff] %vm294, %v288
      %323 = vst.msk [vmem:[%s293 + $0x151] sm:$0xff] %vm294, %v289
      %324 = vst.msk [vmem:[%s293 + $0x159] sm:$0xff] %vm294, %v290
      %325 = vst.msk [vmem:[%s293 + $0x169] sm:$0xff] %vm294, %v291
      %326 = vst.msk [vmem:[%s293 + $0x171] sm:$0xff] %vm294, %v292
      %327 = vst.msk [vmem:[#allocation2 + $0x1] sm:$0xff] %vm294, %v247
      %328 = vst.msk [vmem:[#allocation2 + $0x9] sm:$0xff] %vm294, %v248
      %s329 = scalar_lea.vmem [#allocation2], 408
      %330 = vst.msk [vmem:[%s329 + $0x1] sm:$0xff] %vm294, %v289
      %331 = vst.msk [vmem:[%s329 + $0x9] sm:$0xff] %vm294, %v290
      %v332 = vld [vmem:[#allocation2 + $0x2] sm:$0x1]
      %v333 = vld [vmem:[#allocation2 + $0x1a] sm:$0x1]
      %v334 = vld [vmem:[#allocation2 + $0x32] sm:$0x1]
      %v335 = vld [vmem:[#allocation2 + $0x4a] sm:$0x1]
      %v336 = vld [vmem:[#allocation2 + $0x62] sm:$0x1]
      %v337 = vld [vmem:[#allocation2 + $0x7a] sm:$0x1]
      %v338 = vld [vmem:[#allocation2 + $0x92] sm:$0x1]
      %v339 = vld [vmem:[#allocation2 + $0xaa] sm:$0x1]
      %v340 = vld [vmem:[#allocation2 + $0xc2] sm:$0x1]
      %v341 = vld [vmem:[#allocation2 + $0xda] sm:$0x1]
      %v342 = vld [vmem:[#allocation2 + $0xf2] sm:$0x1]
      %v343 = vld [vmem:[#allocation2 + $0x10a] sm:$0x1]
      %v344 = vld [vmem:[#allocation2 + $0x122] sm:$0x1]
      %v345 = vld [vmem:[#allocation2 + $0x13a] sm:$0x1]
      %v346 = vld [vmem:[#allocation2 + $0x152] sm:$0x1]
      %v347 = vld [vmem:[#allocation2 + $0x16a] sm:$0x1]
      %v348 = vld [vmem:[#allocation2 + $0x182] sm:$0x1]
      %v349 = vld [vmem:[#allocation2 + $0x19a] sm:$0x1]
      %vm350 = vcmask 24576
      %351 = vst.msk [vmem:[#allocation2] sm:$0x1] %vm350, %v332
      %352 = vst.msk [vmem:[#allocation2 + $0x18] sm:$0x1] %vm350, %v333
      %353 = vst.msk [vmem:[#allocation2 + $0x30] sm:$0x1] %vm350, %v334
      %354 = vst.msk [vmem:[#allocation2 + $0x48] sm:$0x1] %vm350, %v335
      %355 = vst.msk [vmem:[#allocation2 + $0x60] sm:$0x1] %vm350, %v336
      %356 = vst.msk [vmem:[#allocation2 + $0x78] sm:$0x1] %vm350, %v337
      %357 = vst.msk [vmem:[#allocation2 + $0x90] sm:$0x1] %vm350, %v338
      %358 = vst.msk [vmem:[#allocation2 + $0xa8] sm:$0x1] %vm350, %v339
      %359 = vst.msk [vmem:[#allocation2 + $0xc0] sm:$0x1] %vm350, %v340
      %360 = vst.msk [vmem:[#allocation2 + $0xd8] sm:$0x1] %vm350, %v341
      %361 = vst.msk [vmem:[#allocation2 + $0xf0] sm:$0x1] %vm350, %v342
      %362 = vst.msk [vmem:[#allocation2 + $0x108] sm:$0x1] %vm350, %v343
      %363 = vst.msk [vmem:[#allocation2 + $0x120] sm:$0x1] %vm350, %v344
      %364 = vst.msk [vmem:[#allocation2 + $0x138] sm:$0x1] %vm350, %v345
      %365 = vst.msk [vmem:[#allocation2 + $0x150] sm:$0x1] %vm350, %v346
      %366 = vst.msk [vmem:[#allocation2 + $0x168] sm:$0x1] %vm350, %v347
      %367 = vst.msk [vmem:[#allocation2 + $0x180] sm:$0x1] %vm350, %v348
      %368 = vst.msk [vmem:[#allocation2 + $0x198] sm:$0x1] %vm350, %v349
      %v369 = vld [vmem:[#allocation2 + $0xf] sm:$0x1]
      %v370 = vld [vmem:[#allocation2 + $0x27] sm:$0x1]
      %v371 = vld [vmem:[#allocation2 + $0x3f] sm:$0x1]
      %v372 = vld [vmem:[#allocation2 + $0x57] sm:$0x1]
      %v373 = vld [vmem:[#allocation2 + $0x6f] sm:$0x1]
      %v374 = vld [vmem:[#allocation2 + $0x87] sm:$0x1]
      %v375 = vld [vmem:[#allocation2 + $0x9f] sm:$0x1]
      %v376 = vld [vmem:[#allocation2 + $0xb7] sm:$0x1]
      %v377 = vld [vmem:[#allocation2 + $0xcf] sm:$0x1]
      %v378 = vld [vmem:[#allocation2 + $0xe7] sm:$0x1]
      %v379 = vld [vmem:[#allocation2 + $0xff] sm:$0x1]
      %v380 = vld [vmem:[#allocation2 + $0x117] sm:$0x1]
      %v381 = vld [vmem:[#allocation2 + $0x12f] sm:$0x1]
      %v382 = vld [vmem:[#allocation2 + $0x147] sm:$0x1]
      %v383 = vld [vmem:[#allocation2 + $0x15f] sm:$0x1]
      %v384 = vld [vmem:[#allocation2 + $0x177] sm:$0x1]
      %v385 = vld [vmem:[#allocation2 + $0x18f] sm:$0x1]
      %v386 = vld [vmem:[#allocation2 + $0x1a7] sm:$0x1]
      %387 = vst.msk [vmem:[#allocation2 + $0x11] sm:$0x1] %vm350, %v369
      %388 = vst.msk [vmem:[#allocation2 + $0x29] sm:$0x1] %vm350, %v370
      %389 = vst.msk [vmem:[#allocation2 + $0x41] sm:$0x1] %vm350, %v371
      %390 = vst.msk [vmem:[#allocation2 + $0x59] sm:$0x1] %vm350, %v372
      %391 = vst.msk [vmem:[#allocation2 + $0x71] sm:$0x1] %vm350, %v373
      %392 = vst.msk [vmem:[#allocation2 + $0x89] sm:$0x1] %vm350, %v374
      %393 = vst.msk [vmem:[#allocation2 + $0xa1] sm:$0x1] %vm350, %v375
      %394 = vst.msk [vmem:[#allocation2 + $0xb9] sm:$0x1] %vm350, %v376
      %395 = vst.msk [vmem:[#allocation2 + $0xd1] sm:$0x1] %vm350, %v377
      %396 = vst.msk [vmem:[#allocation2 + $0xe9] sm:$0x1] %vm350, %v378
      %397 = vst.msk [vmem:[#allocation2 + $0x101] sm:$0x1] %vm350, %v379
      %398 = vst.msk [vmem:[#allocation2 + $0x119] sm:$0x1] %vm350, %v380
      %399 = vst.msk [vmem:[#allocation2 + $0x131] sm:$0x1] %vm350, %v381
      %400 = vst.msk [vmem:[#allocation2 + $0x149] sm:$0x1] %vm350, %v382
      %401 = vst.msk [vmem:[#allocation2 + $0x161] sm:$0x1] %vm350, %v383
      %402 = vst.msk [vmem:[#allocation2 + $0x179] sm:$0x1] %vm350, %v384
      %403 = vst.msk [vmem:[#allocation2 + $0x191] sm:$0x1] %vm350, %v385
      %404 = vst.msk [vmem:[#allocation2 + $0x1a9] sm:$0x1] %vm350, %v386
      %v405 = vld [vmem:[#allocation2] sm:$0xff]
      %v406 = vld [vmem:[#allocation2 + $0x8] sm:$0xff]
      %v407 = vld [vmem:[#allocation2 + $0x10] sm:$0x3]
      %v408 = vld [vmem:[#allocation2 + $0x18] sm:$0xff]
      %v409 = vld [vmem:[#allocation2 + $0x20] sm:$0xff]
      %v410 = vld [vmem:[#allocation2 + $0x28] sm:$0x3]
      %v411 = vld [vmem:[#allocation2 + $0x30] sm:$0xff]
      %v412 = vld [vmem:[#allocation2 + $0x38] sm:$0xff]
      %v413 = vld [vmem:[#allocation2 + $0x40] sm:$0x3]
      %v414 = vld [vmem:[#allocation2 + $0x48] sm:$0xff]
      %v415 = vld [vmem:[#allocation2 + $0x50] sm:$0xff]
      %v416 = vld [vmem:[#allocation2 + $0x58] sm:$0x3]
      %v417 = vld [vmem:[#allocation2 + $0x60] sm:$0xff]
      %v418 = vld [vmem:[#allocation2 + $0x68] sm:$0xff]
      %v419 = vld [vmem:[#allocation2 + $0x70] sm:$0x3]
      %v420 = vld [vmem:[#allocation2 + $0x78] sm:$0xff]
      %v421 = vld [vmem:[#allocation2 + $0x80] sm:$0xff]
      %v422 = vld [vmem:[#allocation2 + $0x88] sm:$0x3]
      %v423 = vld [vmem:[#allocation2 + $0x90] sm:$0xff]
      %v424 = vld [vmem:[#allocation2 + $0x98] sm:$0xff]
      %v425 = vld [vmem:[#allocation2 + $0xa0] sm:$0x3]
      %v426 = vld [vmem:[#allocation2 + $0xa8] sm:$0xff]
      %v427 = vld [vmem:[#allocation2 + $0xb0] sm:$0xff]
      %v428 = vld [vmem:[#allocation2 + $0xb8] sm:$0x3]
      %v429 = vld [vmem:[#allocation2 + $0xc0] sm:$0xff]
      %v430 = vld [vmem:[#allocation2 + $0xc8] sm:$0xff]
      %v431 = vld [vmem:[#allocation2 + $0xd0] sm:$0x3]
      %v432 = vld [vmem:[#allocation2 + $0xd8] sm:$0xff]
      %v433 = vld [vmem:[#allocation2 + $0xe0] sm:$0xff]
      %v434 = vld [vmem:[#allocation2 + $0xe8] sm:$0x3]
      %v435 = vld [vmem:[#allocation2 + $0xf0] sm:$0xff]
      %v436 = vld [vmem:[#allocation2 + $0xf8] sm:$0xff]
      %v437 = vld [vmem:[#allocation2 + $0x100] sm:$0x3]
      %v438 = vld [vmem:[#allocation2 + $0x108] sm:$0xff]
      %v439 = vld [vmem:[#allocation2 + $0x110] sm:$0xff]
      %v440 = vld [vmem:[#allocation2 + $0x118] sm:$0x3]
      %v441 = vld [vmem:[#allocation2 + $0x120] sm:$0xff]
      %v442 = vld [vmem:[#allocation2 + $0x128] sm:$0xff]
      %v443 = vld [vmem:[#allocation2 + $0x130] sm:$0x3]
      %v444 = vld [vmem:[#allocation2 + $0x138] sm:$0xff]
      %v445 = vld [vmem:[#allocation2 + $0x140] sm:$0xff]
      %v446 = vld [vmem:[#allocation2 + $0x148] sm:$0x3]
      %v447 = vld [vmem:[#allocation2 + $0x150] sm:$0xff]
      %v448 = vld [vmem:[#allocation2 + $0x158] sm:$0xff]
      %v449 = vld [vmem:[#allocation2 + $0x160] sm:$0x3]
      %v450 = vld [vmem:[#allocation2 + $0x168] sm:$0xff]
      %v451 = vld [vmem:[#allocation2 + $0x170] sm:$0xff]
      %v452 = vld [vmem:[#allocation2 + $0x178] sm:$0x3]
      %v453 = vld [vmem:[#allocation2 + $0x180] sm:$0xff]
      %v454 = vld [vmem:[#allocation2 + $0x188] sm:$0xff]
      %v455 = vld [vmem:[#allocation2 + $0x190] sm:$0x3]
      %v456 = vld [vmem:[#allocation2 + $0x198] sm:$0xff]
      %v457 = vld [vmem:[#allocation2 + $0x1a0] sm:$0xff]
      %v458 = vld [vmem:[#allocation2 + $0x1a8] sm:$0x3]
      %459 = vxpose.xlu0.b32.start [1/16] %v405, 128
      %460 = vxpose.xlu0.b32.cont [2/16] %v406, 128
      %461 = vxpose.xlu0.b32.cont [3/16] %v408, 128
      %462 = vxpose.xlu0.b32.cont [4/16] %v409, 128
      %463 = vxpose.xlu0.b32.cont [5/16] %v411, 128
      %464 = vxpose.xlu0.b32.cont [6/16] %v412, 128
      %465 = vxpose.xlu0.b32.cont [7/16] %v414, 128
      %466 = vxpose.xlu0.b32.cont [8/16] %v415, 128
      %467 = vxpose.xlu0.b32.cont [9/16] %v417, 128
      %468 = vxpose.xlu0.b32.cont [10/16] %v418, 128
      %469 = vxpose.xlu0.b32.cont [11/16] %v420, 128
      %470 = vxpose.xlu0.b32.cont [12/16] %v421, 128
      %471 = vxpose.xlu0.b32.cont [13/16] %v423, 128
      %472 = vxpose.xlu0.b32.cont [14/16] %v424, 128
      %473 = vxpose.xlu0.b32.cont [15/16] %v426, 128
      %474 = vxpose.xlu0.b32.end [16/16] %v427, 128
      %v475 = vpop.trf.xlu0
      %v476 = vpop.trf.xlu0
      %v477 = vpop.trf.xlu0
      %v478 = vpop.trf.xlu0
      %v479 = vpop.trf.xlu0
      %v480 = vpop.trf.xlu0
      %v481 = vpop.trf.xlu0
      %v482 = vpop.trf.xlu0
      %v483 = vpop.trf.xlu0
      %v484 = vpop.trf.xlu0
      %v485 = vpop.trf.xlu0
      %v486 = vpop.trf.xlu0
      %v487 = vpop.trf.xlu0
      %v488 = vpop.trf.xlu0
      %v489 = vpop.trf.xlu0
      %v490 = vpop.trf.xlu0
      %491 = vxpose.xlu0.b32.start [1/16] %v429, 128
      %492 = vxpose.xlu0.b32.cont [2/16] %v430, 128
      %493 = vxpose.xlu0.b32.cont [3/16] %v432, 128
      %494 = vxpose.xlu0.b32.cont [4/16] %v433, 128
      %495 = vxpose.xlu0.b32.cont [5/16] %v435, 128
      %496 = vxpose.xlu0.b32.cont [6/16] %v436, 128
      %497 = vxpose.xlu0.b32.cont [7/16] %v438, 128
      %498 = vxpose.xlu0.b32.cont [8/16] %v439, 128
      %499 = vxpose.xlu0.b32.cont [9/16] %v441, 128
      %500 = vxpose.xlu0.b32.cont [10/16] %v442, 128
      %501 = vxpose.xlu0.b32.cont [11/16] %v444, 128
      %502 = vxpose.xlu0.b32.cont [12/16] %v445, 128
      %503 = vxpose.xlu0.b32.cont [13/16] %v447, 128
      %504 = vxpose.xlu0.b32.cont [14/16] %v448, 128
      %505 = vxpose.xlu0.b32.cont [15/16] %v450, 128
      %506 = vxpose.xlu0.b32.end [16/16] %v451, 128
      %v507 = vpop.trf.xlu0
      %v508 = vpop.trf.xlu0
      %v509 = vpop.trf.xlu0
      %v510 = vpop.trf.xlu0
      %v511 = vpop.trf.xlu0
      %v512 = vpop.trf.xlu0
      %v513 = vpop.trf.xlu0
      %v514 = vpop.trf.xlu0
      %v515 = vpop.trf.xlu0
      %v516 = vpop.trf.xlu0
      %v517 = vpop.trf.xlu0
      %v518 = vpop.trf.xlu0
      %v519 = vpop.trf.xlu0
      %v520 = vpop.trf.xlu0
      %v521 = vpop.trf.xlu0
      %v522 = vpop.trf.xlu0
      %523 = vst [vmem:[#allocation3] sm:$0xf] %v475
      %524 = vst [vmem:[#allocation3 + $0x8] sm:$0xf] %v507
      %vm573 = vcmask 1046528
      %v574 = vrot.slane %v405, 1
      %v575 = vrot.slane %v406, 1
      %v576 = vsel %vm573, %v574, %v575
      %v577 = vrot.slane %v407, 1
      %v578 = vsel %vm573, %v575, %v577
      %v579 = vrot.slane %v408, 1
      %v580 = vrot.slane %v409, 1
      %v581 = vsel %vm573, %v579, %v580
      %v582 = vrot.slane %v410, 1
      %v583 = vsel %vm573, %v580, %v582
      %v584 = vrot.slane %v411, 1
      %v585 = vrot.slane %v412, 1
      %v586 = vsel %vm573, %v584, %v585
      %v587 = vrot.slane %v413, 1
      %v588 = vsel %vm573, %v585, %v587
      %v589 = vrot.slane %v414, 1
      %v590 = vrot.slane %v415, 1
      %v591 = vsel %vm573, %v589, %v590
      %v592 = vrot.slane %v416, 1
      %v593 = vsel %vm573, %v590, %v592
      %v594 = vrot.slane %v417, 1
      %v595 = vrot.slane %v418, 1
      %v596 = vsel %vm573, %v594, %v595
      %v597 = vrot.slane %v419, 1
      %v598 = vsel %vm573, %v595, %v597
      %v599 = vrot.slane %v420, 1
      %v600 = vrot.slane %v421, 1
      %v601 = vsel %vm573, %v599, %v600
      %v602 = vrot.slane %v422, 1
      %v603 = vsel %vm573, %v600, %v602
      %v604 = vrot.slane %v423, 1
      %v605 = vrot.slane %v424, 1
      %v606 = vsel %vm573, %v604, %v605
      %v607 = vrot.slane %v425, 1
      %v608 = vsel %vm573, %v605, %v607
      %v609 = vrot.slane %v426, 1
      %v610 = vrot.slane %v427, 1
      %v611 = vsel %vm573, %v609, %v610
      %v612 = vrot.slane %v428, 1
      %v613 = vsel %vm573, %v610, %v612
      %v614 = vrot.slane %v429, 1
      %v615 = vrot.slane %v430, 1
      %v616 = vsel %vm573, %v614, %v615
      %v617 = vrot.slane %v431, 1
      %v618 = vsel %vm573, %v615, %v617
      %v619 = vrot.slane %v432, 1
      %v620 = vrot.slane %v433, 1
      %v621 = vsel %vm573, %v619, %v620
      %v622 = vrot.slane %v434, 1
      %v623 = vsel %vm573, %v620, %v622
      %v624 = vrot.slane %v435, 1
      %v625 = vrot.slane %v436, 1
      %v626 = vsel %vm573, %v624, %v625
      %v627 = vrot.slane %v437, 1
      %v628 = vsel %vm573, %v625, %v627
      %v629 = vrot.slane %v438, 1
      %v630 = vrot.slane %v439, 1
      %v631 = vsel %vm573, %v629, %v630
      %v632 = vrot.slane %v440, 1
      %v633 = vsel %vm573, %v630, %v632
      %v634 = vrot.slane %v441, 1
      %v635 = vrot.slane %v442, 1
      %v636 = vsel %vm573, %v634, %v635
      %v637 = vrot.slane %v443, 1
      %v638 = vsel %vm573, %v635, %v637
      %v639 = vrot.slane %v444, 1
      %v640 = vrot.slane %v445, 1
      %v641 = vsel %vm573, %v639, %v640
      %v642 = vrot.slane %v446, 1
      %v643 = vsel %vm573, %v640, %v642
      %v644 = vrot.slane %v447, 1
      %v645 = vrot.slane %v448, 1
      %v646 = vsel %vm573, %v644, %v645
      %v647 = vrot.slane %v449, 1
      %v648 = vsel %vm573, %v645, %v647
      %v649 = vrot.slane %v450, 1
      %v650 = vrot.slane %v451, 1
      %v651 = vsel %vm573, %v649, %v650
      %v652 = vrot.slane %v452, 1
      %v653 = vsel %vm573, %v650, %v652
      %686 = vxpose.xlu0.b32.start [1/16] %v576, 128
      %687 = vxpose.xlu0.b32.cont [2/16] %v578, 128
      %688 = vxpose.xlu0.b32.cont [3/16] %v581, 128
      %689 = vxpose.xlu0.b32.cont [4/16] %v583, 128
      %690 = vxpose.xlu0.b32.cont [5/16] %v586, 128
      %691 = vxpose.xlu0.b32.cont [6/16] %v588, 128
      %692 = vxpose.xlu0.b32.cont [7/16] %v591, 128
      %693 = vxpose.xlu0.b32.cont [8/16] %v593, 128
      %694 = vxpose.xlu0.b32.cont [9/16] %v596, 128
      %695 = vxpose.xlu0.b32.cont [10/16] %v598, 128
      %696 = vxpose.xlu0.b32.cont [11/16] %v601, 128
      %697 = vxpose.xlu0.b32.cont [12/16] %v603, 128
      %698 = vxpose.xlu0.b32.cont [13/16] %v606, 128
      %699 = vxpose.xlu0.b32.cont [14/16] %v608, 128
      %700 = vxpose.xlu0.b32.cont [15/16] %v611, 128
      %701 = vxpose.xlu0.b32.end [16/16] %v613, 128
      %v702 = vpop.trf.xlu0
      %v703 = vpop.trf.xlu0
      %v704 = vpop.trf.xlu0
      %v705 = vpop.trf.xlu0
      %v706 = vpop.trf.xlu0
      %v707 = vpop.trf.xlu0
      %v708 = vpop.trf.xlu0
      %v709 = vpop.trf.xlu0
      %v710 = vpop.trf.xlu0
      %v711 = vpop.trf.xlu0
      %v712 = vpop.trf.xlu0
      %v713 = vpop.trf.xlu0
      %v714 = vpop.trf.xlu0
      %v715 = vpop.trf.xlu0
      %v716 = vpop.trf.xlu0
      %v717 = vpop.trf.xlu0
      %718 = vxpose.xlu0.b32.start [1/16] %v616, 128
      %719 = vxpose.xlu0.b32.cont [2/16] %v618, 128
      %720 = vxpose.xlu0.b32.cont [3/16] %v621, 128
      %721 = vxpose.xlu0.b32.cont [4/16] %v623, 128
      %722 = vxpose.xlu0.b32.cont [5/16] %v626, 128
      %723 = vxpose.xlu0.b32.cont [6/16] %v628, 128
      %724 = vxpose.xlu0.b32.cont [7/16] %v631, 128
      %725 = vxpose.xlu0.b32.cont [8/16] %v633, 128
      %726 = vxpose.xlu0.b32.cont [9/16] %v636, 128
      %727 = vxpose.xlu0.b32.cont [10/16] %v638, 128
      %728 = vxpose.xlu0.b32.cont [11/16] %v641, 128
      %729 = vxpose.xlu0.b32.cont [12/16] %v643, 128
      %730 = vxpose.xlu0.b32.cont [13/16] %v646, 128
      %731 = vxpose.xlu0.b32.cont [14/16] %v648, 128
      %732 = vxpose.xlu0.b32.cont [15/16] %v651, 128
      %733 = vxpose.xlu0.b32.end [16/16] %v653, 128
      %v734 = vpop.trf.xlu0
      %v735 = vpop.trf.xlu0
      %v736 = vpop.trf.xlu0
      %v737 = vpop.trf.xlu0
      %v738 = vpop.trf.xlu0
      %v739 = vpop.trf.xlu0
      %v740 = vpop.trf.xlu0
      %v741 = vpop.trf.xlu0
      %v742 = vpop.trf.xlu0
      %v743 = vpop.trf.xlu0
      %v744 = vpop.trf.xlu0
      %v745 = vpop.trf.xlu0
      %v746 = vpop.trf.xlu0
      %v747 = vpop.trf.xlu0
      %v748 = vpop.trf.xlu0
      %v749 = vpop.trf.xlu0
      %v752 = vrot.slane %v702, 4
      %v753 = vrot.slane %v734, 4
      %756 = vst [vmem:[#allocation3] sm:$0xf0] %v752
      %757 = vst [vmem:[#allocation3 + $0x8] sm:$0xf0] %v753
      %vm758 = vcmask 1045504
      %v759 = vrot.slane %v405, 2
      %v760 = vrot.slane %v406, 2
      %v761 = vsel %vm758, %v759, %v760
      %v762 = vrot.slane %v407, 2
      %v763 = vsel %vm758, %v760, %v762
      %v764 = vrot.slane %v408, 2
      %v765 = vrot.slane %v409, 2
      %v766 = vsel %vm758, %v764, %v765
      %v767 = vrot.slane %v410, 2
      %v768 = vsel %vm758, %v765, %v767
      %v769 = vrot.slane %v411, 2
      %v770 = vrot.slane %v412, 2
      %v771 = vsel %vm758, %v769, %v770
      %v772 = vrot.slane %v413, 2
      %v773 = vsel %vm758, %v770, %v772
      %v774 = vrot.slane %v414, 2
      %v775 = vrot.slane %v415, 2
      %v776 = vsel %vm758, %v774, %v775
      %v777 = vrot.slane %v416, 2
      %v778 = vsel %vm758, %v775, %v777
      %v779 = vrot.slane %v417, 2
      %v780 = vrot.slane %v418, 2
      %v781 = vsel %vm758, %v779, %v780
      %v782 = vrot.slane %v419, 2
      %v783 = vsel %vm758, %v780, %v782
      %v784 = vrot.slane %v420, 2
      %v785 = vrot.slane %v421, 2
      %v786 = vsel %vm758, %v784, %v785
      %v787 = vrot.slane %v422, 2
      %v788 = vsel %vm758, %v785, %v787
      %v789 = vrot.slane %v423, 2
      %v790 = vrot.slane %v424, 2
      %v791 = vsel %vm758, %v789, %v790
      %v792 = vrot.slane %v425, 2
      %v793 = vsel %vm758, %v790, %v792
      %v794 = vrot.slane %v426, 2
      %v795 = vrot.slane %v427, 2
      %v796 = vsel %vm758, %v794, %v795
      %v797 = vrot.slane %v428, 2
      %v798 = vsel %vm758, %v795, %v797
      %v799 = vrot.slane %v429, 2
      %v800 = vrot.slane %v430, 2
      %v801 = vsel %vm758, %v799, %v800
      %v802 = vrot.slane %v431, 2
      %v803 = vsel %vm758, %v800, %v802
      %v804 = vrot.slane %v432, 2
      %v805 = vrot.slane %v433, 2
      %v806 = vsel %vm758, %v804, %v805
      %v807 = vrot.slane %v434, 2
      %v808 = vsel %vm758, %v805, %v807
      %v809 = vrot.slane %v435, 2
      %v810 = vrot.slane %v436, 2
      %v811 = vsel %vm758, %v809, %v810
      %v812 = vrot.slane %v437, 2
      %v813 = vsel %vm758, %v810, %v812
      %v814 = vrot.slane %v438, 2
      %v815 = vrot.slane %v439, 2
      %v816 = vsel %vm758, %v814, %v815
      %v817 = vrot.slane %v440, 2
      %v818 = vsel %vm758, %v815, %v817
      %v819 = vrot.slane %v441, 2
      %v820 = vrot.slane %v442, 2
      %v821 = vsel %vm758, %v819, %v820
      %v822 = vrot.slane %v443, 2
      %v823 = vsel %vm758, %v820, %v822
      %v824 = vrot.slane %v444, 2
      %v825 = vrot.slane %v445, 2
      %v826 = vsel %vm758, %v824, %v825
      %v827 = vrot.slane %v446, 2
      %v828 = vsel %vm758, %v825, %v827
      %v829 = vrot.slane %v447, 2
      %v830 = vrot.slane %v448, 2
      %v831 = vsel %vm758, %v829, %v830
      %v832 = vrot.slane %v449, 2
      %v833 = vsel %vm758, %v830, %v832
      %v834 = vrot.slane %v450, 2
      %v835 = vrot.slane %v451, 2
      %v836 = vsel %vm758, %v834, %v835
      %v837 = vrot.slane %v452, 2
      %v838 = vsel %vm758, %v835, %v837
      %871 = vxpose.xlu0.b32.start [1/16] %v761, 128
      %872 = vxpose.xlu0.b32.cont [2/16] %v763, 128
      %873 = vxpose.xlu0.b32.cont [3/16] %v766, 128
      %874 = vxpose.xlu0.b32.cont [4/16] %v768, 128
      %875 = vxpose.xlu0.b32.cont [5/16] %v771, 128
      %876 = vxpose.xlu0.b32.cont [6/16] %v773, 128
      %877 = vxpose.xlu0.b32.cont [7/16] %v776, 128
      %878 = vxpose.xlu0.b32.cont [8/16] %v778, 128
      %879 = vxpose.xlu0.b32.cont [9/16] %v781, 128
      %880 = vxpose.xlu0.b32.cont [10/16] %v783, 128
      %881 = vxpose.xlu0.b32.cont [11/16] %v786, 128
      %882 = vxpose.xlu0.b32.cont [12/16] %v788, 128
      %883 = vxpose.xlu0.b32.cont [13/16] %v791, 128
      %884 = vxpose.xlu0.b32.cont [14/16] %v793, 128
      %885 = vxpose.xlu0.b32.cont [15/16] %v796, 128
      %886 = vxpose.xlu0.b32.end [16/16] %v798, 128
      %v887 = vpop.trf.xlu0
      %v888 = vpop.trf.xlu0
      %v889 = vpop.trf.xlu0
      %v890 = vpop.trf.xlu0
      %v891 = vpop.trf.xlu0
      %v892 = vpop.trf.xlu0
      %v893 = vpop.trf.xlu0
      %v894 = vpop.trf.xlu0
      %v895 = vpop.trf.xlu0
      %v896 = vpop.trf.xlu0
      %v897 = vpop.trf.xlu0
      %v898 = vpop.trf.xlu0
      %v899 = vpop.trf.xlu0
      %v900 = vpop.trf.xlu0
      %v901 = vpop.trf.xlu0
      %v902 = vpop.trf.xlu0
      %903 = vxpose.xlu0.b32.start [1/16] %v801, 128
      %904 = vxpose.xlu0.b32.cont [2/16] %v803, 128
      %905 = vxpose.xlu0.b32.cont [3/16] %v806, 128
      %906 = vxpose.xlu0.b32.cont [4/16] %v808, 128
      %907 = vxpose.xlu0.b32.cont [5/16] %v811, 128
      %908 = vxpose.xlu0.b32.cont [6/16] %v813, 128
      %909 = vxpose.xlu0.b32.cont [7/16] %v816, 128
      %910 = vxpose.xlu0.b32.cont [8/16] %v818, 128
      %911 = vxpose.xlu0.b32.cont [9/16] %v821, 128
      %912 = vxpose.xlu0.b32.cont [10/16] %v823, 128
      %913 = vxpose.xlu0.b32.cont [11/16] %v826, 128
      %914 = vxpose.xlu0.b32.cont [12/16] %v828, 128
      %915 = vxpose.xlu0.b32.cont [13/16] %v831, 128
      %916 = vxpose.xlu0.b32.cont [14/16] %v833, 128
      %917 = vxpose.xlu0.b32.cont [15/16] %v836, 128
      %918 = vxpose.xlu0.b32.end [16/16] %v838, 128
      %v919 = vpop.trf.xlu0
      %v920 = vpop.trf.xlu0
      %v921 = vpop.trf.xlu0
      %v922 = vpop.trf.xlu0
      %v923 = vpop.trf.xlu0
      %v924 = vpop.trf.xlu0
      %v925 = vpop.trf.xlu0
      %v926 = vpop.trf.xlu0
      %v927 = vpop.trf.xlu0
      %v928 = vpop.trf.xlu0
      %v929 = vpop.trf.xlu0
      %v930 = vpop.trf.xlu0
      %v931 = vpop.trf.xlu0
      %v932 = vpop.trf.xlu0
      %v933 = vpop.trf.xlu0
      %v934 = vpop.trf.xlu0
      %935 = vst [vmem:[#allocation3 + $0x10] sm:$0xf] %v887
      %936 = vst [vmem:[#allocation3 + $0x18] sm:$0xf] %v919
      %937 = vxpose.xlu0.b32.start [1/16] %v408, 128
      %938 = vxpose.xlu0.b32.cont [2/16] %v409, 128
      %939 = vxpose.xlu0.b32.cont [3/16] %v411, 128
      %940 = vxpose.xlu0.b32.cont [4/16] %v412, 128
      %941 = vxpose.xlu0.b32.cont [5/16] %v414, 128
      %942 = vxpose.xlu0.b32.cont [6/16] %v415, 128
      %943 = vxpose.xlu0.b32.cont [7/16] %v417, 128
      %944 = vxpose.xlu0.b32.cont [8/16] %v418, 128
      %945 = vxpose.xlu0.b32.cont [9/16] %v420, 128
      %946 = vxpose.xlu0.b32.cont [10/16] %v421, 128
      %947 = vxpose.xlu0.b32.cont [11/16] %v423, 128
      %948 = vxpose.xlu0.b32.cont [12/16] %v424, 128
      %949 = vxpose.xlu0.b32.cont [13/16] %v426, 128
      %950 = vxpose.xlu0.b32.cont [14/16] %v427, 128
      %951 = vxpose.xlu0.b32.cont [15/16] %v429, 128
      %952 = vxpose.xlu0.b32.end [16/16] %v430, 128
      %v953 = vpop.trf.xlu0
      %v954 = vpop.trf.xlu0
      %v955 = vpop.trf.xlu0
      %v956 = vpop.trf.xlu0
      %v957 = vpop.trf.xlu0
      %v958 = vpop.trf.xlu0
      %v959 = vpop.trf.xlu0
      %v960 = vpop.trf.xlu0
      %v961 = vpop.trf.xlu0
      %v962 = vpop.trf.xlu0
      %v963 = vpop.trf.xlu0
      %v964 = vpop.trf.xlu0
      %v965 = vpop.trf.xlu0
      %v966 = vpop.trf.xlu0
      %v967 = vpop.trf.xlu0
      %v968 = vpop.trf.xlu0
      %969 = vxpose.xlu0.b32.start [1/16] %v432, 128
      %970 = vxpose.xlu0.b32.cont [2/16] %v433, 128
      %971 = vxpose.xlu0.b32.cont [3/16] %v435, 128
      %972 = vxpose.xlu0.b32.cont [4/16] %v436, 128
      %973 = vxpose.xlu0.b32.cont [5/16] %v438, 128
      %974 = vxpose.xlu0.b32.cont [6/16] %v439, 128
      %975 = vxpose.xlu0.b32.cont [7/16] %v441, 128
      %976 = vxpose.xlu0.b32.cont [8/16] %v442, 128
      %977 = vxpose.xlu0.b32.cont [9/16] %v444, 128
      %978 = vxpose.xlu0.b32.cont [10/16] %v445, 128
      %979 = vxpose.xlu0.b32.cont [11/16] %v447, 128
      %980 = vxpose.xlu0.b32.cont [12/16] %v448, 128
      %981 = vxpose.xlu0.b32.cont [13/16] %v450, 128
      %982 = vxpose.xlu0.b32.cont [14/16] %v451, 128
      %983 = vxpose.xlu0.b32.cont [15/16] %v453, 128
      %984 = vxpose.xlu0.b32.end [16/16] %v454, 128
      %v985 = vpop.trf.xlu0
      %v986 = vpop.trf.xlu0
      %v987 = vpop.trf.xlu0
      %v988 = vpop.trf.xlu0
      %v989 = vpop.trf.xlu0
      %v990 = vpop.trf.xlu0
      %v991 = vpop.trf.xlu0
      %v992 = vpop.trf.xlu0
      %v993 = vpop.trf.xlu0
      %v994 = vpop.trf.xlu0
      %v995 = vpop.trf.xlu0
      %v996 = vpop.trf.xlu0
      %v997 = vpop.trf.xlu0
      %v998 = vpop.trf.xlu0
      %v999 = vpop.trf.xlu0
      %v1000 = vpop.trf.xlu0
      %v1003 = vrot.slane %v953, 4
      %v1004 = vrot.slane %v985, 4
      %1007 = vst [vmem:[#allocation3 + $0x10] sm:$0xf0] %v1003
      %1008 = vst [vmem:[#allocation3 + $0x18] sm:$0xf0] %v1004
      %v1012 = vrot.slane %v453, 1
      %v1013 = vrot.slane %v454, 1
      %v1014 = vsel %vm573, %v1012, %v1013
      %v1015 = vrot.slane %v455, 1
      %v1016 = vsel %vm573, %v1013, %v1015
      %1019 = vxpose.xlu0.b32.start [1/16] %v581, 128
      %1020 = vxpose.xlu0.b32.cont [2/16] %v583, 128
      %1021 = vxpose.xlu0.b32.cont [3/16] %v586, 128
      %1022 = vxpose.xlu0.b32.cont [4/16] %v588, 128
      %1023 = vxpose.xlu0.b32.cont [5/16] %v591, 128
      %1024 = vxpose.xlu0.b32.cont [6/16] %v593, 128
      %1025 = vxpose.xlu0.b32.cont [7/16] %v596, 128
      %1026 = vxpose.xlu0.b32.cont [8/16] %v598, 128
      %1027 = vxpose.xlu0.b32.cont [9/16] %v601, 128
      %1028 = vxpose.xlu0.b32.cont [10/16] %v603, 128
      %1029 = vxpose.xlu0.b32.cont [11/16] %v606, 128
      %1030 = vxpose.xlu0.b32.cont [12/16] %v608, 128
      %1031 = vxpose.xlu0.b32.cont [13/16] %v611, 128
      %1032 = vxpose.xlu0.b32.cont [14/16] %v613, 128
      %1033 = vxpose.xlu0.b32.cont [15/16] %v616, 128
      %1034 = vxpose.xlu0.b32.end [16/16] %v618, 128
      %v1035 = vpop.trf.xlu0
      %v1036 = vpop.trf.xlu0
      %v1037 = vpop.trf.xlu0
      %v1038 = vpop.trf.xlu0
      %v1039 = vpop.trf.xlu0
      %v1040 = vpop.trf.xlu0
      %v1041 = vpop.trf.xlu0
      %v1042 = vpop.trf.xlu0
      %v1043 = vpop.trf.xlu0
      %v1044 = vpop.trf.xlu0
      %v1045 = vpop.trf.xlu0
      %v1046 = vpop.trf.xlu0
      %v1047 = vpop.trf.xlu0
      %v1048 = vpop.trf.xlu0
      %v1049 = vpop.trf.xlu0
      %v1050 = vpop.trf.xlu0
      %1051 = vxpose.xlu0.b32.start [1/16] %v621, 128
      %1052 = vxpose.xlu0.b32.cont [2/16] %v623, 128
      %1053 = vxpose.xlu0.b32.cont [3/16] %v626, 128
      %1054 = vxpose.xlu0.b32.cont [4/16] %v628, 128
      %1055 = vxpose.xlu0.b32.cont [5/16] %v631, 128
      %1056 = vxpose.xlu0.b32.cont [6/16] %v633, 128
      %1057 = vxpose.xlu0.b32.cont [7/16] %v636, 128
      %1058 = vxpose.xlu0.b32.cont [8/16] %v638, 128
      %1059 = vxpose.xlu0.b32.cont [9/16] %v641, 128
      %1060 = vxpose.xlu0.b32.cont [10/16] %v643, 128
      %1061 = vxpose.xlu0.b32.cont [11/16] %v646, 128
      %1062 = vxpose.xlu0.b32.cont [12/16] %v648, 128
      %1063 = vxpose.xlu0.b32.cont [13/16] %v651, 128
      %1064 = vxpose.xlu0.b32.cont [14/16] %v653, 128
      %1065 = vxpose.xlu0.b32.cont [15/16] %v1014, 128
      %1066 = vxpose.xlu0.b32.end [16/16] %v1016, 128
      %v1067 = vpop.trf.xlu0
      %v1068 = vpop.trf.xlu0
      %v1069 = vpop.trf.xlu0
      %v1070 = vpop.trf.xlu0
      %v1071 = vpop.trf.xlu0
      %v1072 = vpop.trf.xlu0
      %v1073 = vpop.trf.xlu0
      %v1074 = vpop.trf.xlu0
      %v1075 = vpop.trf.xlu0
      %v1076 = vpop.trf.xlu0
      %v1077 = vpop.trf.xlu0
      %v1078 = vpop.trf.xlu0
      %v1079 = vpop.trf.xlu0
      %v1080 = vpop.trf.xlu0
      %v1081 = vpop.trf.xlu0
      %v1082 = vpop.trf.xlu0
      %1083 = vst [vmem:[#allocation3 + $0x20] sm:$0xf] %v1035
      %1084 = vst [vmem:[#allocation3 + $0x28] sm:$0xf] %v1067
      %v1085 = vrot.slane %v453, 2
      %v1086 = vrot.slane %v454, 2
      %v1087 = vsel %vm758, %v1085, %v1086
      %v1088 = vrot.slane %v455, 2
      %v1089 = vsel %vm758, %v1086, %v1088
      %1092 = vxpose.xlu0.b32.start [1/16] %v766, 128
      %1093 = vxpose.xlu0.b32.cont [2/16] %v768, 128
      %1094 = vxpose.xlu0.b32.cont [3/16] %v771, 128
      %1095 = vxpose.xlu0.b32.cont [4/16] %v773, 128
      %1096 = vxpose.xlu0.b32.cont [5/16] %v776, 128
      %1097 = vxpose.xlu0.b32.cont [6/16] %v778, 128
      %1098 = vxpose.xlu0.b32.cont [7/16] %v781, 128
      %1099 = vxpose.xlu0.b32.cont [8/16] %v783, 128
      %1100 = vxpose.xlu0.b32.cont [9/16] %v786, 128
      %1101 = vxpose.xlu0.b32.cont [10/16] %v788, 128
      %1102 = vxpose.xlu0.b32.cont [11/16] %v791, 128
      %1103 = vxpose.xlu0.b32.cont [12/16] %v793, 128
      %1104 = vxpose.xlu0.b32.cont [13/16] %v796, 128
      %1105 = vxpose.xlu0.b32.cont [14/16] %v798, 128
      %1106 = vxpose.xlu0.b32.cont [15/16] %v801, 128
      %1107 = vxpose.xlu0.b32.end [16/16] %v803, 128
      %v1108 = vpop.trf.xlu0
      %v1109 = vpop.trf.xlu0
      %v1110 = vpop.trf.xlu0
      %v1111 = vpop.trf.xlu0
      %v1112 = vpop.trf.xlu0
      %v1113 = vpop.trf.xlu0
      %v1114 = vpop.trf.xlu0
      %v1115 = vpop.trf.xlu0
      %v1116 = vpop.trf.xlu0
      %v1117 = vpop.trf.xlu0
      %v1118 = vpop.trf.xlu0
      %v1119 = vpop.trf.xlu0
      %v1120 = vpop.trf.xlu0
      %v1121 = vpop.trf.xlu0
      %v1122 = vpop.trf.xlu0
      %v1123 = vpop.trf.xlu0
      %1124 = vxpose.xlu0.b32.start [1/16] %v806, 128
      %1125 = vxpose.xlu0.b32.cont [2/16] %v808, 128
      %1126 = vxpose.xlu0.b32.cont [3/16] %v811, 128
      %1127 = vxpose.xlu0.b32.cont [4/16] %v813, 128
      %1128 = vxpose.xlu0.b32.cont [5/16] %v816, 128
      %1129 = vxpose.xlu0.b32.cont [6/16] %v818, 128
      %1130 = vxpose.xlu0.b32.cont [7/16] %v821, 128
      %1131 = vxpose.xlu0.b32.cont [8/16] %v823, 128
      %1132 = vxpose.xlu0.b32.cont [9/16] %v826, 128
      %1133 = vxpose.xlu0.b32.cont [10/16] %v828, 128
      %1134 = vxpose.xlu0.b32.cont [11/16] %v831, 128
      %1135 = vxpose.xlu0.b32.cont [12/16] %v833, 128
      %1136 = vxpose.xlu0.b32.cont [13/16] %v836, 128
      %1137 = vxpose.xlu0.b32.cont [14/16] %v838, 128
      %1138 = vxpose.xlu0.b32.cont [15/16] %v1087, 128
      %1139 = vxpose.xlu0.b32.end [16/16] %v1089, 128
      %v1140 = vpop.trf.xlu0
      %v1141 = vpop.trf.xlu0
      %v1142 = vpop.trf.xlu0
      %v1143 = vpop.trf.xlu0
      %v1144 = vpop.trf.xlu0
      %v1145 = vpop.trf.xlu0
      %v1146 = vpop.trf.xlu0
      %v1147 = vpop.trf.xlu0
      %v1148 = vpop.trf.xlu0
      %v1149 = vpop.trf.xlu0
      %v1150 = vpop.trf.xlu0
      %v1151 = vpop.trf.xlu0
      %v1152 = vpop.trf.xlu0
      %v1153 = vpop.trf.xlu0
      %v1154 = vpop.trf.xlu0
      %v1155 = vpop.trf.xlu0
      %v1158 = vrot.slane %v1108, 4
      %v1159 = vrot.slane %v1140, 4
      %1162 = vst [vmem:[#allocation3 + $0x20] sm:$0xf0] %v1158
      %1163 = vst [vmem:[#allocation3 + $0x28] sm:$0xf0] %v1159
      %1164 = vxpose.xlu0.b32.start [1/16] %v411, 128
      %1165 = vxpose.xlu0.b32.cont [2/16] %v412, 128
      %1166 = vxpose.xlu0.b32.cont [3/16] %v414, 128
      %1167 = vxpose.xlu0.b32.cont [4/16] %v415, 128
      %1168 = vxpose.xlu0.b32.cont [5/16] %v417, 128
      %1169 = vxpose.xlu0.b32.cont [6/16] %v418, 128
      %1170 = vxpose.xlu0.b32.cont [7/16] %v420, 128
      %1171 = vxpose.xlu0.b32.cont [8/16] %v421, 128
      %1172 = vxpose.xlu0.b32.cont [9/16] %v423, 128
      %1173 = vxpose.xlu0.b32.cont [10/16] %v424, 128
      %1174 = vxpose.xlu0.b32.cont [11/16] %v426, 128
      %1175 = vxpose.xlu0.b32.cont [12/16] %v427, 128
      %1176 = vxpose.xlu0.b32.cont [13/16] %v429, 128
      %1177 = vxpose.xlu0.b32.cont [14/16] %v430, 128
      %1178 = vxpose.xlu0.b32.cont [15/16] %v432, 128
      %1179 = vxpose.xlu0.b32.end [16/16] %v433, 128
      %v1180 = vpop.trf.xlu0
      %v1181 = vpop.trf.xlu0
      %v1182 = vpop.trf.xlu0
      %v1183 = vpop.trf.xlu0
      %v1184 = vpop.trf.xlu0
      %v1185 = vpop.trf.xlu0
      %v1186 = vpop.trf.xlu0
      %v1187 = vpop.trf.xlu0
      %v1188 = vpop.trf.xlu0
      %v1189 = vpop.trf.xlu0
      %v1190 = vpop.trf.xlu0
      %v1191 = vpop.trf.xlu0
      %v1192 = vpop.trf.xlu0
      %v1193 = vpop.trf.xlu0
      %v1194 = vpop.trf.xlu0
      %v1195 = vpop.trf.xlu0
      %1196 = vxpose.xlu0.b32.start [1/16] %v435, 128
      %1197 = vxpose.xlu0.b32.cont [2/16] %v436, 128
      %1198 = vxpose.xlu0.b32.cont [3/16] %v438, 128
      %1199 = vxpose.xlu0.b32.cont [4/16] %v439, 128
      %1200 = vxpose.xlu0.b32.cont [5/16] %v441, 128
      %1201 = vxpose.xlu0.b32.cont [6/16] %v442, 128
      %1202 = vxpose.xlu0.b32.cont [7/16] %v444, 128
      %1203 = vxpose.xlu0.b32.cont [8/16] %v445, 128
      %1204 = vxpose.xlu0.b32.cont [9/16] %v447, 128
      %1205 = vxpose.xlu0.b32.cont [10/16] %v448, 128
      %1206 = vxpose.xlu0.b32.cont [11/16] %v450, 128
      %1207 = vxpose.xlu0.b32.cont [12/16] %v451, 128
      %1208 = vxpose.xlu0.b32.cont [13/16] %v453, 128
      %1209 = vxpose.xlu0.b32.cont [14/16] %v454, 128
      %1210 = vxpose.xlu0.b32.cont [15/16] %v456, 128
      %1211 = vxpose.xlu0.b32.end [16/16] %v457, 128
      %v1212 = vpop.trf.xlu0
      %v1213 = vpop.trf.xlu0
      %v1214 = vpop.trf.xlu0
      %v1215 = vpop.trf.xlu0
      %v1216 = vpop.trf.xlu0
      %v1217 = vpop.trf.xlu0
      %v1218 = vpop.trf.xlu0
      %v1219 = vpop.trf.xlu0
      %v1220 = vpop.trf.xlu0
      %v1221 = vpop.trf.xlu0
      %v1222 = vpop.trf.xlu0
      %v1223 = vpop.trf.xlu0
      %v1224 = vpop.trf.xlu0
      %v1225 = vpop.trf.xlu0
      %v1226 = vpop.trf.xlu0
      %v1227 = vpop.trf.xlu0
      %1228 = vst [vmem:[#allocation3 + $0x30] sm:$0xf] %v1180
      %1229 = vst [vmem:[#allocation3 + $0x38] sm:$0xf] %v1212
      %v1233 = vrot.slane %v456, 1
      %v1234 = vrot.slane %v457, 1
      %v1235 = vsel %vm573, %v1233, %v1234
      %v1236 = vrot.slane %v458, 1
      %v1237 = vsel %vm573, %v1234, %v1236
      %1240 = vxpose.xlu0.b32.start [1/16] %v586, 128
      %1241 = vxpose.xlu0.b32.cont [2/16] %v588, 128
      %1242 = vxpose.xlu0.b32.cont [3/16] %v591, 128
      %1243 = vxpose.xlu0.b32.cont [4/16] %v593, 128
      %1244 = vxpose.xlu0.b32.cont [5/16] %v596, 128
      %1245 = vxpose.xlu0.b32.cont [6/16] %v598, 128
      %1246 = vxpose.xlu0.b32.cont [7/16] %v601, 128
      %1247 = vxpose.xlu0.b32.cont [8/16] %v603, 128
      %1248 = vxpose.xlu0.b32.cont [9/16] %v606, 128
      %1249 = vxpose.xlu0.b32.cont [10/16] %v608, 128
      %1250 = vxpose.xlu0.b32.cont [11/16] %v611, 128
      %1251 = vxpose.xlu0.b32.cont [12/16] %v613, 128
      %1252 = vxpose.xlu0.b32.cont [13/16] %v616, 128
      %1253 = vxpose.xlu0.b32.cont [14/16] %v618, 128
      %1254 = vxpose.xlu0.b32.cont [15/16] %v621, 128
      %1255 = vxpose.xlu0.b32.end [16/16] %v623, 128
      %v1256 = vpop.trf.xlu0
      %v1257 = vpop.trf.xlu0
      %v1258 = vpop.trf.xlu0
      %v1259 = vpop.trf.xlu0
      %v1260 = vpop.trf.xlu0
      %v1261 = vpop.trf.xlu0
      %v1262 = vpop.trf.xlu0
      %v1263 = vpop.trf.xlu0
      %v1264 = vpop.trf.xlu0
      %v1265 = vpop.trf.xlu0
      %v1266 = vpop.trf.xlu0
      %v1267 = vpop.trf.xlu0
      %v1268 = vpop.trf.xlu0
      %v1269 = vpop.trf.xlu0
      %v1270 = vpop.trf.xlu0
      %v1271 = vpop.trf.xlu0
      %1272 = vxpose.xlu0.b32.start [1/16] %v626, 128
      %1273 = vxpose.xlu0.b32.cont [2/16] %v628, 128
      %1274 = vxpose.xlu0.b32.cont [3/16] %v631, 128
      %1275 = vxpose.xlu0.b32.cont [4/16] %v633, 128
      %1276 = vxpose.xlu0.b32.cont [5/16] %v636, 128
      %1277 = vxpose.xlu0.b32.cont [6/16] %v638, 128
      %1278 = vxpose.xlu0.b32.cont [7/16] %v641, 128
      %1279 = vxpose.xlu0.b32.cont [8/16] %v643, 128
      %1280 = vxpose.xlu0.b32.cont [9/16] %v646, 128
      %1281 = vxpose.xlu0.b32.cont [10/16] %v648, 128
      %1282 = vxpose.xlu0.b32.cont [11/16] %v651, 128
      %1283 = vxpose.xlu0.b32.cont [12/16] %v653, 128
      %1284 = vxpose.xlu0.b32.cont [13/16] %v1014, 128
      %1285 = vxpose.xlu0.b32.cont [14/16] %v1016, 128
      %1286 = vxpose.xlu0.b32.cont [15/16] %v1235, 128
      %1287 = vxpose.xlu0.b32.end [16/16] %v1237, 128
      %v1288 = vpop.trf.xlu0
      %v1289 = vpop.trf.xlu0
      %v1290 = vpop.trf.xlu0
      %v1291 = vpop.trf.xlu0
      %v1292 = vpop.trf.xlu0
      %v1293 = vpop.trf.xlu0
      %v1294 = vpop.trf.xlu0
      %v1295 = vpop.trf.xlu0
      %v1296 = vpop.trf.xlu0
      %v1297 = vpop.trf.xlu0
      %v1298 = vpop.trf.xlu0
      %v1299 = vpop.trf.xlu0
      %v1300 = vpop.trf.xlu0
      %v1301 = vpop.trf.xlu0
      %v1302 = vpop.trf.xlu0
      %v1303 = vpop.trf.xlu0
      %v1306 = vrot.slane %v1256, 4
      %v1307 = vrot.slane %v1288, 4
      %1310 = vst [vmem:[#allocation3 + $0x30] sm:$0xf0] %v1306
      %1311 = vst [vmem:[#allocation3 + $0x38] sm:$0xf0] %v1307
      %v1312 = vrot.slane %v456, 2
      %v1313 = vrot.slane %v457, 2
      %v1314 = vsel %vm758, %v1312, %v1313
      %v1315 = vrot.slane %v458, 2
      %v1316 = vsel %vm758, %v1313, %v1315
      %1319 = vxpose.xlu0.b32.start [1/16] %v771, 128
      %1320 = vxpose.xlu0.b32.cont [2/16] %v773, 128
      %1321 = vxpose.xlu0.b32.cont [3/16] %v776, 128
      %1322 = vxpose.xlu0.b32.cont [4/16] %v778, 128
      %1323 = vxpose.xlu0.b32.cont [5/16] %v781, 128
      %1324 = vxpose.xlu0.b32.cont [6/16] %v783, 128
      %1325 = vxpose.xlu0.b32.cont [7/16] %v786, 128
      %1326 = vxpose.xlu0.b32.cont [8/16] %v788, 128
      %1327 = vxpose.xlu0.b32.cont [9/16] %v791, 128
      %1328 = vxpose.xlu0.b32.cont [10/16] %v793, 128
      %1329 = vxpose.xlu0.b32.cont [11/16] %v796, 128
      %1330 = vxpose.xlu0.b32.cont [12/16] %v798, 128
      %1331 = vxpose.xlu0.b32.cont [13/16] %v801, 128
      %1332 = vxpose.xlu0.b32.cont [14/16] %v803, 128
      %1333 = vxpose.xlu0.b32.cont [15/16] %v806, 128
      %1334 = vxpose.xlu0.b32.end [16/16] %v808, 128
      %v1335 = vpop.trf.xlu0
      %v1336 = vpop.trf.xlu0
      %v1337 = vpop.trf.xlu0
      %v1338 = vpop.trf.xlu0
      %v1339 = vpop.trf.xlu0
      %v1340 = vpop.trf.xlu0
      %v1341 = vpop.trf.xlu0
      %v1342 = vpop.trf.xlu0
      %v1343 = vpop.trf.xlu0
      %v1344 = vpop.trf.xlu0
      %v1345 = vpop.trf.xlu0
      %v1346 = vpop.trf.xlu0
      %v1347 = vpop.trf.xlu0
      %v1348 = vpop.trf.xlu0
      %v1349 = vpop.trf.xlu0
      %v1350 = vpop.trf.xlu0
      %1351 = vxpose.xlu0.b32.start [1/16] %v811, 128
      %1352 = vxpose.xlu0.b32.cont [2/16] %v813, 128
      %1353 = vxpose.xlu0.b32.cont [3/16] %v816, 128
      %1354 = vxpose.xlu0.b32.cont [4/16] %v818, 128
      %1355 = vxpose.xlu0.b32.cont [5/16] %v821, 128
      %1356 = vxpose.xlu0.b32.cont [6/16] %v823, 128
      %1357 = vxpose.xlu0.b32.cont [7/16] %v826, 128
      %1358 = vxpose.xlu0.b32.cont [8/16] %v828, 128
      %1359 = vxpose.xlu0.b32.cont [9/16] %v831, 128
      %1360 = vxpose.xlu0.b32.cont [10/16] %v833, 128
      %1361 = vxpose.xlu0.b32.cont [11/16] %v836, 128
      %1362 = vxpose.xlu0.b32.cont [12/16] %v838, 128
      %1363 = vxpose.xlu0.b32.cont [13/16] %v1087, 128
      %1364 = vxpose.xlu0.b32.cont [14/16] %v1089, 128
      %1365 = vxpose.xlu0.b32.cont [15/16] %v1314, 128
      %1366 = vxpose.xlu0.b32.end [16/16] %v1316, 128
      %v1367 = vpop.trf.xlu0
      %v1368 = vpop.trf.xlu0
      %v1369 = vpop.trf.xlu0
      %v1370 = vpop.trf.xlu0
      %v1371 = vpop.trf.xlu0
      %v1372 = vpop.trf.xlu0
      %v1373 = vpop.trf.xlu0
      %v1374 = vpop.trf.xlu0
      %v1375 = vpop.trf.xlu0
      %v1376 = vpop.trf.xlu0
      %v1377 = vpop.trf.xlu0
      %v1378 = vpop.trf.xlu0
      %v1379 = vpop.trf.xlu0
      %v1380 = vpop.trf.xlu0
      %v1381 = vpop.trf.xlu0
      %v1382 = vpop.trf.xlu0
      %1383 = vst [vmem:[#allocation3 + $0x40] sm:$0xf] %v1335
      %1384 = vst [vmem:[#allocation3 + $0x48] sm:$0xf] %v1367
      %v1385 = vld [vmem:[#allocation3] sm:$0xff]
      %v1386 = vld [vmem:[#allocation3 + $0x8] sm:$0xff]
      %v1387 = vld [vmem:[#allocation3 + $0x10] sm:$0xff]
      %v1388 = vld [vmem:[#allocation3 + $0x18] sm:$0xff]
      %v1389 = vld [vmem:[#allocation3 + $0x20] sm:$0xff]
      %v1390 = vld [vmem:[#allocation3 + $0x28] sm:$0xff]
      %v1391 = vld [vmem:[#allocation3 + $0x30] sm:$0xff]
      %v1392 = vld [vmem:[#allocation3 + $0x38] sm:$0xff]
      %v1393 = vld [vmem:[#allocation3 + $0x40] sm:$0xf]
      %v1394 = vld [vmem:[#allocation3 + $0x48] sm:$0xf]
      %1395 = vxpose.xlu0.b32.start [1/16] %v1385, 128
      %1396 = vxpose.xlu0.b32.cont [2/16] %v1387, 128
      %1397 = vxpose.xlu0.b32.cont [3/16] %v1389, 128
      %1398 = vxpose.xlu0.b32.cont [4/16] %v1391, 128
      %1399 = vxpose.xlu0.b32.cont [5/16] %v1393, 128
      %1400 = vxpose.xlu0.b32.cont [6/16] 0.0, 128
      %1401 = vxpose.xlu0.b32.cont [7/16] 0.0, 128
      %1402 = vxpose.xlu0.b32.cont [8/16] 0.0, 128
      %1403 = vxpose.xlu0.b32.cont [9/16] 0.0, 128
      %1404 = vxpose.xlu0.b32.cont [10/16] 0.0, 128
      %1405 = vxpose.xlu0.b32.cont [11/16] 0.0, 128
      %1406 = vxpose.xlu0.b32.cont [12/16] 0.0, 128
      %1407 = vxpose.xlu0.b32.cont [13/16] 0.0, 128
      %1408 = vxpose.xlu0.b32.cont [14/16] 0.0, 128
      %1409 = vxpose.xlu0.b32.cont [15/16] 0.0, 128
      %1410 = vxpose.xlu0.b32.end [16/16] 0.0, 128
      %v1411 = vpop.trf.xlu0
      %v1412 = vpop.trf.xlu0
      %v1413 = vpop.trf.xlu0
      %v1414 = vpop.trf.xlu0
      %v1415 = vpop.trf.xlu0
      %v1416 = vpop.trf.xlu0
      %v1417 = vpop.trf.xlu0
      %v1418 = vpop.trf.xlu0
      %v1419 = vpop.trf.xlu0
      %v1420 = vpop.trf.xlu0
      %v1421 = vpop.trf.xlu0
      %v1422 = vpop.trf.xlu0
      %v1423 = vpop.trf.xlu0
      %v1424 = vpop.trf.xlu0
      %v1425 = vpop.trf.xlu0
      %v1426 = vpop.trf.xlu0
      %1427 = vxpose.xlu0.b32.start [1/16] %v1386, 128
      %1428 = vxpose.xlu0.b32.cont [2/16] %v1388, 128
      %1429 = vxpose.xlu0.b32.cont [3/16] %v1390, 128
      %1430 = vxpose.xlu0.b32.cont [4/16] %v1392, 128
      %1431 = vxpose.xlu0.b32.cont [5/16] %v1394, 128
      %1432 = vxpose.xlu0.b32.cont [6/16] 0.0, 128
      %1433 = vxpose.xlu0.b32.cont [7/16] 0.0, 128
      %1434 = vxpose.xlu0.b32.cont [8/16] 0.0, 128
      %1435 = vxpose.xlu0.b32.cont [9/16] 0.0, 128
      %1436 = vxpose.xlu0.b32.cont [10/16] 0.0, 128
      %1437 = vxpose.xlu0.b32.cont [11/16] 0.0, 128
      %1438 = vxpose.xlu0.b32.cont [12/16] 0.0, 128
      %1439 = vxpose.xlu0.b32.cont [13/16] 0.0, 128
      %1440 = vxpose.xlu0.b32.cont [14/16] 0.0, 128
      %1441 = vxpose.xlu0.b32.cont [15/16] 0.0, 128
      %1442 = vxpose.xlu0.b32.end [16/16] 0.0, 128
      %v1443 = vpop.trf.xlu0
      %v1444 = vpop.trf.xlu0
      %v1445 = vpop.trf.xlu0
      %v1446 = vpop.trf.xlu0
      %v1447 = vpop.trf.xlu0
      %v1448 = vpop.trf.xlu0
      %v1449 = vpop.trf.xlu0
      %v1450 = vpop.trf.xlu0
      %v1451 = vpop.trf.xlu0
      %v1452 = vpop.trf.xlu0
      %v1453 = vpop.trf.xlu0
      %v1454 = vpop.trf.xlu0
      %v1455 = vpop.trf.xlu0
      %v1456 = vpop.trf.xlu0
      %v1457 = vpop.trf.xlu0
      %v1458 = vpop.trf.xlu0
      %v1459 = vld [vmem:[%s1] sm:$0xff]
      %v1460 = vld [vmem:[%s1 + $0x8] sm:$0xff]
      %v1461 = vld [vmem:[%s1 + $0x10] sm:$0xff]
      %v1462 = vld [vmem:[%s1 + $0x18] sm:$0xff]
      %v1463 = vld [vmem:[%s1 + $0x20] sm:$0xf]
      %v1464 = vld [vmem:[%s2] sm:$0x1]
      %v1465 = vld [vmem:[%s2 + $0x1] sm:$0x1]
      %v1466 = vld [vmem:[%s2 + $0x2] sm:$0x1]
      %v1467 = vlaneseq
      %v1468 = vshrl.u32 %v1467, 7
      %v1469 = vsub.s32 0, %v1468
      %v1470 = vrot.slane %v1464, %v1469
      %vm1471 = vcmask 293888
      %v1473 = vsel %vm1471, %v1411, 0
      %v1476 = vsel %vm1471, %v1412, 0
      %v1479 = vsel %vm1471, %v1413, 0
      %v1482 = vsel %vm1471, %v1414, 0
      %v1485 = vsel %vm1471, %v1415, 0
      %v1488 = vsel %vm1471, %v1416, 0
      %v1491 = vsel %vm1471, %v1417, 0
      %v1494 = vsel %vm1471, %v1418, 0
      %v1497 = vsel %vm1471, %v1419, 0
      %v1500 = vsel %vm1471, %v1420, 0
      %v1503 = vsel %vm1471, %v1421, 0
      %v1506 = vsel %vm1471, %v1422, 0
      %v1509 = vsel %vm1471, %v1423, 0
      %v1512 = vsel %vm1471, %v1424, 0
      %v1515 = vsel %vm1471, %v1425, 0
      %v1518 = vsel %vm1471, %v1426, 0
      %v1521 = vsel %vm1471, %v1443, 0
      %v1524 = vsel %vm1471, %v1444, 0
      %v1527 = vsel %vm1471, %v1445, 0
      %v1530 = vsel %vm1471, %v1446, 0
      %v1533 = vsel %vm1471, %v1447, 0
      %v1536 = vsel %vm1471, %v1448, 0
      %v1539 = vsel %vm1471, %v1449, 0
      %v1542 = vsel %vm1471, %v1450, 0
      %v1545 = vsel %vm1471, %v1451, 0
      %v1548 = vsel %vm1471, %v1452, 0
      %v1551 = vsel %vm1471, %v1453, 0
      %v1554 = vsel %vm1471, %v1454, 0
      %v1557 = vsel %vm1471, %v1455, 0
      %v1560 = vsel %vm1471, %v1456, 0
      %v1563 = vsel %vm1471, %v1457, 0
      %v1566 = vsel %vm1471, %v1458, 0
      %vm1568 = vcmask 1043456
      %v1570 = vsel %vm1568, %v1463, 0
      %1572 = vmatprep.subr.mxu0 0.0
      %1573 = vmatpush1.msra.mxu0 %v1459
      %1574 = vmatprep.subr.mxu0 0.0
      %1575 = vmatpush1.msra.mxu0 %v1460
      %1576 = vmatprep.subr.mxu0 0.0
      %1577 = vmatpush1.msra.mxu0 %v1461
      %1578 = vmatprep.subr.mxu0 0.0
      %1579 = vmatpush1.msra.mxu0 %v1462
      %1580 = vmatprep.subr.mxu0 0.0
      %1581 = vmatpush1.msra.mxu0 %v1570
      %1582 = vmatprep.subr.mxu0 0.0
      %1583 = vmatpush1.msra.mxu0 0.0
      %1584 = vmatprep.subr.mxu0 0.0
      %1585 = vmatpush1.msra.mxu0 0.0
      %1586 = vmatprep.subr.mxu0 0.0
      %1587 = vmatpush1.msra.mxu0 0.0
      %1588 = vmatprep.subr.mxu0 0.0
      %1589 = vmatpush1.msra.mxu0 0.0
      %1590 = vmatprep.subr.mxu0 0.0
      %1591 = vmatpush1.msra.mxu0 0.0
      %1592 = vmatprep.subr.mxu0 0.0
      %1593 = vmatpush1.msra.mxu0 0.0
      %1594 = vmatprep.subr.mxu0 0.0
      %1595 = vmatpush1.msra.mxu0 0.0
      %1596 = vmatprep.subr.mxu0 0.0
      %1597 = vmatpush1.msra.mxu0 0.0
      %1598 = vmatprep.subr.mxu0 0.0
      %1599 = vmatpush1.msra.mxu0 0.0
      %1600 = vmatprep.subr.mxu0 0.0
      %1601 = vmatpush1.msra.mxu0 0.0
      %1602 = vmatprep.subr.mxu0 0.0
      %1603 = vmatpush1.msra.mxu0 0.0
      %1604 = vmatprep.subr.mxu0 0.0
      %1605 = vmatpush1.msra.mxu0 0.0
      %1606 = vmatprep.subr.mxu0 0.0
      %1607 = vmatpush1.msra.mxu0 0.0
      %1608 = vmatprep.subr.mxu0 0.0
      %1609 = vmatpush1.msra.mxu0 0.0
      %1610 = vmatprep.subr.mxu0 0.0
      %1611 = vmatpush1.msra.mxu0 0.0
      %1612 = vmatprep.subr.mxu0 0.0
      %1613 = vmatpush1.msra.mxu0 0.0
      %1614 = vmatprep.subr.mxu0 0.0
      %1615 = vmatpush1.msra.mxu0 0.0
      %1616 = vmatprep.subr.mxu0 0.0
      %1617 = vmatpush1.msra.mxu0 0.0
      %1618 = vmatprep.subr.mxu0 0.0
      %1619 = vmatpush1.msra.mxu0 0.0
      %1620 = vmatprep.subr.mxu0 0.0
      %1621 = vmatpush1.msra.mxu0 0.0
      %1622 = vmatprep.subr.mxu0 0.0
      %1623 = vmatpush1.msra.mxu0 0.0
      %1624 = vmatprep.subr.mxu0 0.0
      %1625 = vmatpush1.msra.mxu0 0.0
      %1626 = vmatprep.subr.mxu0 0.0
      %1627 = vmatpush1.msra.mxu0 0.0
      %1628 = vmatprep.subr.mxu0 0.0
      %1629 = vmatpush1.msra.mxu0 0.0
      %1630 = vmatprep.subr.mxu0 0.0
      %1631 = vmatpush1.msra.mxu0 0.0
      %1632 = vmatprep.subr.mxu0 0.0
      %1633 = vmatpush1.msra.mxu0 0.0
      %1634 = vmatprep.subr.mxu0 0.0
      %1635 = vmatpush1.msra.mxu0 0.0
      %1636 = vmatprep.mubr.f32.mxu0 0.0
      %1637 = vmatmul.mubr.f32.gmra.mrb[0].mxu0 %v1473
      %v1638 = vpop.f32.mrb[0].mxu0
      %v1639 = vadd.f32 %v1470, %v1638
      %v1640 = vpop.f32.mrb[0].mxu0
      %1641 = vmatprep.mubr.f32.mxu0 0.0
      %1642 = vmatmul.mubr.f32.gmra.mrb[0].mxu0 %v1476
      %v1643 = vpop.f32.mrb[0].mxu0
      %v1644 = vadd.f32 %v1470, %v1643
      %v1645 = vpop.f32.mrb[0].mxu0
      %1646 = vmatprep.mubr.f32.mxu0 0.0
      %1647 = vmatmul.mubr.f32.gmra.mrb[0].mxu0 %v1479
      %v1648 = vpop.f32.mrb[0].mxu0
      %v1649 = vadd.f32 %v1470, %v1648
      %v1650 = vpop.f32.mrb[0].mxu0
      %1651 = vmatprep.mubr.f32.mxu0 0.0
      %1652 = vmatmul.mubr.f32.gmra.mrb[0].mxu0 %v1482
      %v1653 = vpop.f32.mrb[0].mxu0
      %v1654 = vadd.f32 %v1470, %v1653
      %v1655 = vpop.f32.mrb[0].mxu0
      %1656 = vmatprep.mubr.f32.mxu0 0.0
      %1657 = vmatmul.mubr.f32.gmra.mrb[0].mxu0 %v1485
      %v1658 = vpop.f32.mrb[0].mxu0
      %v1659 = vadd.f32 %v1470, %v1658
      %v1660 = vpop.f32.mrb[0].mxu0
      %1661 = vmatprep.mubr.f32.mxu0 0.0
      %1662 = vmatmul.mubr.f32.gmra.mrb[0].mxu0 %v1488
      %v1663 = vpop.f32.mrb[0].mxu0
      %v1664 = vadd.f32 %v1470, %v1663
      %v1665 = vpop.f32.mrb[0].mxu0
      %1666 = vmatprep.mubr.f32.mxu0 0.0
      %1667 = vmatmul.mubr.f32.gmra.mrb[0].mxu0 %v1491
      %v1668 = vpop.f32.mrb[0].mxu0
      %v1669 = vadd.f32 %v1470, %v1668
      %v1670 = vpop.f32.mrb[0].mxu0
      %1671 = vmatprep.mubr.f32.mxu0 0.0
      %1672 = vmatmul.mubr.f32.gmra.mrb[0].mxu0 %v1494
      %v1673 = vpop.f32.mrb[0].mxu0
      %v1674 = vadd.f32 %v1470, %v1673
      %v1675 = vpop.f32.mrb[0].mxu0
      %1676 = vmatprep.mubr.f32.mxu0 0.0
      %1677 = vmatmul.mubr.f32.gmra.mrb[0].mxu0 %v1497
      %v1678 = vpop.f32.mrb[0].mxu0
      %v1679 = vadd.f32 %v1470, %v1678
      %v1680 = vpop.f32.mrb[0].mxu0
      %1681 = vmatprep.mubr.f32.mxu0 0.0
      %1682 = vmatmul.mubr.f32.gmra.mrb[0].mxu0 %v1500
      %v1683 = vpop.f32.mrb[0].mxu0
      %v1684 = vadd.f32 %v1470, %v1683
      %v1685 = vpop.f32.mrb[0].mxu0
      %1686 = vmatprep.mubr.f32.mxu0 0.0
      %1687 = vmatmul.mubr.f32.gmra.mrb[0].mxu0 %v1503
      %v1688 = vpop.f32.mrb[0].mxu0
      %v1689 = vadd.f32 %v1470, %v1688
      %v1690 = vpop.f32.mrb[0].mxu0
      %1691 = vmatprep.mubr.f32.mxu0 0.0
      %1692 = vmatmul.mubr.f32.gmra.mrb[0].mxu0 %v1506
      %v1693 = vpop.f32.mrb[0].mxu0
      %v1694 = vadd.f32 %v1470, %v1693
      %v1695 = vpop.f32.mrb[0].mxu0
      %1696 = vmatprep.mubr.f32.mxu0 0.0
      %1697 = vmatmul.mubr.f32.gmra.mrb[0].mxu0 %v1509
      %v1698 = vpop.f32.mrb[0].mxu0
      %v1699 = vadd.f32 %v1470, %v1698
      %v1700 = vpop.f32.mrb[0].mxu0
      %1701 = vmatprep.mubr.f32.mxu0 0.0
      %1702 = vmatmul.mubr.f32.gmra.mrb[0].mxu0 %v1512
      %v1703 = vpop.f32.mrb[0].mxu0
      %v1704 = vadd.f32 %v1470, %v1703
      %v1705 = vpop.f32.mrb[0].mxu0
      %1706 = vmatprep.mubr.f32.mxu0 0.0
      %1707 = vmatmul.mubr.f32.gmra.mrb[0].mxu0 %v1515
      %v1708 = vpop.f32.mrb[0].mxu0
      %v1709 = vadd.f32 %v1470, %v1708
      %v1710 = vpop.f32.mrb[0].mxu0
      %1711 = vmatprep.mubr.f32.mxu0 0.0
      %1712 = vmatmul.mubr.f32.gmra.mrb[0].mxu0 %v1518
      %v1713 = vpop.f32.mrb[0].mxu0
      %v1714 = vadd.f32 %v1470, %v1713
      %v1715 = vpop.f32.mrb[0].mxu0
      %1716 = vmatprep.mubr.f32.mxu0 0.0
      %1717 = vmatmul.mubr.f32.gmra.mrb[0].mxu0 %v1521
      %v1718 = vpop.f32.mrb[0].mxu0
      %v1719 = vadd.f32 %v1470, %v1718
      %v1720 = vpop.f32.mrb[0].mxu0
      %1721 = vmatprep.mubr.f32.mxu0 0.0
      %1722 = vmatmul.mubr.f32.gmra.mrb[0].mxu0 %v1524
      %v1723 = vpop.f32.mrb[0].mxu0
      %v1724 = vadd.f32 %v1470, %v1723
      %v1725 = vpop.f32.mrb[0].mxu0
      %1726 = vmatprep.mubr.f32.mxu0 0.0
      %1727 = vmatmul.mubr.f32.gmra.mrb[0].mxu0 %v1527
      %v1728 = vpop.f32.mrb[0].mxu0
      %v1729 = vadd.f32 %v1470, %v1728
      %v1730 = vpop.f32.mrb[0].mxu0
      %1731 = vmatprep.mubr.f32.mxu0 0.0
      %1732 = vmatmul.mubr.f32.gmra.mrb[0].mxu0 %v1530
      %v1733 = vpop.f32.mrb[0].mxu0
      %v1734 = vadd.f32 %v1470, %v1733
      %v1735 = vpop.f32.mrb[0].mxu0
      %1736 = vmatprep.mubr.f32.mxu0 0.0
      %1737 = vmatmul.mubr.f32.gmra.mrb[0].mxu0 %v1533
      %v1738 = vpop.f32.mrb[0].mxu0
      %v1739 = vadd.f32 %v1470, %v1738
      %v1740 = vpop.f32.mrb[0].mxu0
      %1741 = vmatprep.mubr.f32.mxu0 0.0
      %1742 = vmatmul.mubr.f32.gmra.mrb[0].mxu0 %v1536
      %v1743 = vpop.f32.mrb[0].mxu0
      %v1744 = vadd.f32 %v1470, %v1743
      %v1745 = vpop.f32.mrb[0].mxu0
      %1746 = vmatprep.mubr.f32.mxu0 0.0
      %1747 = vmatmul.mubr.f32.gmra.mrb[0].mxu0 %v1539
      %v1748 = vpop.f32.mrb[0].mxu0
      %v1749 = vadd.f32 %v1470, %v1748
      %v1750 = vpop.f32.mrb[0].mxu0
      %1751 = vmatprep.mubr.f32.mxu0 0.0
      %1752 = vmatmul.mubr.f32.gmra.mrb[0].mxu0 %v1542
      %v1753 = vpop.f32.mrb[0].mxu0
      %v1754 = vadd.f32 %v1470, %v1753
      %v1755 = vpop.f32.mrb[0].mxu0
      %1756 = vmatprep.mubr.f32.mxu0 0.0
      %1757 = vmatmul.mubr.f32.gmra.mrb[0].mxu0 %v1545
      %v1758 = vpop.f32.mrb[0].mxu0
      %v1759 = vadd.f32 %v1470, %v1758
      %v1760 = vpop.f32.mrb[0].mxu0
      %1761 = vmatprep.mubr.f32.mxu0 0.0
      %1762 = vmatmul.mubr.f32.gmra.mrb[0].mxu0 %v1548
      %v1763 = vpop.f32.mrb[0].mxu0
      %v1764 = vadd.f32 %v1470, %v1763
      %v1765 = vpop.f32.mrb[0].mxu0
      %1766 = vmatprep.mubr.f32.mxu0 0.0
      %1767 = vmatmul.mubr.f32.gmra.mrb[0].mxu0 %v1551
      %v1768 = vpop.f32.mrb[0].mxu0
      %v1769 = vadd.f32 %v1470, %v1768
      %v1770 = vpop.f32.mrb[0].mxu0
      %1771 = vmatprep.mubr.f32.mxu0 0.0
      %1772 = vmatmul.mubr.f32.gmra.mrb[0].mxu0 %v1554
      %v1773 = vpop.f32.mrb[0].mxu0
      %v1774 = vadd.f32 %v1470, %v1773
      %v1775 = vpop.f32.mrb[0].mxu0
      %1776 = vmatprep.mubr.f32.mxu0 0.0
      %1777 = vmatmul.mubr.f32.gmra.mrb[0].mxu0 %v1557
      %v1778 = vpop.f32.mrb[0].mxu0
      %v1779 = vadd.f32 %v1470, %v1778
      %v1780 = vpop.f32.mrb[0].mxu0
      %1781 = vmatprep.mubr.f32.mxu0 0.0
      %1782 = vmatmul.mubr.f32.gmra.mrb[0].mxu0 %v1560
      %v1783 = vpop.f32.mrb[0].mxu0
      %v1784 = vadd.f32 %v1470, %v1783
      %v1785 = vpop.f32.mrb[0].mxu0
      %1786 = vmatprep.mubr.f32.mxu0 0.0
      %1787 = vmatmul.mubr.f32.gmra.mrb[0].mxu0 %v1563
      %v1788 = vpop.f32.mrb[0].mxu0
      %v1789 = vadd.f32 %v1470, %v1788
      %v1790 = vpop.f32.mrb[0].mxu0
      %1791 = vmatprep.mubr.f32.mxu0 0.0
      %1792 = vmatmul.mubr.f32.gmra.mrb[0].mxu0 %v1566
      %v1793 = vpop.f32.mrb[0].mxu0
      %v1794 = vadd.f32 %v1470, %v1793
      %v1795 = vpop.f32.mrb[0].mxu0
      %1796 = vdwg.mxu0
      %v1797 = vsel %vm294, %v1639, 0.0
      %v1798 = vsel %vm294, %v1644, 0.0
      %v1799 = vadd.f32 %v1797, %v1798
      %v1800 = vsel %vm294, %v1649, 0.0
      %v1801 = vadd.f32 %v1799, %v1800
      %v1802 = vsel %vm294, %v1654, 0.0
      %v1803 = vadd.f32 %v1801, %v1802
      %v1804 = vsel %vm294, %v1659, 0.0
      %v1805 = vadd.f32 %v1803, %v1804
      %v1806 = vsel %vm294, %v1664, 0.0
      %v1807 = vadd.f32 %v1805, %v1806
      %v1808 = vsel %vm294, %v1669, 0.0
      %v1809 = vadd.f32 %v1807, %v1808
      %v1810 = vsel %vm294, %v1674, 0.0
      %v1811 = vadd.f32 %v1809, %v1810
      %v1812 = vsel %vm294, %v1679, 0.0
      %v1813 = vadd.f32 %v1811, %v1812
      %v1814 = vsel %vm294, %v1684, 0.0
      %v1815 = vadd.f32 %v1813, %v1814
      %v1816 = vsel %vm294, %v1689, 0.0
      %v1817 = vadd.f32 %v1815, %v1816
      %v1818 = vsel %vm294, %v1694, 0.0
      %v1819 = vadd.f32 %v1817, %v1818
      %v1820 = vsel %vm294, %v1699, 0.0
      %v1821 = vadd.f32 %v1819, %v1820
      %v1822 = vsel %vm294, %v1704, 0.0
      %v1823 = vadd.f32 %v1821, %v1822
      %v1824 = vsel %vm294, %v1709, 0.0
      %v1825 = vadd.f32 %v1823, %v1824
      %v1826 = vsel %vm294, %v1714, 0.0
      %v1827 = vadd.f32 %v1825, %v1826
      %v1828 = vsel %vm294, %v1719, 0.0
      %v1829 = vadd.f32 %v1827, %v1828
      %v1830 = vsel %vm294, %v1724, 0.0
      %v1831 = vadd.f32 %v1829, %v1830
      %v1832 = vsel %vm294, %v1729, 0.0
      %v1833 = vadd.f32 %v1831, %v1832
      %v1834 = vsel %vm294, %v1734, 0.0
      %v1835 = vadd.f32 %v1833, %v1834
      %v1836 = vsel %vm294, %v1739, 0.0
      %v1837 = vadd.f32 %v1835, %v1836
      %v1838 = vsel %vm294, %v1744, 0.0
      %v1839 = vadd.f32 %v1837, %v1838
      %v1840 = vsel %vm294, %v1749, 0.0
      %v1841 = vadd.f32 %v1839, %v1840
      %v1842 = vsel %vm294, %v1754, 0.0
      %v1843 = vadd.f32 %v1841, %v1842
      %v1844 = vsel %vm294, %v1759, 0.0
      %v1845 = vadd.f32 %v1843, %v1844
      %v1846 = vsel %vm294, %v1764, 0.0
      %v1847 = vadd.f32 %v1845, %v1846
      %v1848 = vsel %vm294, %v1769, 0.0
      %v1849 = vadd.f32 %v1847, %v1848
      %v1850 = vsel %vm294, %v1774, 0.0
      %v1851 = vadd.f32 %v1849, %v1850
      %v1852 = vsel %vm294, %v1779, 0.0
      %v1853 = vadd.f32 %v1851, %v1852
      %v1854 = vsel %vm294, %v1784, 0.0
      %v1855 = vadd.f32 %v1853, %v1854
      %v1856 = vsel %vm294, %v1789, 0.0
      %v1857 = vadd.f32 %v1855, %v1856
      %v1858 = vsel %vm294, %v1794, 0.0
      %v1859 = vadd.f32 %v1857, %v1858
      %v1860 = vrot.slane %v1859, 4
      %v1861 = vadd.f32 %v1859, %v1860
      %v1862 = vrot.slane %v1861, 2
      %v1863 = vadd.f32 %v1861, %v1862
      %v1864 = vrot.slane %v1863, 1
      %v1865 = vadd.f32 %v1863, %v1864
      %v1866 = vmul.f32 %v1865, 0.00390625
      %v1867 = vmul.f32 %v1639, %v1639
      %v1868 = vmul.f32 %v1644, %v1644
      %v1869 = vmul.f32 %v1649, %v1649
      %v1870 = vmul.f32 %v1654, %v1654
      %v1871 = vmul.f32 %v1659, %v1659
      %v1872 = vmul.f32 %v1664, %v1664
      %v1873 = vmul.f32 %v1669, %v1669
      %v1874 = vmul.f32 %v1674, %v1674
      %v1875 = vmul.f32 %v1679, %v1679
      %v1876 = vmul.f32 %v1684, %v1684
      %v1877 = vmul.f32 %v1689, %v1689
      %v1878 = vmul.f32 %v1694, %v1694
      %v1879 = vmul.f32 %v1699, %v1699
      %v1880 = vmul.f32 %v1704, %v1704
      %v1881 = vmul.f32 %v1709, %v1709
      %v1882 = vmul.f32 %v1714, %v1714
      %v1883 = vmul.f32 %v1719, %v1719
      %v1884 = vmul.f32 %v1724, %v1724
      %v1885 = vmul.f32 %v1729, %v1729
      %v1886 = vmul.f32 %v1734, %v1734
      %v1887 = vmul.f32 %v1739, %v1739
      %v1888 = vmul.f32 %v1744, %v1744
      %v1889 = vmul.f32 %v1749, %v1749
      %v1890 = vmul.f32 %v1754, %v1754
      %v1891 = vmul.f32 %v1759, %v1759
      %v1892 = vmul.f32 %v1764, %v1764
      %v1893 = vmul.f32 %v1769, %v1769
      %v1894 = vmul.f32 %v1774, %v1774
      %v1895 = vmul.f32 %v1779, %v1779
      %v1896 = vmul.f32 %v1784, %v1784
      %v1897 = vmul.f32 %v1789, %v1789
      %v1898 = vmul.f32 %v1794, %v1794
      %v1899 = vsel %vm294, %v1867, 0.0
      %v1900 = vsel %vm294, %v1868, 0.0
      %v1901 = vadd.f32 %v1899, %v1900
      %v1902 = vsel %vm294, %v1869, 0.0
      %v1903 = vadd.f32 %v1901, %v1902
      %v1904 = vsel %vm294, %v1870, 0.0
      %v1905 = vadd.f32 %v1903, %v1904
      %v1906 = vsel %vm294, %v1871, 0.0
      %v1907 = vadd.f32 %v1905, %v1906
      %v1908 = vsel %vm294, %v1872, 0.0
      %v1909 = vadd.f32 %v1907, %v1908
      %v1910 = vsel %vm294, %v1873, 0.0
      %v1911 = vadd.f32 %v1909, %v1910
      %v1912 = vsel %vm294, %v1874, 0.0
      %v1913 = vadd.f32 %v1911, %v1912
      %v1914 = vsel %vm294, %v1875, 0.0
      %v1915 = vadd.f32 %v1913, %v1914
      %v1916 = vsel %vm294, %v1876, 0.0
      %v1917 = vadd.f32 %v1915, %v1916
      %v1918 = vsel %vm294, %v1877, 0.0
      %v1919 = vadd.f32 %v1917, %v1918
      %v1920 = vsel %vm294, %v1878, 0.0
      %v1921 = vadd.f32 %v1919, %v1920
      %v1922 = vsel %vm294, %v1879, 0.0
      %v1923 = vadd.f32 %v1921, %v1922
      %v1924 = vsel %vm294, %v1880, 0.0
      %v1925 = vadd.f32 %v1923, %v1924
      %v1926 = vsel %vm294, %v1881, 0.0
      %v1927 = vadd.f32 %v1925, %v1926
      %v1928 = vsel %vm294, %v1882, 0.0
      %v1929 = vadd.f32 %v1927, %v1928
      %v1930 = vsel %vm294, %v1883, 0.0
      %v1931 = vadd.f32 %v1929, %v1930
      %v1932 = vsel %vm294, %v1884, 0.0
      %v1933 = vadd.f32 %v1931, %v1932
      %v1934 = vsel %vm294, %v1885, 0.0
      %v1935 = vadd.f32 %v1933, %v1934
      %v1936 = vsel %vm294, %v1886, 0.0
      %v1937 = vadd.f32 %v1935, %v1936
      %v1938 = vsel %vm294, %v1887, 0.0
      %v1939 = vadd.f32 %v1937, %v1938
      %v1940 = vsel %vm294, %v1888, 0.0
      %v1941 = vadd.f32 %v1939, %v1940
      %v1942 = vsel %vm294, %v1889, 0.0
      %v1943 = vadd.f32 %v1941, %v1942
      %v1944 = vsel %vm294, %v1890, 0.0
      %v1945 = vadd.f32 %v1943, %v1944
      %v1946 = vsel %vm294, %v1891, 0.0
      %v1947 = vadd.f32 %v1945, %v1946
      %v1948 = vsel %vm294, %v1892, 0.0
      %v1949 = vadd.f32 %v1947, %v1948
      %v1950 = vsel %vm294, %v1893, 0.0
      %v1951 = vadd.f32 %v1949, %v1950
      %v1952 = vsel %vm294, %v1894, 0.0
      %v1953 = vadd.f32 %v1951, %v1952
      %v1954 = vsel %vm294, %v1895, 0.0
      %v1955 = vadd.f32 %v1953, %v1954
      %v1956 = vsel %vm294, %v1896, 0.0
      %v1957 = vadd.f32 %v1955, %v1956
      %v1958 = vsel %vm294, %v1897, 0.0
      %v1959 = vadd.f32 %v1957, %v1958
      %v1960 = vsel %vm294, %v1898, 0.0
      %v1961 = vadd.f32 %v1959, %v1960
      %v1962 = vrot.slane %v1961, 4
      %v1963 = vadd.f32 %v1961, %v1962
      %v1964 = vrot.slane %v1963, 2
      %v1965 = vadd.f32 %v1963, %v1964
      %v1966 = vrot.slane %v1965, 1
      %v1967 = vadd.f32 %v1965, %v1966
      %v1968 = vmul.f32 %v1967, 0.00390625
      %v1969 = vmul.f32 %v1866, %v1866
      %v1970 = vsub.f32 %v1968, %v1969
      %v1971 = vmax.f32 %v1970, 0.0
      %v1972 = vadd.f32 %v1971, 1e-05
      %v1973 = vrsqrt.pop %v1972
      %v1974 = vmul.f32 %v1465, %v1973
      %v1975 = vmul.f32 %v1866, %v1974
      %v1976 = vsub.f32 %v1466, %v1975
      %v1977 = vlaneseq
      %v1978 = vshrl.u32 %v1977, 7
      %v1979 = vsub.s32 0, %v1978
      %v1980 = vrot.slane %v1974, %v1979
      %v1981 = vmul.f32 %v1639, %v1980
      %v1982 = vmul.f32 %v1644, %v1980
      %v1983 = vmul.f32 %v1649, %v1980
      %v1984 = vmul.f32 %v1654, %v1980
      %v1985 = vmul.f32 %v1659, %v1980
      %v1986 = vmul.f32 %v1664, %v1980
      %v1987 = vmul.f32 %v1669, %v1980
      %v1988 = vmul.f32 %v1674, %v1980
      %v1989 = vmul.f32 %v1679, %v1980
      %v1990 = vmul.f32 %v1684, %v1980
      %v1991 = vmul.f32 %v1689, %v1980
      %v1992 = vmul.f32 %v1694, %v1980
      %v1993 = vmul.f32 %v1699, %v1980
      %v1994 = vmul.f32 %v1704, %v1980
      %v1995 = vmul.f32 %v1709, %v1980
      %v1996 = vmul.f32 %v1714, %v1980
      %v1997 = vmul.f32 %v1719, %v1980
      %v1998 = vmul.f32 %v1724, %v1980
      %v1999 = vmul.f32 %v1729, %v1980
      %v2000 = vmul.f32 %v1734, %v1980
      %v2001 = vmul.f32 %v1739, %v1980
      %v2002 = vmul.f32 %v1744, %v1980
      %v2003 = vmul.f32 %v1749, %v1980
      %v2004 = vmul.f32 %v1754, %v1980
      %v2005 = vmul.f32 %v1759, %v1980
      %v2006 = vmul.f32 %v1764, %v1980
      %v2007 = vmul.f32 %v1769, %v1980
      %v2008 = vmul.f32 %v1774, %v1980
      %v2009 = vmul.f32 %v1779, %v1980
      %v2010 = vmul.f32 %v1784, %v1980
      %v2011 = vmul.f32 %v1789, %v1980
      %v2012 = vmul.f32 %v1794, %v1980
      %v2013 = vlaneseq
      %v2014 = vshrl.u32 %v2013, 7
      %v2015 = vsub.s32 0, %v2014
      %v2016 = vrot.slane %v1976, %v2015
      %v2017 = vadd.f32 %v1981, %v2016
      %v2018 = vadd.f32 %v1982, %v2016
      %v2019 = vadd.f32 %v1983, %v2016
      %v2020 = vadd.f32 %v1984, %v2016
      %v2021 = vadd.f32 %v1985, %v2016
      %v2022 = vadd.f32 %v1986, %v2016
      %v2023 = vadd.f32 %v1987, %v2016
      %v2024 = vadd.f32 %v1988, %v2016
      %v2025 = vadd.f32 %v1989, %v2016
      %v2026 = vadd.f32 %v1990, %v2016
      %v2027 = vadd.f32 %v1991, %v2016
      %v2028 = vadd.f32 %v1992, %v2016
      %v2029 = vadd.f32 %v1993, %v2016
      %v2030 = vadd.f32 %v1994, %v2016
      %v2031 = vadd.f32 %v1995, %v2016
      %v2032 = vadd.f32 %v1996, %v2016
      %v2033 = vadd.f32 %v1997, %v2016
      %v2034 = vadd.f32 %v1998, %v2016
      %v2035 = vadd.f32 %v1999, %v2016
      %v2036 = vadd.f32 %v2000, %v2016
      %v2037 = vadd.f32 %v2001, %v2016
      %v2038 = vadd.f32 %v2002, %v2016
      %v2039 = vadd.f32 %v2003, %v2016
      %v2040 = vadd.f32 %v2004, %v2016
      %v2041 = vadd.f32 %v2005, %v2016
      %v2042 = vadd.f32 %v2006, %v2016
      %v2043 = vadd.f32 %v2007, %v2016
      %v2044 = vadd.f32 %v2008, %v2016
      %v2045 = vadd.f32 %v2009, %v2016
      %v2046 = vadd.f32 %v2010, %v2016
      %v2047 = vadd.f32 %v2011, %v2016
      %v2048 = vadd.f32 %v2012, %v2016
      %v2049 = vmax.f32 %v2017, 0.0
      %v2050 = vmax.f32 %v2018, 0.0
      %v2051 = vmax.f32 %v2019, 0.0
      %v2052 = vmax.f32 %v2020, 0.0
      %v2053 = vmax.f32 %v2021, 0.0
      %v2054 = vmax.f32 %v2022, 0.0
      %v2055 = vmax.f32 %v2023, 0.0
      %v2056 = vmax.f32 %v2024, 0.0
      %v2057 = vmax.f32 %v2025, 0.0
      %v2058 = vmax.f32 %v2026, 0.0
      %v2059 = vmax.f32 %v2027, 0.0
      %v2060 = vmax.f32 %v2028, 0.0
      %v2061 = vmax.f32 %v2029, 0.0
      %v2062 = vmax.f32 %v2030, 0.0
      %v2063 = vmax.f32 %v2031, 0.0
      %v2064 = vmax.f32 %v2032, 0.0
      %v2065 = vmax.f32 %v2033, 0.0
      %v2066 = vmax.f32 %v2034, 0.0
      %v2067 = vmax.f32 %v2035, 0.0
      %v2068 = vmax.f32 %v2036, 0.0
      %v2069 = vmax.f32 %v2037, 0.0
      %v2070 = vmax.f32 %v2038, 0.0
      %v2071 = vmax.f32 %v2039, 0.0
      %v2072 = vmax.f32 %v2040, 0.0
      %v2073 = vmax.f32 %v2041, 0.0
      %v2074 = vmax.f32 %v2042, 0.0
      %v2075 = vmax.f32 %v2043, 0.0
      %v2076 = vmax.f32 %v2044, 0.0
      %v2077 = vmax.f32 %v2045, 0.0
      %v2078 = vmax.f32 %v2046, 0.0
      %v2079 = vmax.f32 %v2047, 0.0
      %v2080 = vmax.f32 %v2048, 0.0
      %2081 = vst.msk [vmem:[%s293 + $0x1] sm:$0xff] %vm294, %v2049
      %2082 = vst.msk [vmem:[%s293 + $0x9] sm:$0xff] %vm294, %v2050
      %2083 = vst.msk [vmem:[%s293 + $0x19] sm:$0xff] %vm294, %v2051
      %2084 = vst.msk [vmem:[%s293 + $0x21] sm:$0xff] %vm294, %v2052
      %2085 = vst.msk [vmem:[%s293 + $0x31] sm:$0xff] %vm294, %v2053
      %2086 = vst.msk [vmem:[%s293 + $0x39] sm:$0xff] %vm294, %v2054
      %2087 = vst.msk [vmem:[%s293 + $0x49] sm:$0xff] %vm294, %v2055
      %2088 = vst.msk [vmem:[%s293 + $0x51] sm:$0xff] %vm294, %v2056
      %2089 = vst.msk [vmem:[%s293 + $0x61] sm:$0xff] %vm294, %v2057
      %2090 = vst.msk [vmem:[%s293 + $0x69] sm:$0xff] %vm294, %v2058
      %2091 = vst.msk [vmem:[%s293 + $0x79] sm:$0xff] %vm294, %v2059
      %2092 = vst.msk [vmem:[%s293 + $0x81] sm:$0xff] %vm294, %v2060
      %2093 = vst.msk [vmem:[%s293 + $0x91] sm:$0xff] %vm294, %v2061
      %2094 = vst.msk [vmem:[%s293 + $0x99] sm:$0xff] %vm294, %v2062
      %2095 = vst.msk [vmem:[%s293 + $0xa9] sm:$0xff] %vm294, %v2063
      %2096 = vst.msk [vmem:[%s293 + $0xb1] sm:$0xff] %vm294, %v2064
      %2097 = vst.msk [vmem:[%s293 + $0xc1] sm:$0xff] %vm294, %v2065
      %2098 = vst.msk [vmem:[%s293 + $0xc9] sm:$0xff] %vm294, %v2066
      %2099 = vst.msk [vmem:[%s293 + $0xd9] sm:$0xff] %vm294, %v2067
      %2100 = vst.msk [vmem:[%s293 + $0xe1] sm:$0xff] %vm294, %v2068
      %2101 = vst.msk [vmem:[%s293 + $0xf1] sm:$0xff] %vm294, %v2069
      %2102 = vst.msk [vmem:[%s293 + $0xf9] sm:$0xff] %vm294, %v2070
      %2103 = vst.msk [vmem:[%s293 + $0x109] sm:$0xff] %vm294, %v2071
      %2104 = vst.msk [vmem:[%s293 + $0x111] sm:$0xff] %vm294, %v2072
      %2105 = vst.msk [vmem:[%s293 + $0x121] sm:$0xff] %vm294, %v2073
      %2106 = vst.msk [vmem:[%s293 + $0x129] sm:$0xff] %vm294, %v2074
      %2107 = vst.msk [vmem:[%s293 + $0x139] sm:$0xff] %vm294, %v2075
      %2108 = vst.msk [vmem:[%s293 + $0x141] sm:$0xff] %vm294, %v2076
      %2109 = vst.msk [vmem:[%s293 + $0x151] sm:$0xff] %vm294, %v2077
      %2110 = vst.msk [vmem:[%s293 + $0x159] sm:$0xff] %vm294, %v2078
      %2111 = vst.msk [vmem:[%s293 + $0x169] sm:$0xff] %vm294, %v2079
      %2112 = vst.msk [vmem:[%s293 + $0x171] sm:$0xff] %vm294, %v2080
      %2113 = vst.msk [vmem:[#allocation2 + $0x1] sm:$0xff] %vm294, %v2051
      %2114 = vst.msk [vmem:[#allocation2 + $0x9] sm:$0xff] %vm294, %v2052
      %2115 = vst.msk [vmem:[%s329 + $0x1] sm:$0xff] %vm294, %v2077
      %2116 = vst.msk [vmem:[%s329 + $0x9] sm:$0xff] %vm294, %v2078
      %v2117 = vld [vmem:[#allocation2 + $0x2] sm:$0x1]
      %v2118 = vld [vmem:[#allocation2 + $0x1a] sm:$0x1]
      %v2119 = vld [vmem:[#allocation2 + $0x32] sm:$0x1]
      %v2120 = vld [vmem:[#allocation2 + $0x4a] sm:$0x1]
      %v2121 = vld [vmem:[#allocation2 + $0x62] sm:$0x1]
      %v2122 = vld [vmem:[#allocation2 + $0x7a] sm:$0x1]
      %v2123 = vld [vmem:[#allocation2 + $0x92] sm:$0x1]
      %v2124 = vld [vmem:[#allocation2 + $0xaa] sm:$0x1]
      %v2125 = vld [vmem:[#allocation2 + $0xc2] sm:$0x1]
      %v2126 = vld [vmem:[#allocation2 + $0xda] sm:$0x1]
      %v2127 = vld [vmem:[#allocation2 + $0xf2] sm:$0x1]
      %v2128 = vld [vmem:[#allocation2 + $0x10a] sm:$0x1]
      %v2129 = vld [vmem:[#allocation2 + $0x122] sm:$0x1]
      %v2130 = vld [vmem:[#allocation2 + $0x13a] sm:$0x1]
      %v2131 = vld [vmem:[#allocation2 + $0x152] sm:$0x1]
      %v2132 = vld [vmem:[#allocation2 + $0x16a] sm:$0x1]
      %v2133 = vld [vmem:[#allocation2 + $0x182] sm:$0x1]
      %v2134 = vld [vmem:[#allocation2 + $0x19a] sm:$0x1]
      %2135 = vst.msk [vmem:[#allocation2] sm:$0x1] %vm350, %v2117
      %2136 = vst.msk [vmem:[#allocation2 + $0x18] sm:$0x1] %vm350, %v2118
      %2137 = vst.msk [vmem:[#allocation2 + $0x30] sm:$0x1] %vm350, %v2119
      %2138 = vst.msk [vmem:[#allocation2 + $0x48] sm:$0x1] %vm350, %v2120
      %2139 = vst.msk [vmem:[#allocation2 + $0x60] sm:$0x1] %vm350, %v2121
      %2140 = vst.msk [vmem:[#allocation2 + $0x78] sm:$0x1] %vm350, %v2122
      %2141 = vst.msk [vmem:[#allocation2 + $0x90] sm:$0x1] %vm350, %v2123
      %2142 = vst.msk [vmem:[#allocation2 + $0xa8] sm:$0x1] %vm350, %v2124
      %2143 = vst.msk [vmem:[#allocation2 + $0xc0] sm:$0x1] %vm350, %v2125
      %2144 = vst.msk [vmem:[#allocation2 + $0xd8] sm:$0x1] %vm350, %v2126
      %2145 = vst.msk [vmem:[#allocation2 + $0xf0] sm:$0x1] %vm350, %v2127
      %2146 = vst.msk [vmem:[#allocation2 + $0x108] sm:$0x1] %vm350, %v2128
      %2147 = vst.msk [vmem:[#allocation2 + $0x120] sm:$0x1] %vm350, %v2129
      %2148 = vst.msk [vmem:[#allocation2 + $0x138] sm:$0x1] %vm350, %v2130
      %2149 = vst.msk [vmem:[#allocation2 + $0x150] sm:$0x1] %vm350, %v2131
      %2150 = vst.msk [vmem:[#allocation2 + $0x168] sm:$0x1] %vm350, %v2132
      %2151 = vst.msk [vmem:[#allocation2 + $0x180] sm:$0x1] %vm350, %v2133
      %2152 = vst.msk [vmem:[#allocation2 + $0x198] sm:$0x1] %vm350, %v2134
      %v2153 = vld [vmem:[#allocation2 + $0xf] sm:$0x1]
      %v2154 = vld [vmem:[#allocation2 + $0x27] sm:$0x1]
      %v2155 = vld [vmem:[#allocation2 + $0x3f] sm:$0x1]
      %v2156 = vld [vmem:[#allocation2 + $0x57] sm:$0x1]
      %v2157 = vld [vmem:[#allocation2 + $0x6f] sm:$0x1]
      %v2158 = vld [vmem:[#allocation2 + $0x87] sm:$0x1]
      %v2159 = vld [vmem:[#allocation2 + $0x9f] sm:$0x1]
      %v2160 = vld [vmem:[#allocation2 + $0xb7] sm:$0x1]
      %v2161 = vld [vmem:[#allocation2 + $0xcf] sm:$0x1]
      %v2162 = vld [vmem:[#allocation2 + $0xe7] sm:$0x1]
      %v2163 = vld [vmem:[#allocation2 + $0xff] sm:$0x1]
      %v2164 = vld [vmem:[#allocation2 + $0x117] sm:$0x1]
      %v2165 = vld [vmem:[#allocation2 + $0x12f] sm:$0x1]
      %v2166 = vld [vmem:[#allocation2 + $0x147] sm:$0x1]
      %v2167 = vld [vmem:[#allocation2 + $0x15f] sm:$0x1]
      %v2168 = vld [vmem:[#allocation2 + $0x177] sm:$0x1]
      %v2169 = vld [vmem:[#allocation2 + $0x18f] sm:$0x1]
      %v2170 = vld [vmem:[#allocation2 + $0x1a7] sm:$0x1]
      %2171 = vst.msk [vmem:[#allocation2 + $0x11] sm:$0x1] %vm350, %v2153
      %2172 = vst.msk [vmem:[#allocation2 + $0x29] sm:$0x1] %vm350, %v2154
      %2173 = vst.msk [vmem:[#allocation2 + $0x41] sm:$0x1] %vm350, %v2155
      %2174 = vst.msk [vmem:[#allocation2 + $0x59] sm:$0x1] %vm350, %v2156
      %2175 = vst.msk [vmem:[#allocation2 + $0x71] sm:$0x1] %vm350, %v2157
      %2176 = vst.msk [vmem:[#allocation2 + $0x89] sm:$0x1] %vm350, %v2158
      %2177 = vst.msk [vmem:[#allocation2 + $0xa1] sm:$0x1] %vm350, %v2159
      %2178 = vst.msk [vmem:[#allocation2 + $0xb9] sm:$0x1] %vm350, %v2160
      %2179 = vst.msk [vmem:[#allocation2 + $0xd1] sm:$0x1] %vm350, %v2161
      %2180 = vst.msk [vmem:[#allocation2 + $0xe9] sm:$0x1] %vm350, %v2162
      %2181 = vst.msk [vmem:[#allocation2 + $0x101] sm:$0x1] %vm350, %v2163
      %2182 = vst.msk [vmem:[#allocation2 + $0x119] sm:$0x1] %vm350, %v2164
      %2183 = vst.msk [vmem:[#allocation2 + $0x131] sm:$0x1] %vm350, %v2165
      %2184 = vst.msk [vmem:[#allocation2 + $0x149] sm:$0x1] %vm350, %v2166
      %2185 = vst.msk [vmem:[#allocation2 + $0x161] sm:$0x1] %vm350, %v2167
      %2186 = vst.msk [vmem:[#allocation2 + $0x179] sm:$0x1] %vm350, %v2168
      %2187 = vst.msk [vmem:[#allocation2 + $0x191] sm:$0x1] %vm350, %v2169
      %2188 = vst.msk [vmem:[#allocation2 + $0x1a9] sm:$0x1] %vm350, %v2170
      %v2189 = vld [vmem:[#allocation2] sm:$0xff]
      %v2190 = vld [vmem:[#allocation2 + $0x8] sm:$0xff]
      %v2191 = vld [vmem:[#allocation2 + $0x10] sm:$0x3]
      %v2192 = vld [vmem:[#allocation2 + $0x18] sm:$0xff]
      %v2193 = vld [vmem:[#allocation2 + $0x20] sm:$0xff]
      %v2194 = vld [vmem:[#allocation2 + $0x28] sm:$0x3]
      %v2195 = vld [vmem:[#allocation2 + $0x30] sm:$0xff]
      %v2196 = vld [vmem:[#allocation2 + $0x38] sm:$0xff]
      %v2197 = vld [vmem:[#allocation2 + $0x40] sm:$0x3]
      %v2198 = vld [vmem:[#allocation2 + $0x48] sm:$0xff]
      %v2199 = vld [vmem:[#allocation2 + $0x50] sm:$0xff]
      %v2200 = vld [vmem:[#allocation2 + $0x58] sm:$0x3]
      %v2201 = vld [vmem:[#allocation2 + $0x60] sm:$0xff]
      %v2202 = vld [vmem:[#allocation2 + $0x68] sm:$0xff]
      %v2203 = vld [vmem:[#allocation2 + $0x70] sm:$0x3]
      %v2204 = vld [vmem:[#allocation2 + $0x78] sm:$0xff]
      %v2205 = vld [vmem:[#allocation2 + $0x80] sm:$0xff]
      %v2206 = vld [vmem:[#allocation2 + $0x88] sm:$0x3]
      %v2207 = vld [vmem:[#allocation2 + $0x90] sm:$0xff]
      %v2208 = vld [vmem:[#allocation2 + $0x98] sm:$0xff]
      %v2209 = vld [vmem:[#allocation2 + $0xa0] sm:$0x3]
      %v2210 = vld [vmem:[#allocation2 + $0xa8] sm:$0xff]
      %v2211 = vld [vmem:[#allocation2 + $0xb0] sm:$0xff]
      %v2212 = vld [vmem:[#allocation2 + $0xb8] sm:$0x3]
      %v2213 = vld [vmem:[#allocation2 + $0xc0] sm:$0xff]
      %v2214 = vld [vmem:[#allocation2 + $0xc8] sm:$0xff]
      %v2215 = vld [vmem:[#allocation2 + $0xd0] sm:$0x3]
      %v2216 = vld [vmem:[#allocation2 + $0xd8] sm:$0xff]
      %v2217 = vld [vmem:[#allocation2 + $0xe0] sm:$0xff]
      %v2218 = vld [vmem:[#allocation2 + $0xe8] sm:$0x3]
      %v2219 = vld [vmem:[#allocation2 + $0xf0] sm:$0xff]
      %v2220 = vld [vmem:[#allocation2 + $0xf8] sm:$0xff]
      %v2221 = vld [vmem:[#allocation2 + $0x100] sm:$0x3]
      %v2222 = vld [vmem:[#allocation2 + $0x108] sm:$0xff]
      %v2223 = vld [vmem:[#allocation2 + $0x110] sm:$0xff]
      %v2224 = vld [vmem:[#allocation2 + $0x118] sm:$0x3]
      %v2225 = vld [vmem:[#allocation2 + $0x120] sm:$0xff]
      %v2226 = vld [vmem:[#allocation2 + $0x128] sm:$0xff]
      %v2227 = vld [vmem:[#allocation2 + $0x130] sm:$0x3]
      %v2228 = vld [vmem:[#allocation2 + $0x138] sm:$0xff]
      %v2229 = vld [vmem:[#allocation2 + $0x140] sm:$0xff]
      %v2230 = vld [vmem:[#allocation2 + $0x148] sm:$0x3]
      %v2231 = vld [vmem:[#allocation2 + $0x150] sm:$0xff]
      %v2232 = vld [vmem:[#allocation2 + $0x158] sm:$0xff]
      %v2233 = vld [vmem:[#allocation2 + $0x160] sm:$0x3]
      %v2234 = vld [vmem:[#allocation2 + $0x168] sm:$0xff]
      %v2235 = vld [vmem:[#allocation2 + $0x170] sm:$0xff]
      %v2236 = vld [vmem:[#allocation2 + $0x178] sm:$0x3]
      %v2237 = vld [vmem:[#allocation2 + $0x180] sm:$0xff]
      %v2238 = vld [vmem:[#allocation2 + $0x188] sm:$0xff]
      %v2239 = vld [vmem:[#allocation2 + $0x190] sm:$0x3]
      %v2240 = vld [vmem:[#allocation2 + $0x198] sm:$0xff]
      %v2241 = vld [vmem:[#allocation2 + $0x1a0] sm:$0xff]
      %v2242 = vld [vmem:[#allocation2 + $0x1a8] sm:$0x3]
      %2243 = vxpose.xlu0.b32.start [1/16] %v2189, 128
      %2244 = vxpose.xlu0.b32.cont [2/16] %v2190, 128
      %2245 = vxpose.xlu0.b32.cont [3/16] %v2192, 128
      %2246 = vxpose.xlu0.b32.cont [4/16] %v2193, 128
      %2247 = vxpose.xlu0.b32.cont [5/16] %v2195, 128
      %2248 = vxpose.xlu0.b32.cont [6/16] %v2196, 128
      %2249 = vxpose.xlu0.b32.cont [7/16] %v2198, 128
      %2250 = vxpose.xlu0.b32.cont [8/16] %v2199, 128
      %2251 = vxpose.xlu0.b32.cont [9/16] %v2201, 128
      %2252 = vxpose.xlu0.b32.cont [10/16] %v2202, 128
      %2253 = vxpose.xlu0.b32.cont [11/16] %v2204, 128
      %2254 = vxpose.xlu0.b32.cont [12/16] %v2205, 128
      %2255 = vxpose.xlu0.b32.cont [13/16] %v2207, 128
      %2256 = vxpose.xlu0.b32.cont [14/16] %v2208, 128
      %2257 = vxpose.xlu0.b32.cont [15/16] %v2210, 128
      %2258 = vxpose.xlu0.b32.end [16/16] %v2211, 128
      %v2259 = vpop.trf.xlu0
      %v2260 = vpop.trf.xlu0
      %v2261 = vpop.trf.xlu0
      %v2262 = vpop.trf.xlu0
      %v2263 = vpop.trf.xlu0
      %v2264 = vpop.trf.xlu0
      %v2265 = vpop.trf.xlu0
      %v2266 = vpop.trf.xlu0
      %v2267 = vpop.trf.xlu0
      %v2268 = vpop.trf.xlu0
      %v2269 = vpop.trf.xlu0
      %v2270 = vpop.trf.xlu0
      %v2271 = vpop.trf.xlu0
      %v2272 = vpop.trf.xlu0
      %v2273 = vpop.trf.xlu0
      %v2274 = vpop.trf.xlu0
      %2275 = vxpose.xlu0.b32.start [1/16] %v2213, 128
      %2276 = vxpose.xlu0.b32.cont [2/16] %v2214, 128
      %2277 = vxpose.xlu0.b32.cont [3/16] %v2216, 128
      %2278 = vxpose.xlu0.b32.cont [4/16] %v2217, 128
      %2279 = vxpose.xlu0.b32.cont [5/16] %v2219, 128
      %2280 = vxpose.xlu0.b32.cont [6/16] %v2220, 128
      %2281 = vxpose.xlu0.b32.cont [7/16] %v2222, 128
      %2282 = vxpose.xlu0.b32.cont [8/16] %v2223, 128
      %2283 = vxpose.xlu0.b32.cont [9/16] %v2225, 128
      %2284 = vxpose.xlu0.b32.cont [10/16] %v2226, 128
      %2285 = vxpose.xlu0.b32.cont [11/16] %v2228, 128
      %2286 = vxpose.xlu0.b32.cont [12/16] %v2229, 128
      %2287 = vxpose.xlu0.b32.cont [13/16] %v2231, 128
      %2288 = vxpose.xlu0.b32.cont [14/16] %v2232, 128
      %2289 = vxpose.xlu0.b32.cont [15/16] %v2234, 128
      %2290 = vxpose.xlu0.b32.end [16/16] %v2235, 128
      %v2291 = vpop.trf.xlu0
      %v2292 = vpop.trf.xlu0
      %v2293 = vpop.trf.xlu0
      %v2294 = vpop.trf.xlu0
      %v2295 = vpop.trf.xlu0
      %v2296 = vpop.trf.xlu0
      %v2297 = vpop.trf.xlu0
      %v2298 = vpop.trf.xlu0
      %v2299 = vpop.trf.xlu0
      %v2300 = vpop.trf.xlu0
      %v2301 = vpop.trf.xlu0
      %v2302 = vpop.trf.xlu0
      %v2303 = vpop.trf.xlu0
      %v2304 = vpop.trf.xlu0
      %v2305 = vpop.trf.xlu0
      %v2306 = vpop.trf.xlu0
      %2307 = vst [vmem:[#allocation3] sm:$0xf] %v2259
      %2308 = vst [vmem:[#allocation3 + $0x8] sm:$0xf] %v2291
      %v2357 = vrot.slane %v2189, 1
      %v2358 = vrot.slane %v2190, 1
      %v2359 = vsel %vm573, %v2357, %v2358
      %v2360 = vrot.slane %v2191, 1
      %v2361 = vsel %vm573, %v2358, %v2360
      %v2362 = vrot.slane %v2192, 1
      %v2363 = vrot.slane %v2193, 1
      %v2364 = vsel %vm573, %v2362, %v2363
      %v2365 = vrot.slane %v2194, 1
      %v2366 = vsel %vm573, %v2363, %v2365
      %v2367 = vrot.slane %v2195, 1
      %v2368 = vrot.slane %v2196, 1
      %v2369 = vsel %vm573, %v2367, %v2368
      %v2370 = vrot.slane %v2197, 1
      %v2371 = vsel %vm573, %v2368, %v2370
      %v2372 = vrot.slane %v2198, 1
      %v2373 = vrot.slane %v2199, 1
      %v2374 = vsel %vm573, %v2372, %v2373
      %v2375 = vrot.slane %v2200, 1
      %v2376 = vsel %vm573, %v2373, %v2375
      %v2377 = vrot.slane %v2201, 1
      %v2378 = vrot.slane %v2202, 1
      %v2379 = vsel %vm573, %v2377, %v2378
      %v2380 = vrot.slane %v2203, 1
      %v2381 = vsel %vm573, %v2378, %v2380
      %v2382 = vrot.slane %v2204, 1
      %v2383 = vrot.slane %v2205, 1
      %v2384 = vsel %vm573, %v2382, %v2383
      %v2385 = vrot.slane %v2206, 1
      %v2386 = vsel %vm573, %v2383, %v2385
      %v2387 = vrot.slane %v2207, 1
      %v2388 = vrot.slane %v2208, 1
      %v2389 = vsel %vm573, %v2387, %v2388
      %v2390 = vrot.slane %v2209, 1
      %v2391 = vsel %vm573, %v2388, %v2390
      %v2392 = vrot.slane %v2210, 1
      %v2393 = vrot.slane %v2211, 1
      %v2394 = vsel %vm573, %v2392, %v2393
      %v2395 = vrot.slane %v2212, 1
      %v2396 = vsel %vm573, %v2393, %v2395
      %v2397 = vrot.slane %v2213, 1
      %v2398 = vrot.slane %v2214, 1
      %v2399 = vsel %vm573, %v2397, %v2398
      %v2400 = vrot.slane %v2215, 1
      %v2401 = vsel %vm573, %v2398, %v2400
      %v2402 = vrot.slane %v2216, 1
      %v2403 = vrot.slane %v2217, 1
      %v2404 = vsel %vm573, %v2402, %v2403
      %v2405 = vrot.slane %v2218, 1
      %v2406 = vsel %vm573, %v2403, %v2405
      %v2407 = vrot.slane %v2219, 1
      %v2408 = vrot.slane %v2220, 1
      %v2409 = vsel %vm573, %v2407, %v2408
      %v2410 = vrot.slane %v2221, 1
      %v2411 = vsel %vm573, %v2408, %v2410
      %v2412 = vrot.slane %v2222, 1
      %v2413 = vrot.slane %v2223, 1
      %v2414 = vsel %vm573, %v2412, %v2413
      %v2415 = vrot.slane %v2224, 1
      %v2416 = vsel %vm573, %v2413, %v2415
      %v2417 = vrot.slane %v2225, 1
      %v2418 = vrot.slane %v2226, 1
      %v2419 = vsel %vm573, %v2417, %v2418
      %v2420 = vrot.slane %v2227, 1
      %v2421 = vsel %vm573, %v2418, %v2420
      %v2422 = vrot.slane %v2228, 1
      %v2423 = vrot.slane %v2229, 1
      %v2424 = vsel %vm573, %v2422, %v2423
      %v2425 = vrot.slane %v2230, 1
      %v2426 = vsel %vm573, %v2423, %v2425
      %v2427 = vrot.slane %v2231, 1
      %v2428 = vrot.slane %v2232, 1
      %v2429 = vsel %vm573, %v2427, %v2428
      %v2430 = vrot.slane %v2233, 1
      %v2431 = vsel %vm573, %v2428, %v2430
      %v2432 = vrot.slane %v2234, 1
      %v2433 = vrot.slane %v2235, 1
      %v2434 = vsel %vm573, %v2432, %v2433
      %v2435 = vrot.slane %v2236, 1
      %v2436 = vsel %vm573, %v2433, %v2435
      %2469 = vxpose.xlu0.b32.start [1/16] %v2359, 128
      %2470 = vxpose.xlu0.b32.cont [2/16] %v2361, 128
      %2471 = vxpose.xlu0.b32.cont [3/16] %v2364, 128
      %2472 = vxpose.xlu0.b32.cont [4/16] %v2366, 128
      %2473 = vxpose.xlu0.b32.cont [5/16] %v2369, 128
      %2474 = vxpose.xlu0.b32.cont [6/16] %v2371, 128
      %2475 = vxpose.xlu0.b32.cont [7/16] %v2374, 128
      %2476 = vxpose.xlu0.b32.cont [8/16] %v2376, 128
      %2477 = vxpose.xlu0.b32.cont [9/16] %v2379, 128
      %2478 = vxpose.xlu0.b32.cont [10/16] %v2381, 128
      %2479 = vxpose.xlu0.b32.cont [11/16] %v2384, 128
      %2480 = vxpose.xlu0.b32.cont [12/16] %v2386, 128
      %2481 = vxpose.xlu0.b32.cont [13/16] %v2389, 128
      %2482 = vxpose.xlu0.b32.cont [14/16] %v2391, 128
      %2483 = vxpose.xlu0.b32.cont [15/16] %v2394, 128
      %2484 = vxpose.xlu0.b32.end [16/16] %v2396, 128
      %v2485 = vpop.trf.xlu0
      %v2486 = vpop.trf.xlu0
      %v2487 = vpop.trf.xlu0
      %v2488 = vpop.trf.xlu0
      %v2489 = vpop.trf.xlu0
      %v2490 = vpop.trf.xlu0
      %v2491 = vpop.trf.xlu0
      %v2492 = vpop.trf.xlu0
      %v2493 = vpop.trf.xlu0
      %v2494 = vpop.trf.xlu0
      %v2495 = vpop.trf.xlu0
      %v2496 = vpop.trf.xlu0
      %v2497 = vpop.trf.xlu0
      %v2498 = vpop.trf.xlu0
      %v2499 = vpop.trf.xlu0
      %v2500 = vpop.trf.xlu0
      %2501 = vxpose.xlu0.b32.start [1/16] %v2399, 128
      %2502 = vxpose.xlu0.b32.cont [2/16] %v2401, 128
      %2503 = vxpose.xlu0.b32.cont [3/16] %v2404, 128
      %2504 = vxpose.xlu0.b32.cont [4/16] %v2406, 128
      %2505 = vxpose.xlu0.b32.cont [5/16] %v2409, 128
      %2506 = vxpose.xlu0.b32.cont [6/16] %v2411, 128
      %2507 = vxpose.xlu0.b32.cont [7/16] %v2414, 128
      %2508 = vxpose.xlu0.b32.cont [8/16] %v2416, 128
      %2509 = vxpose.xlu0.b32.cont [9/16] %v2419, 128
      %2510 = vxpose.xlu0.b32.cont [10/16] %v2421, 128
      %2511 = vxpose.xlu0.b32.cont [11/16] %v2424, 128
      %2512 = vxpose.xlu0.b32.cont [12/16] %v2426, 128
      %2513 = vxpose.xlu0.b32.cont [13/16] %v2429, 128
      %2514 = vxpose.xlu0.b32.cont [14/16] %v2431, 128
      %2515 = vxpose.xlu0.b32.cont [15/16] %v2434, 128
      %2516 = vxpose.xlu0.b32.end [16/16] %v2436, 128
      %v2517 = vpop.trf.xlu0
      %v2518 = vpop.trf.xlu0
      %v2519 = vpop.trf.xlu0
      %v2520 = vpop.trf.xlu0
      %v2521 = vpop.trf.xlu0
      %v2522 = vpop.trf.xlu0
      %v2523 = vpop.trf.xlu0
      %v2524 = vpop.trf.xlu0
      %v2525 = vpop.trf.xlu0
      %v2526 = vpop.trf.xlu0
      %v2527 = vpop.trf.xlu0
      %v2528 = vpop.trf.xlu0
      %v2529 = vpop.trf.xlu0
      %v2530 = vpop.trf.xlu0
      %v2531 = vpop.trf.xlu0
      %v2532 = vpop.trf.xlu0
      %v2535 = vrot.slane %v2485, 4
      %v2536 = vrot.slane %v2517, 4
      %2539 = vst [vmem:[#allocation3] sm:$0xf0] %v2535
      %2540 = vst [vmem:[#allocation3 + $0x8] sm:$0xf0] %v2536
      %v2541 = vrot.slane %v2189, 2
      %v2542 = vrot.slane %v2190, 2
      %v2543 = vsel %vm758, %v2541, %v2542
      %v2544 = vrot.slane %v2191, 2
      %v2545 = vsel %vm758, %v2542, %v2544
      %v2546 = vrot.slane %v2192, 2
      %v2547 = vrot.slane %v2193, 2
      %v2548 = vsel %vm758, %v2546, %v2547
      %v2549 = vrot.slane %v2194, 2
      %v2550 = vsel %vm758, %v2547, %v2549
      %v2551 = vrot.slane %v2195, 2
      %v2552 = vrot.slane %v2196, 2
      %v2553 = vsel %vm758, %v2551, %v2552
      %v2554 = vrot.slane %v2197, 2
      %v2555 = vsel %vm758, %v2552, %v2554
      %v2556 = vrot.slane %v2198, 2
      %v2557 = vrot.slane %v2199, 2
      %v2558 = vsel %vm758, %v2556, %v2557
      %v2559 = vrot.slane %v2200, 2
      %v2560 = vsel %vm758, %v2557, %v2559
      %v2561 = vrot.slane %v2201, 2
      %v2562 = vrot.slane %v2202, 2
      %v2563 = vsel %vm758, %v2561, %v2562
      %v2564 = vrot.slane %v2203, 2
      %v2565 = vsel %vm758, %v2562, %v2564
      %v2566 = vrot.slane %v2204, 2
      %v2567 = vrot.slane %v2205, 2
      %v2568 = vsel %vm758, %v2566, %v2567
      %v2569 = vrot.slane %v2206, 2
      %v2570 = vsel %vm758, %v2567, %v2569
      %v2571 = vrot.slane %v2207, 2
      %v2572 = vrot.slane %v2208, 2
      %v2573 = vsel %vm758, %v2571, %v2572
      %v2574 = vrot.slane %v2209, 2
      %v2575 = vsel %vm758, %v2572, %v2574
      %v2576 = vrot.slane %v2210, 2
      %v2577 = vrot.slane %v2211, 2
      %v2578 = vsel %vm758, %v2576, %v2577
      %v2579 = vrot.slane %v2212, 2
      %v2580 = vsel %vm758, %v2577, %v2579
      %v2581 = vrot.slane %v2213, 2
      %v2582 = vrot.slane %v2214, 2
      %v2583 = vsel %vm758, %v2581, %v2582
      %v2584 = vrot.slane %v2215, 2
      %v2585 = vsel %vm758, %v2582, %v2584
      %v2586 = vrot.slane %v2216, 2
      %v2587 = vrot.slane %v2217, 2
      %v2588 = vsel %vm758, %v2586, %v2587
      %v2589 = vrot.slane %v2218, 2
      %v2590 = vsel %vm758, %v2587, %v2589
      %v2591 = vrot.slane %v2219, 2
      %v2592 = vrot.slane %v2220, 2
      %v2593 = vsel %vm758, %v2591, %v2592
      %v2594 = vrot.slane %v2221, 2
      %v2595 = vsel %vm758, %v2592, %v2594
      %v2596 = vrot.slane %v2222, 2
      %v2597 = vrot.slane %v2223, 2
      %v2598 = vsel %vm758, %v2596, %v2597
      %v2599 = vrot.slane %v2224, 2
      %v2600 = vsel %vm758, %v2597, %v2599
      %v2601 = vrot.slane %v2225, 2
      %v2602 = vrot.slane %v2226, 2
      %v2603 = vsel %vm758, %v2601, %v2602
      %v2604 = vrot.slane %v2227, 2
      %v2605 = vsel %vm758, %v2602, %v2604
      %v2606 = vrot.slane %v2228, 2
      %v2607 = vrot.slane %v2229, 2
      %v2608 = vsel %vm758, %v2606, %v2607
      %v2609 = vrot.slane %v2230, 2
      %v2610 = vsel %vm758, %v2607, %v2609
      %v2611 = vrot.slane %v2231, 2
      %v2612 = vrot.slane %v2232, 2
      %v2613 = vsel %vm758, %v2611, %v2612
      %v2614 = vrot.slane %v2233, 2
      %v2615 = vsel %vm758, %v2612, %v2614
      %v2616 = vrot.slane %v2234, 2
      %v2617 = vrot.slane %v2235, 2
      %v2618 = vsel %vm758, %v2616, %v2617
      %v2619 = vrot.slane %v2236, 2
      %v2620 = vsel %vm758, %v2617, %v2619
      %2653 = vxpose.xlu0.b32.start [1/16] %v2543, 128
      %2654 = vxpose.xlu0.b32.cont [2/16] %v2545, 128
      %2655 = vxpose.xlu0.b32.cont [3/16] %v2548, 128
      %2656 = vxpose.xlu0.b32.cont [4/16] %v2550, 128
      %2657 = vxpose.xlu0.b32.cont [5/16] %v2553, 128
      %2658 = vxpose.xlu0.b32.cont [6/16] %v2555, 128
      %2659 = vxpose.xlu0.b32.cont [7/16] %v2558, 128
      %2660 = vxpose.xlu0.b32.cont [8/16] %v2560, 128
      %2661 = vxpose.xlu0.b32.cont [9/16] %v2563, 128
      %2662 = vxpose.xlu0.b32.cont [10/16] %v2565, 128
      %2663 = vxpose.xlu0.b32.cont [11/16] %v2568, 128
      %2664 = vxpose.xlu0.b32.cont [12/16] %v2570, 128
      %2665 = vxpose.xlu0.b32.cont [13/16] %v2573, 128
      %2666 = vxpose.xlu0.b32.cont [14/16] %v2575, 128
      %2667 = vxpose.xlu0.b32.cont [15/16] %v2578, 128
      %2668 = vxpose.xlu0.b32.end [16/16] %v2580, 128
      %v2669 = vpop.trf.xlu0
      %v2670 = vpop.trf.xlu0
      %v2671 = vpop.trf.xlu0
      %v2672 = vpop.trf.xlu0
      %v2673 = vpop.trf.xlu0
      %v2674 = vpop.trf.xlu0
      %v2675 = vpop.trf.xlu0
      %v2676 = vpop.trf.xlu0
      %v2677 = vpop.trf.xlu0
      %v2678 = vpop.trf.xlu0
      %v2679 = vpop.trf.xlu0
      %v2680 = vpop.trf.xlu0
      %v2681 = vpop.trf.xlu0
      %v2682 = vpop.trf.xlu0
      %v2683 = vpop.trf.xlu0
      %v2684 = vpop.trf.xlu0
      %2685 = vxpose.xlu0.b32.start [1/16] %v2583, 128
      %2686 = vxpose.xlu0.b32.cont [2/16] %v2585, 128
      %2687 = vxpose.xlu0.b32.cont [3/16] %v2588, 128
      %2688 = vxpose.xlu0.b32.cont [4/16] %v2590, 128
      %2689 = vxpose.xlu0.b32.cont [5/16] %v2593, 128
      %2690 = vxpose.xlu0.b32.cont [6/16] %v2595, 128
      %2691 = vxpose.xlu0.b32.cont [7/16] %v2598, 128
      %2692 = vxpose.xlu0.b32.cont [8/16] %v2600, 128
      %2693 = vxpose.xlu0.b32.cont [9/16] %v2603, 128
      %2694 = vxpose.xlu0.b32.cont [10/16] %v2605, 128
      %2695 = vxpose.xlu0.b32.cont [11/16] %v2608, 128
      %2696 = vxpose.xlu0.b32.cont [12/16] %v2610, 128
      %2697 = vxpose.xlu0.b32.cont [13/16] %v2613, 128
      %2698 = vxpose.xlu0.b32.cont [14/16] %v2615, 128
      %2699 = vxpose.xlu0.b32.cont [15/16] %v2618, 128
      %2700 = vxpose.xlu0.b32.end [16/16] %v2620, 128
      %v2701 = vpop.trf.xlu0
      %v2702 = vpop.trf.xlu0
      %v2703 = vpop.trf.xlu0
      %v2704 = vpop.trf.xlu0
      %v2705 = vpop.trf.xlu0
      %v2706 = vpop.trf.xlu0
      %v2707 = vpop.trf.xlu0
      %v2708 = vpop.trf.xlu0
      %v2709 = vpop.trf.xlu0
      %v2710 = vpop.trf.xlu0
      %v2711 = vpop.trf.xlu0
      %v2712 = vpop.trf.xlu0
      %v2713 = vpop.trf.xlu0
      %v2714 = vpop.trf.xlu0
      %v2715 = vpop.trf.xlu0
      %v2716 = vpop.trf.xlu0
      %2717 = vst [vmem:[#allocation3 + $0x10] sm:$0xf] %v2669
      %2718 = vst [vmem:[#allocation3 + $0x18] sm:$0xf] %v2701
      %2719 = vxpose.xlu0.b32.start [1/16] %v2192, 128
      %2720 = vxpose.xlu0.b32.cont [2/16] %v2193, 128
      %2721 = vxpose.xlu0.b32.cont [3/16] %v2195, 128
      %2722 = vxpose.xlu0.b32.cont [4/16] %v2196, 128
      %2723 = vxpose.xlu0.b32.cont [5/16] %v2198, 128
      %2724 = vxpose.xlu0.b32.cont [6/16] %v2199, 128
      %2725 = vxpose.xlu0.b32.cont [7/16] %v2201, 128
      %2726 = vxpose.xlu0.b32.cont [8/16] %v2202, 128
      %2727 = vxpose.xlu0.b32.cont [9/16] %v2204, 128
      %2728 = vxpose.xlu0.b32.cont [10/16] %v2205, 128
      %2729 = vxpose.xlu0.b32.cont [11/16] %v2207, 128
      %2730 = vxpose.xlu0.b32.cont [12/16] %v2208, 128
      %2731 = vxpose.xlu0.b32.cont [13/16] %v2210, 128
      %2732 = vxpose.xlu0.b32.cont [14/16] %v2211, 128
      %2733 = vxpose.xlu0.b32.cont [15/16] %v2213, 128
      %2734 = vxpose.xlu0.b32.end [16/16] %v2214, 128
      %v2735 = vpop.trf.xlu0
      %v2736 = vpop.trf.xlu0
      %v2737 = vpop.trf.xlu0
      %v2738 = vpop.trf.xlu0
      %v2739 = vpop.trf.xlu0
      %v2740 = vpop.trf.xlu0
      %v2741 = vpop.trf.xlu0
      %v2742 = vpop.trf.xlu0
      %v2743 = vpop.trf.xlu0
      %v2744 = vpop.trf.xlu0
      %v2745 = vpop.trf.xlu0
      %v2746 = vpop.trf.xlu0
      %v2747 = vpop.trf.xlu0
      %v2748 = vpop.trf.xlu0
      %v2749 = vpop.trf.xlu0
      %v2750 = vpop.trf.xlu0
      %2751 = vxpose.xlu0.b32.start [1/16] %v2216, 128
      %2752 = vxpose.xlu0.b32.cont [2/16] %v2217, 128
      %2753 = vxpose.xlu0.b32.cont [3/16] %v2219, 128
      %2754 = vxpose.xlu0.b32.cont [4/16] %v2220, 128
      %2755 = vxpose.xlu0.b32.cont [5/16] %v2222, 128
      %2756 = vxpose.xlu0.b32.cont [6/16] %v2223, 128
      %2757 = vxpose.xlu0.b32.cont [7/16] %v2225, 128
      %2758 = vxpose.xlu0.b32.cont [8/16] %v2226, 128
      %2759 = vxpose.xlu0.b32.cont [9/16] %v2228, 128
      %2760 = vxpose.xlu0.b32.cont [10/16] %v2229, 128
      %2761 = vxpose.xlu0.b32.cont [11/16] %v2231, 128
      %2762 = vxpose.xlu0.b32.cont [12/16] %v2232, 128
      %2763 = vxpose.xlu0.b32.cont [13/16] %v2234, 128
      %2764 = vxpose.xlu0.b32.cont [14/16] %v2235, 128
      %2765 = vxpose.xlu0.b32.cont [15/16] %v2237, 128
      %2766 = vxpose.xlu0.b32.end [16/16] %v2238, 128
      %v2767 = vpop.trf.xlu0
      %v2768 = vpop.trf.xlu0
      %v2769 = vpop.trf.xlu0
      %v2770 = vpop.trf.xlu0
      %v2771 = vpop.trf.xlu0
      %v2772 = vpop.trf.xlu0
      %v2773 = vpop.trf.xlu0
      %v2774 = vpop.trf.xlu0
      %v2775 = vpop.trf.xlu0
      %v2776 = vpop.trf.xlu0
      %v2777 = vpop.trf.xlu0
      %v2778 = vpop.trf.xlu0
      %v2779 = vpop.trf.xlu0
      %v2780 = vpop.trf.xlu0
      %v2781 = vpop.trf.xlu0
      %v2782 = vpop.trf.xlu0
      %v2785 = vrot.slane %v2735, 4
      %v2786 = vrot.slane %v2767, 4
      %2789 = vst [vmem:[#allocation3 + $0x10] sm:$0xf0] %v2785
      %2790 = vst [vmem:[#allocation3 + $0x18] sm:$0xf0] %v2786
      %v2794 = vrot.slane %v2237, 1
      %v2795 = vrot.slane %v2238, 1
      %v2796 = vsel %vm573, %v2794, %v2795
      %v2797 = vrot.slane %v2239, 1
      %v2798 = vsel %vm573, %v2795, %v2797
      %2801 = vxpose.xlu0.b32.start [1/16] %v2364, 128
      %2802 = vxpose.xlu0.b32.cont [2/16] %v2366, 128
      %2803 = vxpose.xlu0.b32.cont [3/16] %v2369, 128
      %2804 = vxpose.xlu0.b32.cont [4/16] %v2371, 128
      %2805 = vxpose.xlu0.b32.cont [5/16] %v2374, 128
      %2806 = vxpose.xlu0.b32.cont [6/16] %v2376, 128
      %2807 = vxpose.xlu0.b32.cont [7/16] %v2379, 128
      %2808 = vxpose.xlu0.b32.cont [8/16] %v2381, 128
      %2809 = vxpose.xlu0.b32.cont [9/16] %v2384, 128
      %2810 = vxpose.xlu0.b32.cont [10/16] %v2386, 128
      %2811 = vxpose.xlu0.b32.cont [11/16] %v2389, 128
      %2812 = vxpose.xlu0.b32.cont [12/16] %v2391, 128
      %2813 = vxpose.xlu0.b32.cont [13/16] %v2394, 128
      %2814 = vxpose.xlu0.b32.cont [14/16] %v2396, 128
      %2815 = vxpose.xlu0.b32.cont [15/16] %v2399, 128
      %2816 = vxpose.xlu0.b32.end [16/16] %v2401, 128
      %v2817 = vpop.trf.xlu0
      %v2818 = vpop.trf.xlu0
      %v2819 = vpop.trf.xlu0
      %v2820 = vpop.trf.xlu0
      %v2821 = vpop.trf.xlu0
      %v2822 = vpop.trf.xlu0
      %v2823 = vpop.trf.xlu0
      %v2824 = vpop.trf.xlu0
      %v2825 = vpop.trf.xlu0
      %v2826 = vpop.trf.xlu0
      %v2827 = vpop.trf.xlu0
      %v2828 = vpop.trf.xlu0
      %v2829 = vpop.trf.xlu0
      %v2830 = vpop.trf.xlu0
      %v2831 = vpop.trf.xlu0
      %v2832 = vpop.trf.xlu0
      %2833 = vxpose.xlu0.b32.start [1/16] %v2404, 128
      %2834 = vxpose.xlu0.b32.cont [2/16] %v2406, 128
      %2835 = vxpose.xlu0.b32.cont [3/16] %v2409, 128
      %2836 = vxpose.xlu0.b32.cont [4/16] %v2411, 128
      %2837 = vxpose.xlu0.b32.cont [5/16] %v2414, 128
      %2838 = vxpose.xlu0.b32.cont [6/16] %v2416, 128
      %2839 = vxpose.xlu0.b32.cont [7/16] %v2419, 128
      %2840 = vxpose.xlu0.b32.cont [8/16] %v2421, 128
      %2841 = vxpose.xlu0.b32.cont [9/16] %v2424, 128
      %2842 = vxpose.xlu0.b32.cont [10/16] %v2426, 128
      %2843 = vxpose.xlu0.b32.cont [11/16] %v2429, 128
      %2844 = vxpose.xlu0.b32.cont [12/16] %v2431, 128
      %2845 = vxpose.xlu0.b32.cont [13/16] %v2434, 128
      %2846 = vxpose.xlu0.b32.cont [14/16] %v2436, 128
      %2847 = vxpose.xlu0.b32.cont [15/16] %v2796, 128
      %2848 = vxpose.xlu0.b32.end [16/16] %v2798, 128
      %v2849 = vpop.trf.xlu0
      %v2850 = vpop.trf.xlu0
      %v2851 = vpop.trf.xlu0
      %v2852 = vpop.trf.xlu0
      %v2853 = vpop.trf.xlu0
      %v2854 = vpop.trf.xlu0
      %v2855 = vpop.trf.xlu0
      %v2856 = vpop.trf.xlu0
      %v2857 = vpop.trf.xlu0
      %v2858 = vpop.trf.xlu0
      %v2859 = vpop.trf.xlu0
      %v2860 = vpop.trf.xlu0
      %v2861 = vpop.trf.xlu0
      %v2862 = vpop.trf.xlu0
      %v2863 = vpop.trf.xlu0
      %v2864 = vpop.trf.xlu0
      %2865 = vst [vmem:[#allocation3 + $0x20] sm:$0xf] %v2817
      %2866 = vst [vmem:[#allocation3 + $0x28] sm:$0xf] %v2849
      %v2867 = vrot.slane %v2237, 2
      %v2868 = vrot.slane %v2238, 2
      %v2869 = vsel %vm758, %v2867, %v2868
      %v2870 = vrot.slane %v2239, 2
      %v2871 = vsel %vm758, %v2868, %v2870
      %2874 = vxpose.xlu0.b32.start [1/16] %v2548, 128
      %2875 = vxpose.xlu0.b32.cont [2/16] %v2550, 128
      %2876 = vxpose.xlu0.b32.cont [3/16] %v2553, 128
      %2877 = vxpose.xlu0.b32.cont [4/16] %v2555, 128
      %2878 = vxpose.xlu0.b32.cont [5/16] %v2558, 128
      %2879 = vxpose.xlu0.b32.cont [6/16] %v2560, 128
      %2880 = vxpose.xlu0.b32.cont [7/16] %v2563, 128
      %2881 = vxpose.xlu0.b32.cont [8/16] %v2565, 128
      %2882 = vxpose.xlu0.b32.cont [9/16] %v2568, 128
      %2883 = vxpose.xlu0.b32.cont [10/16] %v2570, 128
      %2884 = vxpose.xlu0.b32.cont [11/16] %v2573, 128
      %2885 = vxpose.xlu0.b32.cont [12/16] %v2575, 128
      %2886 = vxpose.xlu0.b32.cont [13/16] %v2578, 128
      %2887 = vxpose.xlu0.b32.cont [14/16] %v2580, 128
      %2888 = vxpose.xlu0.b32.cont [15/16] %v2583, 128
      %2889 = vxpose.xlu0.b32.end [16/16] %v2585, 128
      %v2890 = vpop.trf.xlu0
      %v2891 = vpop.trf.xlu0
      %v2892 = vpop.trf.xlu0
      %v2893 = vpop.trf.xlu0
      %v2894 = vpop.trf.xlu0
      %v2895 = vpop.trf.xlu0
      %v2896 = vpop.trf.xlu0
      %v2897 = vpop.trf.xlu0
      %v2898 = vpop.trf.xlu0
      %v2899 = vpop.trf.xlu0
      %v2900 = vpop.trf.xlu0
      %v2901 = vpop.trf.xlu0
      %v2902 = vpop.trf.xlu0
      %v2903 = vpop.trf.xlu0
      %v2904 = vpop.trf.xlu0
      %v2905 = vpop.trf.xlu0
      %2906 = vxpose.xlu0.b32.start [1/16] %v2588, 128
      %2907 = vxpose.xlu0.b32.cont [2/16] %v2590, 128
      %2908 = vxpose.xlu0.b32.cont [3/16] %v2593, 128
      %2909 = vxpose.xlu0.b32.cont [4/16] %v2595, 128
      %2910 = vxpose.xlu0.b32.cont [5/16] %v2598, 128
      %2911 = vxpose.xlu0.b32.cont [6/16] %v2600, 128
      %2912 = vxpose.xlu0.b32.cont [7/16] %v2603, 128
      %2913 = vxpose.xlu0.b32.cont [8/16] %v2605, 128
      %2914 = vxpose.xlu0.b32.cont [9/16] %v2608, 128
      %2915 = vxpose.xlu0.b32.cont [10/16] %v2610, 128
      %2916 = vxpose.xlu0.b32.cont [11/16] %v2613, 128
      %2917 = vxpose.xlu0.b32.cont [12/16] %v2615, 128
      %2918 = vxpose.xlu0.b32.cont [13/16] %v2618, 128
      %2919 = vxpose.xlu0.b32.cont [14/16] %v2620, 128
      %2920 = vxpose.xlu0.b32.cont [15/16] %v2869, 128
      %2921 = vxpose.xlu0.b32.end [16/16] %v2871, 128
      %v2922 = vpop.trf.xlu0
      %v2923 = vpop.trf.xlu0
      %v2924 = vpop.trf.xlu0
      %v2925 = vpop.trf.xlu0
      %v2926 = vpop.trf.xlu0
      %v2927 = vpop.trf.xlu0
      %v2928 = vpop.trf.xlu0
      %v2929 = vpop.trf.xlu0
      %v2930 = vpop.trf.xlu0
      %v2931 = vpop.trf.xlu0
      %v2932 = vpop.trf.xlu0
      %v2933 = vpop.trf.xlu0
      %v2934 = vpop.trf.xlu0
      %v2935 = vpop.trf.xlu0
      %v2936 = vpop.trf.xlu0
      %v2937 = vpop.trf.xlu0
      %v2940 = vrot.slane %v2890, 4
      %v2941 = vrot.slane %v2922, 4
      %2944 = vst [vmem:[#allocation3 + $0x20] sm:$0xf0] %v2940
      %2945 = vst [vmem:[#allocation3 + $0x28] sm:$0xf0] %v2941
      %2946 = vxpose.xlu0.b32.start [1/16] %v2195, 128
      %2947 = vxpose.xlu0.b32.cont [2/16] %v2196, 128
      %2948 = vxpose.xlu0.b32.cont [3/16] %v2198, 128
      %2949 = vxpose.xlu0.b32.cont [4/16] %v2199, 128
      %2950 = vxpose.xlu0.b32.cont [5/16] %v2201, 128
      %2951 = vxpose.xlu0.b32.cont [6/16] %v2202, 128
      %2952 = vxpose.xlu0.b32.cont [7/16] %v2204, 128
      %2953 = vxpose.xlu0.b32.cont [8/16] %v2205, 128
      %2954 = vxpose.xlu0.b32.cont [9/16] %v2207, 128
      %2955 = vxpose.xlu0.b32.cont [10/16] %v2208, 128
      %2956 = vxpose.xlu0.b32.cont [11/16] %v2210, 128
      %2957 = vxpose.xlu0.b32.cont [12/16] %v2211, 128
      %2958 = vxpose.xlu0.b32.cont [13/16] %v2213, 128
      %2959 = vxpose.xlu0.b32.cont [14/16] %v2214, 128
      %2960 = vxpose.xlu0.b32.cont [15/16] %v2216, 128
      %2961 = vxpose.xlu0.b32.end [16/16] %v2217, 128
      %v2962 = vpop.trf.xlu0
      %v2963 = vpop.trf.xlu0
      %v2964 = vpop.trf.xlu0
      %v2965 = vpop.trf.xlu0
      %v2966 = vpop.trf.xlu0
      %v2967 = vpop.trf.xlu0
      %v2968 = vpop.trf.xlu0
      %v2969 = vpop.trf.xlu0
      %v2970 = vpop.trf.xlu0
      %v2971 = vpop.trf.xlu0
      %v2972 = vpop.trf.xlu0
      %v2973 = vpop.trf.xlu0
      %v2974 = vpop.trf.xlu0
      %v2975 = vpop.trf.xlu0
      %v2976 = vpop.trf.xlu0
      %v2977 = vpop.trf.xlu0
      %2978 = vxpose.xlu0.b32.start [1/16] %v2219, 128
      %2979 = vxpose.xlu0.b32.cont [2/16] %v2220, 128
      %2980 = vxpose.xlu0.b32.cont [3/16] %v2222, 128
      %2981 = vxpose.xlu0.b32.cont [4/16] %v2223, 128
      %2982 = vxpose.xlu0.b32.cont [5/16] %v2225, 128
      %2983 = vxpose.xlu0.b32.cont [6/16] %v2226, 128
      %2984 = vxpose.xlu0.b32.cont [7/16] %v2228, 128
      %2985 = vxpose.xlu0.b32.cont [8/16] %v2229, 128
      %2986 = vxpose.xlu0.b32.cont [9/16] %v2231, 128
      %2987 = vxpose.xlu0.b32.cont [10/16] %v2232, 128
      %2988 = vxpose.xlu0.b32.cont [11/16] %v2234, 128
      %2989 = vxpose.xlu0.b32.cont [12/16] %v2235, 128
      %2990 = vxpose.xlu0.b32.cont [13/16] %v2237, 128
      %2991 = vxpose.xlu0.b32.cont [14/16] %v2238, 128
      %2992 = vxpose.xlu0.b32.cont [15/16] %v2240, 128
      %2993 = vxpose.xlu0.b32.end [16/16] %v2241, 128
      %v2994 = vpop.trf.xlu0
      %v2995 = vpop.trf.xlu0
      %v2996 = vpop.trf.xlu0
      %v2997 = vpop.trf.xlu0
      %v2998 = vpop.trf.xlu0
      %v2999 = vpop.trf.xlu0
      %v3000 = vpop.trf.xlu0
      %v3001 = vpop.trf.xlu0
      %v3002 = vpop.trf.xlu0
      %v3003 = vpop.trf.xlu0
      %v3004 = vpop.trf.xlu0
      %v3005 = vpop.trf.xlu0
      %v3006 = vpop.trf.xlu0
      %v3007 = vpop.trf.xlu0
      %v3008 = vpop.trf.xlu0
      %v3009 = vpop.trf.xlu0
      %3010 = vst [vmem:[#allocation3 + $0x30] sm:$0xf] %v2962
      %3011 = vst [vmem:[#allocation3 + $0x38] sm:$0xf] %v2994
      %v3015 = vrot.slane %v2240, 1
      %v3016 = vrot.slane %v2241, 1
      %v3017 = vsel %vm573, %v3015, %v3016
      %v3018 = vrot.slane %v2242, 1
      %v3019 = vsel %vm573, %v3016, %v3018
      %3022 = vxpose.xlu0.b32.start [1/16] %v2369, 128
      %3023 = vxpose.xlu0.b32.cont [2/16] %v2371, 128
      %3024 = vxpose.xlu0.b32.cont [3/16] %v2374, 128
      %3025 = vxpose.xlu0.b32.cont [4/16] %v2376, 128
      %3026 = vxpose.xlu0.b32.cont [5/16] %v2379, 128
      %3027 = vxpose.xlu0.b32.cont [6/16] %v2381, 128
      %3028 = vxpose.xlu0.b32.cont [7/16] %v2384, 128
      %3029 = vxpose.xlu0.b32.cont [8/16] %v2386, 128
      %3030 = vxpose.xlu0.b32.cont [9/16] %v2389, 128
      %3031 = vxpose.xlu0.b32.cont [10/16] %v2391, 128
      %3032 = vxpose.xlu0.b32.cont [11/16] %v2394, 128
      %3033 = vxpose.xlu0.b32.cont [12/16] %v2396, 128
      %3034 = vxpose.xlu0.b32.cont [13/16] %v2399, 128
      %3035 = vxpose.xlu0.b32.cont [14/16] %v2401, 128
      %3036 = vxpose.xlu0.b32.cont [15/16] %v2404, 128
      %3037 = vxpose.xlu0.b32.end [16/16] %v2406, 128
      %v3038 = vpop.trf.xlu0
      %v3039 = vpop.trf.xlu0
      %v3040 = vpop.trf.xlu0
      %v3041 = vpop.trf.xlu0
      %v3042 = vpop.trf.xlu0
      %v3043 = vpop.trf.xlu0
      %v3044 = vpop.trf.xlu0
      %v3045 = vpop.trf.xlu0
      %v3046 = vpop.trf.xlu0
      %v3047 = vpop.trf.xlu0
      %v3048 = vpop.trf.xlu0
      %v3049 = vpop.trf.xlu0
      %v3050 = vpop.trf.xlu0
      %v3051 = vpop.trf.xlu0
      %v3052 = vpop.trf.xlu0
      %v3053 = vpop.trf.xlu0
      %3054 = vxpose.xlu0.b32.start [1/16] %v2409, 128
      %3055 = vxpose.xlu0.b32.cont [2/16] %v2411, 128
      %3056 = vxpose.xlu0.b32.cont [3/16] %v2414, 128
      %3057 = vxpose.xlu0.b32.cont [4/16] %v2416, 128
      %3058 = vxpose.xlu0.b32.cont [5/16] %v2419, 128
      %3059 = vxpose.xlu0.b32.cont [6/16] %v2421, 128
      %3060 = vxpose.xlu0.b32.cont [7/16] %v2424, 128
      %3061 = vxpose.xlu0.b32.cont [8/16] %v2426, 128
      %3062 = vxpose.xlu0.b32.cont [9/16] %v2429, 128
      %3063 = vxpose.xlu0.b32.cont [10/16] %v2431, 128
      %3064 = vxpose.xlu0.b32.cont [11/16] %v2434, 128
      %3065 = vxpose.xlu0.b32.cont [12/16] %v2436, 128
      %3066 = vxpose.xlu0.b32.cont [13/16] %v2796, 128
      %3067 = vxpose.xlu0.b32.cont [14/16] %v2798, 128
      %3068 = vxpose.xlu0.b32.cont [15/16] %v3017, 128
      %3069 = vxpose.xlu0.b32.end [16/16] %v3019, 128
      %v3070 = vpop.trf.xlu0
      %v3071 = vpop.trf.xlu0
      %v3072 = vpop.trf.xlu0
      %v3073 = vpop.trf.xlu0
      %v3074 = vpop.trf.xlu0
      %v3075 = vpop.trf.xlu0
      %v3076 = vpop.trf.xlu0
      %v3077 = vpop.trf.xlu0
      %v3078 = vpop.trf.xlu0
      %v3079 = vpop.trf.xlu0
      %v3080 = vpop.trf.xlu0
      %v3081 = vpop.trf.xlu0
      %v3082 = vpop.trf.xlu0
      %v3083 = vpop.trf.xlu0
      %v3084 = vpop.trf.xlu0
      %v3085 = vpop.trf.xlu0
      %v3088 = vrot.slane %v3038, 4
      %v3089 = vrot.slane %v3070, 4
      %3092 = vst [vmem:[#allocation3 + $0x30] sm:$0xf0] %v3088
      %3093 = vst [vmem:[#allocation3 + $0x38] sm:$0xf0] %v3089
      %v3094 = vrot.slane %v2240, 2
      %v3095 = vrot.slane %v2241, 2
      %v3096 = vsel %vm758, %v3094, %v3095
      %v3097 = vrot.slane %v2242, 2
      %v3098 = vsel %vm758, %v3095, %v3097
      %3101 = vxpose.xlu0.b32.start [1/16] %v2553, 128
      %3102 = vxpose.xlu0.b32.cont [2/16] %v2555, 128
      %3103 = vxpose.xlu0.b32.cont [3/16] %v2558, 128
      %3104 = vxpose.xlu0.b32.cont [4/16] %v2560, 128
      %3105 = vxpose.xlu0.b32.cont [5/16] %v2563, 128
      %3106 = vxpose.xlu0.b32.cont [6/16] %v2565, 128
      %3107 = vxpose.xlu0.b32.cont [7/16] %v2568, 128
      %3108 = vxpose.xlu0.b32.cont [8/16] %v2570, 128
      %3109 = vxpose.xlu0.b32.cont [9/16] %v2573, 128
      %3110 = vxpose.xlu0.b32.cont [10/16] %v2575, 128
      %3111 = vxpose.xlu0.b32.cont [11/16] %v2578, 128
      %3112 = vxpose.xlu0.b32.cont [12/16] %v2580, 128
      %3113 = vxpose.xlu0.b32.cont [13/16] %v2583, 128
      %3114 = vxpose.xlu0.b32.cont [14/16] %v2585, 128
      %3115 = vxpose.xlu0.b32.cont [15/16] %v2588, 128
      %3116 = vxpose.xlu0.b32.end [16/16] %v2590, 128
      %v3117 = vpop.trf.xlu0
      %v3118 = vpop.trf.xlu0
      %v3119 = vpop.trf.xlu0
      %v3120 = vpop.trf.xlu0
      %v3121 = vpop.trf.xlu0
      %v3122 = vpop.trf.xlu0
      %v3123 = vpop.trf.xlu0
      %v3124 = vpop.trf.xlu0
      %v3125 = vpop.trf.xlu0
      %v3126 = vpop.trf.xlu0
      %v3127 = vpop.trf.xlu0
      %v3128 = vpop.trf.xlu0
      %v3129 = vpop.trf.xlu0
      %v3130 = vpop.trf.xlu0
      %v3131 = vpop.trf.xlu0
      %v3132 = vpop.trf.xlu0
      %3133 = vxpose.xlu0.b32.start [1/16] %v2593, 128
      %3134 = vxpose.xlu0.b32.cont [2/16] %v2595, 128
      %3135 = vxpose.xlu0.b32.cont [3/16] %v2598, 128
      %3136 = vxpose.xlu0.b32.cont [4/16] %v2600, 128
      %3137 = vxpose.xlu0.b32.cont [5/16] %v2603, 128
      %3138 = vxpose.xlu0.b32.cont [6/16] %v2605, 128
      %3139 = vxpose.xlu0.b32.cont [7/16] %v2608, 128
      %3140 = vxpose.xlu0.b32.cont [8/16] %v2610, 128
      %3141 = vxpose.xlu0.b32.cont [9/16] %v2613, 128
      %3142 = vxpose.xlu0.b32.cont [10/16] %v2615, 128
      %3143 = vxpose.xlu0.b32.cont [11/16] %v2618, 128
      %3144 = vxpose.xlu0.b32.cont [12/16] %v2620, 128
      %3145 = vxpose.xlu0.b32.cont [13/16] %v2869, 128
      %3146 = vxpose.xlu0.b32.cont [14/16] %v2871, 128
      %3147 = vxpose.xlu0.b32.cont [15/16] %v3096, 128
      %3148 = vxpose.xlu0.b32.end [16/16] %v3098, 128
      %v3149 = vpop.trf.xlu0
      %v3150 = vpop.trf.xlu0
      %v3151 = vpop.trf.xlu0
      %v3152 = vpop.trf.xlu0
      %v3153 = vpop.trf.xlu0
      %v3154 = vpop.trf.xlu0
      %v3155 = vpop.trf.xlu0
      %v3156 = vpop.trf.xlu0
      %v3157 = vpop.trf.xlu0
      %v3158 = vpop.trf.xlu0
      %v3159 = vpop.trf.xlu0
      %v3160 = vpop.trf.xlu0
      %v3161 = vpop.trf.xlu0
      %v3162 = vpop.trf.xlu0
      %v3163 = vpop.trf.xlu0
      %v3164 = vpop.trf.xlu0
      %3165 = vst [vmem:[#allocation3 + $0x40] sm:$0xf] %v3117
      %3166 = vst [vmem:[#allocation3 + $0x48] sm:$0xf] %v3149
      %v3167 = vld [vmem:[#allocation3] sm:$0xff]
      %v3168 = vld [vmem:[#allocation3 + $0x8] sm:$0xff]
      %v3169 = vld [vmem:[#allocation3 + $0x10] sm:$0xff]
      %v3170 = vld [vmem:[#allocation3 + $0x18] sm:$0xff]
      %v3171 = vld [vmem:[#allocation3 + $0x20] sm:$0xff]
      %v3172 = vld [vmem:[#allocation3 + $0x28] sm:$0xff]
      %v3173 = vld [vmem:[#allocation3 + $0x30] sm:$0xff]
      %v3174 = vld [vmem:[#allocation3 + $0x38] sm:$0xff]
      %v3175 = vld [vmem:[#allocation3 + $0x40] sm:$0xf]
      %v3176 = vld [vmem:[#allocation3 + $0x48] sm:$0xf]
      %3177 = vxpose.xlu0.b32.start [1/16] %v3167, 128
      %3178 = vxpose.xlu0.b32.cont [2/16] %v3169, 128
      %3179 = vxpose.xlu0.b32.cont [3/16] %v3171, 128
      %3180 = vxpose.xlu0.b32.cont [4/16] %v3173, 128
      %3181 = vxpose.xlu0.b32.cont [5/16] %v3175, 128
      %3182 = vxpose.xlu0.b32.cont [6/16] 0.0, 128
      %3183 = vxpose.xlu0.b32.cont [7/16] 0.0, 128
      %3184 = vxpose.xlu0.b32.cont [8/16] 0.0, 128
      %3185 = vxpose.xlu0.b32.cont [9/16] 0.0, 128
      %3186 = vxpose.xlu0.b32.cont [10/16] 0.0, 128
      %3187 = vxpose.xlu0.b32.cont [11/16] 0.0, 128
      %3188 = vxpose.xlu0.b32.cont [12/16] 0.0, 128
      %3189 = vxpose.xlu0.b32.cont [13/16] 0.0, 128
      %3190 = vxpose.xlu0.b32.cont [14/16] 0.0, 128
      %3191 = vxpose.xlu0.b32.cont [15/16] 0.0, 128
      %3192 = vxpose.xlu0.b32.end [16/16] 0.0, 128
      %v3193 = vpop.trf.xlu0
      %v3194 = vpop.trf.xlu0
      %v3195 = vpop.trf.xlu0
      %v3196 = vpop.trf.xlu0
      %v3197 = vpop.trf.xlu0
      %v3198 = vpop.trf.xlu0
      %v3199 = vpop.trf.xlu0
      %v3200 = vpop.trf.xlu0
      %v3201 = vpop.trf.xlu0
      %v3202 = vpop.trf.xlu0
      %v3203 = vpop.trf.xlu0
      %v3204 = vpop.trf.xlu0
      %v3205 = vpop.trf.xlu0
      %v3206 = vpop.trf.xlu0
      %v3207 = vpop.trf.xlu0
      %v3208 = vpop.trf.xlu0
      %3209 = vxpose.xlu0.b32.start [1/16] %v3168, 128
      %3210 = vxpose.xlu0.b32.cont [2/16] %v3170, 128
      %3211 = vxpose.xlu0.b32.cont [3/16] %v3172, 128
      %3212 = vxpose.xlu0.b32.cont [4/16] %v3174, 128
      %3213 = vxpose.xlu0.b32.cont [5/16] %v3176, 128
      %3214 = vxpose.xlu0.b32.cont [6/16] 0.0, 128
      %3215 = vxpose.xlu0.b32.cont [7/16] 0.0, 128
      %3216 = vxpose.xlu0.b32.cont [8/16] 0.0, 128
      %3217 = vxpose.xlu0.b32.cont [9/16] 0.0, 128
      %3218 = vxpose.xlu0.b32.cont [10/16] 0.0, 128
      %3219 = vxpose.xlu0.b32.cont [11/16] 0.0, 128
      %3220 = vxpose.xlu0.b32.cont [12/16] 0.0, 128
      %3221 = vxpose.xlu0.b32.cont [13/16] 0.0, 128
      %3222 = vxpose.xlu0.b32.cont [14/16] 0.0, 128
      %3223 = vxpose.xlu0.b32.cont [15/16] 0.0, 128
      %3224 = vxpose.xlu0.b32.end [16/16] 0.0, 128
      %v3225 = vpop.trf.xlu0
      %v3226 = vpop.trf.xlu0
      %v3227 = vpop.trf.xlu0
      %v3228 = vpop.trf.xlu0
      %v3229 = vpop.trf.xlu0
      %v3230 = vpop.trf.xlu0
      %v3231 = vpop.trf.xlu0
      %v3232 = vpop.trf.xlu0
      %v3233 = vpop.trf.xlu0
      %v3234 = vpop.trf.xlu0
      %v3235 = vpop.trf.xlu0
      %v3236 = vpop.trf.xlu0
      %v3237 = vpop.trf.xlu0
      %v3238 = vpop.trf.xlu0
      %v3239 = vpop.trf.xlu0
      %v3240 = vpop.trf.xlu0
      %v3241 = vld [vmem:[%s3] sm:$0xff]
      %v3242 = vld [vmem:[%s3 + $0x8] sm:$0xff]
      %v3243 = vld [vmem:[%s3 + $0x10] sm:$0xff]
      %v3244 = vld [vmem:[%s3 + $0x18] sm:$0xff]
      %v3245 = vld [vmem:[%s3 + $0x20] sm:$0xf]
      %v3246 = vld [vmem:[%s4] sm:$0x1]
      %v3247 = vld [vmem:[%s4 + $0x1] sm:$0x1]
      %v3248 = vld [vmem:[%s4 + $0x2] sm:$0x1]
      %v3249 = vlaneseq
      %v3250 = vshrl.u32 %v3249, 7
      %v3251 = vsub.s32 0, %v3250
      %v3252 = vrot.slane %v3246, %v3251
      %v3254 = vsel %vm1471, %v3193, 0
      %v3257 = vsel %vm1471, %v3194, 0
      %v3260 = vsel %vm1471, %v3195, 0
      %v3263 = vsel %vm1471, %v3196, 0
      %v3266 = vsel %vm1471, %v3197, 0
      %v3269 = vsel %vm1471, %v3198, 0
      %v3272 = vsel %vm1471, %v3199, 0
      %v3275 = vsel %vm1471, %v3200, 0
      %v3278 = vsel %vm1471, %v3201, 0
      %v3281 = vsel %vm1471, %v3202, 0
      %v3284 = vsel %vm1471, %v3203, 0
      %v3287 = vsel %vm1471, %v3204, 0
      %v3290 = vsel %vm1471, %v3205, 0
      %v3293 = vsel %vm1471, %v3206, 0
      %v3296 = vsel %vm1471, %v3207, 0
      %v3299 = vsel %vm1471, %v3208, 0
      %v3302 = vsel %vm1471, %v3225, 0
      %v3305 = vsel %vm1471, %v3226, 0
      %v3308 = vsel %vm1471, %v3227, 0
      %v3311 = vsel %vm1471, %v3228, 0
      %v3314 = vsel %vm1471, %v3229, 0
      %v3317 = vsel %vm1471, %v3230, 0
      %v3320 = vsel %vm1471, %v3231, 0
      %v3323 = vsel %vm1471, %v3232, 0
      %v3326 = vsel %vm1471, %v3233, 0
      %v3329 = vsel %vm1471, %v3234, 0
      %v3332 = vsel %vm1471, %v3235, 0
      %v3335 = vsel %vm1471, %v3236, 0
      %v3338 = vsel %vm1471, %v3237, 0
      %v3341 = vsel %vm1471, %v3238, 0
      %v3344 = vsel %vm1471, %v3239, 0
      %v3347 = vsel %vm1471, %v3240, 0
      %v3350 = vsel %vm1568, %v3245, 0
      %3352 = vmatprep.subr.mxu0 0.0
      %3353 = vmatpush1.msra.mxu0 %v3241
      %3354 = vmatprep.subr.mxu0 0.0
      %3355 = vmatpush1.msra.mxu0 %v3242
      %3356 = vmatprep.subr.mxu0 0.0
      %3357 = vmatpush1.msra.mxu0 %v3243
      %3358 = vmatprep.subr.mxu0 0.0
      %3359 = vmatpush1.msra.mxu0 %v3244
      %3360 = vmatprep.subr.mxu0 0.0
      %3361 = vmatpush1.msra.mxu0 %v3350
      %3362 = vmatprep.subr.mxu0 0.0
      %3363 = vmatpush1.msra.mxu0 0.0
      %3364 = vmatprep.subr.mxu0 0.0
      %3365 = vmatpush1.msra.mxu0 0.0
      %3366 = vmatprep.subr.mxu0 0.0
      %3367 = vmatpush1.msra.mxu0 0.0
      %3368 = vmatprep.subr.mxu0 0.0
      %3369 = vmatpush1.msra.mxu0 0.0
      %3370 = vmatprep.subr.mxu0 0.0
      %3371 = vmatpush1.msra.mxu0 0.0
      %3372 = vmatprep.subr.mxu0 0.0
      %3373 = vmatpush1.msra.mxu0 0.0
      %3374 = vmatprep.subr.mxu0 0.0
      %3375 = vmatpush1.msra.mxu0 0.0
      %3376 = vmatprep.subr.mxu0 0.0
      %3377 = vmatpush1.msra.mxu0 0.0
      %3378 = vmatprep.subr.mxu0 0.0
      %3379 = vmatpush1.msra.mxu0 0.0
      %3380 = vmatprep.subr.mxu0 0.0
      %3381 = vmatpush1.msra.mxu0 0.0
      %3382 = vmatprep.subr.mxu0 0.0
      %3383 = vmatpush1.msra.mxu0 0.0
      %3384 = vmatprep.subr.mxu0 0.0
      %3385 = vmatpush1.msra.mxu0 0.0
      %3386 = vmatprep.subr.mxu0 0.0
      %3387 = vmatpush1.msra.mxu0 0.0
      %3388 = vmatprep.subr.mxu0 0.0
      %3389 = vmatpush1.msra.mxu0 0.0
      %3390 = vmatprep.subr.mxu0 0.0
      %3391 = vmatpush1.msra.mxu0 0.0
      %3392 = vmatprep.subr.mxu0 0.0
      %3393 = vmatpush1.msra.mxu0 0.0
      %3394 = vmatprep.subr.mxu0 0.0
      %3395 = vmatpush1.msra.mxu0 0.0
      %3396 = vmatprep.subr.mxu0 0.0
      %3397 = vmatpush1.msra.mxu0 0.0
      %3398 = vmatprep.subr.mxu0 0.0
      %3399 = vmatpush1.msra.mxu0 0.0
      %3400 = vmatprep.subr.mxu0 0.0
      %3401 = vmatpush1.msra.mxu0 0.0
      %3402 = vmatprep.subr.mxu0 0.0
      %3403 = vmatpush1.msra.mxu0 0.0
      %3404 = vmatprep.subr.mxu0 0.0
      %3405 = vmatpush1.msra.mxu0 0.0
      %3406 = vmatprep.subr.mxu0 0.0
      %3407 = vmatpush1.msra.mxu0 0.0
      %3408 = vmatprep.subr.mxu0 0.0
      %3409 = vmatpush1.msra.mxu0 0.0
      %3410 = vmatprep.subr.mxu0 0.0
      %3411 = vmatpush1.msra.mxu0 0.0
      %3412 = vmatprep.subr.mxu0 0.0
      %3413 = vmatpush1.msra.mxu0 0.0
      %3414 = vmatprep.subr.mxu0 0.0
      %3415 = vmatpush1.msra.mxu0 0.0
      %3416 = vmatprep.mubr.f32.mxu0 0.0
      %3417 = vmatmul.mubr.f32.gmra.mrb[0].mxu0 %v3254
      %v3418 = vpop.f32.mrb[0].mxu0
      %v3419 = vadd.f32 %v3252, %v3418
      %v3420 = vpop.f32.mrb[0].mxu0
      %3421 = vmatprep.mubr.f32.mxu0 0.0
      %3422 = vmatmul.mubr.f32.gmra.mrb[0].mxu0 %v3257
      %v3423 = vpop.f32.mrb[0].mxu0
      %v3424 = vadd.f32 %v3252, %v3423
      %v3425 = vpop.f32.mrb[0].mxu0
      %3426 = vmatprep.mubr.f32.mxu0 0.0
      %3427 = vmatmul.mubr.f32.gmra.mrb[0].mxu0 %v3260
      %v3428 = vpop.f32.mrb[0].mxu0
      %v3429 = vadd.f32 %v3252, %v3428
      %v3430 = vpop.f32.mrb[0].mxu0
      %3431 = vmatprep.mubr.f32.mxu0 0.0
      %3432 = vmatmul.mubr.f32.gmra.mrb[0].mxu0 %v3263
      %v3433 = vpop.f32.mrb[0].mxu0
      %v3434 = vadd.f32 %v3252, %v3433
      %v3435 = vpop.f32.mrb[0].mxu0
      %3436 = vmatprep.mubr.f32.mxu0 0.0
      %3437 = vmatmul.mubr.f32.gmra.mrb[0].mxu0 %v3266
      %v3438 = vpop.f32.mrb[0].mxu0
      %v3439 = vadd.f32 %v3252, %v3438
      %v3440 = vpop.f32.mrb[0].mxu0
      %3441 = vmatprep.mubr.f32.mxu0 0.0
      %3442 = vmatmul.mubr.f32.gmra.mrb[0].mxu0 %v3269
      %v3443 = vpop.f32.mrb[0].mxu0
      %v3444 = vadd.f32 %v3252, %v3443
      %v3445 = vpop.f32.mrb[0].mxu0
      %3446 = vmatprep.mubr.f32.mxu0 0.0
      %3447 = vmatmul.mubr.f32.gmra.mrb[0].mxu0 %v3272
      %v3448 = vpop.f32.mrb[0].mxu0
      %v3449 = vadd.f32 %v3252, %v3448
      %v3450 = vpop.f32.mrb[0].mxu0
      %3451 = vmatprep.mubr.f32.mxu0 0.0
      %3452 = vmatmul.mubr.f32.gmra.mrb[0].mxu0 %v3275
      %v3453 = vpop.f32.mrb[0].mxu0
      %v3454 = vadd.f32 %v3252, %v3453
      %v3455 = vpop.f32.mrb[0].mxu0
      %3456 = vmatprep.mubr.f32.mxu0 0.0
      %3457 = vmatmul.mubr.f32.gmra.mrb[0].mxu0 %v3278
      %v3458 = vpop.f32.mrb[0].mxu0
      %v3459 = vadd.f32 %v3252, %v3458
      %v3460 = vpop.f32.mrb[0].mxu0
      %3461 = vmatprep.mubr.f32.mxu0 0.0
      %3462 = vmatmul.mubr.f32.gmra.mrb[0].mxu0 %v3281
      %v3463 = vpop.f32.mrb[0].mxu0
      %v3464 = vadd.f32 %v3252, %v3463
      %v3465 = vpop.f32.mrb[0].mxu0
      %3466 = vmatprep.mubr.f32.mxu0 0.0
      %3467 = vmatmul.mubr.f32.gmra.mrb[0].mxu0 %v3284
      %v3468 = vpop.f32.mrb[0].mxu0
      %v3469 = vadd.f32 %v3252, %v3468
      %v3470 = vpop.f32.mrb[0].mxu0
      %3471 = vmatprep.mubr.f32.mxu0 0.0
      %3472 = vmatmul.mubr.f32.gmra.mrb[0].mxu0 %v3287
      %v3473 = vpop.f32.mrb[0].mxu0
      %v3474 = vadd.f32 %v3252, %v3473
      %v3475 = vpop.f32.mrb[0].mxu0
      %3476 = vmatprep.mubr.f32.mxu0 0.0
      %3477 = vmatmul.mubr.f32.gmra.mrb[0].mxu0 %v3290
      %v3478 = vpop.f32.mrb[0].mxu0
      %v3479 = vadd.f32 %v3252, %v3478
      %v3480 = vpop.f32.mrb[0].mxu0
      %3481 = vmatprep.mubr.f32.mxu0 0.0
      %3482 = vmatmul.mubr.f32.gmra.mrb[0].mxu0 %v3293
      %v3483 = vpop.f32.mrb[0].mxu0
      %v3484 = vadd.f32 %v3252, %v3483
      %v3485 = vpop.f32.mrb[0].mxu0
      %3486 = vmatprep.mubr.f32.mxu0 0.0
      %3487 = vmatmul.mubr.f32.gmra.mrb[0].mxu0 %v3296
      %v3488 = vpop.f32.mrb[0].mxu0
      %v3489 = vadd.f32 %v3252, %v3488
      %v3490 = vpop.f32.mrb[0].mxu0
      %3491 = vmatprep.mubr.f32.mxu0 0.0
      %3492 = vmatmul.mubr.f32.gmra.mrb[0].mxu0 %v3299
      %v3493 = vpop.f32.mrb[0].mxu0
      %v3494 = vadd.f32 %v3252, %v3493
      %v3495 = vpop.f32.mrb[0].mxu0
      %3496 = vmatprep.mubr.f32.mxu0 0.0
      %3497 = vmatmul.mubr.f32.gmra.mrb[0].mxu0 %v3302
      %v3498 = vpop.f32.mrb[0].mxu0
      %v3499 = vadd.f32 %v3252, %v3498
      %v3500 = vpop.f32.mrb[0].mxu0
      %3501 = vmatprep.mubr.f32.mxu0 0.0
      %3502 = vmatmul.mubr.f32.gmra.mrb[0].mxu0 %v3305
      %v3503 = vpop.f32.mrb[0].mxu0
      %v3504 = vadd.f32 %v3252, %v3503
      %v3505 = vpop.f32.mrb[0].mxu0
      %3506 = vmatprep.mubr.f32.mxu0 0.0
      %3507 = vmatmul.mubr.f32.gmra.mrb[0].mxu0 %v3308
      %v3508 = vpop.f32.mrb[0].mxu0
      %v3509 = vadd.f32 %v3252, %v3508
      %v3510 = vpop.f32.mrb[0].mxu0
      %3511 = vmatprep.mubr.f32.mxu0 0.0
      %3512 = vmatmul.mubr.f32.gmra.mrb[0].mxu0 %v3311
      %v3513 = vpop.f32.mrb[0].mxu0
      %v3514 = vadd.f32 %v3252, %v3513
      %v3515 = vpop.f32.mrb[0].mxu0
      %3516 = vmatprep.mubr.f32.mxu0 0.0
      %3517 = vmatmul.mubr.f32.gmra.mrb[0].mxu0 %v3314
      %v3518 = vpop.f32.mrb[0].mxu0
      %v3519 = vadd.f32 %v3252, %v3518
      %v3520 = vpop.f32.mrb[0].mxu0
      %3521 = vmatprep.mubr.f32.mxu0 0.0
      %3522 = vmatmul.mubr.f32.gmra.mrb[0].mxu0 %v3317
      %v3523 = vpop.f32.mrb[0].mxu0
      %v3524 = vadd.f32 %v3252, %v3523
      %v3525 = vpop.f32.mrb[0].mxu0
      %3526 = vmatprep.mubr.f32.mxu0 0.0
      %3527 = vmatmul.mubr.f32.gmra.mrb[0].mxu0 %v3320
      %v3528 = vpop.f32.mrb[0].mxu0
      %v3529 = vadd.f32 %v3252, %v3528
      %v3530 = vpop.f32.mrb[0].mxu0
      %3531 = vmatprep.mubr.f32.mxu0 0.0
      %3532 = vmatmul.mubr.f32.gmra.mrb[0].mxu0 %v3323
      %v3533 = vpop.f32.mrb[0].mxu0
      %v3534 = vadd.f32 %v3252, %v3533
      %v3535 = vpop.f32.mrb[0].mxu0
      %3536 = vmatprep.mubr.f32.mxu0 0.0
      %3537 = vmatmul.mubr.f32.gmra.mrb[0].mxu0 %v3326
      %v3538 = vpop.f32.mrb[0].mxu0
      %v3539 = vadd.f32 %v3252, %v3538
      %v3540 = vpop.f32.mrb[0].mxu0
      %3541 = vmatprep.mubr.f32.mxu0 0.0
      %3542 = vmatmul.mubr.f32.gmra.mrb[0].mxu0 %v3329
      %v3543 = vpop.f32.mrb[0].mxu0
      %v3544 = vadd.f32 %v3252, %v3543
      %v3545 = vpop.f32.mrb[0].mxu0
      %3546 = vmatprep.mubr.f32.mxu0 0.0
      %3547 = vmatmul.mubr.f32.gmra.mrb[0].mxu0 %v3332
      %v3548 = vpop.f32.mrb[0].mxu0
      %v3549 = vadd.f32 %v3252, %v3548
      %v3550 = vpop.f32.mrb[0].mxu0
      %3551 = vmatprep.mubr.f32.mxu0 0.0
      %3552 = vmatmul.mubr.f32.gmra.mrb[0].mxu0 %v3335
      %v3553 = vpop.f32.mrb[0].mxu0
      %v3554 = vadd.f32 %v3252, %v3553
      %v3555 = vpop.f32.mrb[0].mxu0
      %3556 = vmatprep.mubr.f32.mxu0 0.0
      %3557 = vmatmul.mubr.f32.gmra.mrb[0].mxu0 %v3338
      %v3558 = vpop.f32.mrb[0].mxu0
      %v3559 = vadd.f32 %v3252, %v3558
      %v3560 = vpop.f32.mrb[0].mxu0
      %3561 = vmatprep.mubr.f32.mxu0 0.0
      %3562 = vmatmul.mubr.f32.gmra.mrb[0].mxu0 %v3341
      %v3563 = vpop.f32.mrb[0].mxu0
      %v3564 = vadd.f32 %v3252, %v3563
      %v3565 = vpop.f32.mrb[0].mxu0
      %3566 = vmatprep.mubr.f32.mxu0 0.0
      %3567 = vmatmul.mubr.f32.gmra.mrb[0].mxu0 %v3344
      %v3568 = vpop.f32.mrb[0].mxu0
      %v3569 = vadd.f32 %v3252, %v3568
      %v3570 = vpop.f32.mrb[0].mxu0
      %3571 = vmatprep.mubr.f32.mxu0 0.0
      %3572 = vmatmul.mubr.f32.gmra.mrb[0].mxu0 %v3347
      %v3573 = vpop.f32.mrb[0].mxu0
      %v3574 = vadd.f32 %v3252, %v3573
      %v3575 = vpop.f32.mrb[0].mxu0
      %3576 = vdwg.mxu0
      %v3577 = vsel %vm294, %v3419, 0.0
      %v3578 = vsel %vm294, %v3424, 0.0
      %v3579 = vadd.f32 %v3577, %v3578
      %v3580 = vsel %vm294, %v3429, 0.0
      %v3581 = vadd.f32 %v3579, %v3580
      %v3582 = vsel %vm294, %v3434, 0.0
      %v3583 = vadd.f32 %v3581, %v3582
      %v3584 = vsel %vm294, %v3439, 0.0
      %v3585 = vadd.f32 %v3583, %v3584
      %v3586 = vsel %vm294, %v3444, 0.0
      %v3587 = vadd.f32 %v3585, %v3586
      %v3588 = vsel %vm294, %v3449, 0.0
      %v3589 = vadd.f32 %v3587, %v3588
      %v3590 = vsel %vm294, %v3454, 0.0
      %v3591 = vadd.f32 %v3589, %v3590
      %v3592 = vsel %vm294, %v3459, 0.0
      %v3593 = vadd.f32 %v3591, %v3592
      %v3594 = vsel %vm294, %v3464, 0.0
      %v3595 = vadd.f32 %v3593, %v3594
      %v3596 = vsel %vm294, %v3469, 0.0
      %v3597 = vadd.f32 %v3595, %v3596
      %v3598 = vsel %vm294, %v3474, 0.0
      %v3599 = vadd.f32 %v3597, %v3598
      %v3600 = vsel %vm294, %v3479, 0.0
      %v3601 = vadd.f32 %v3599, %v3600
      %v3602 = vsel %vm294, %v3484, 0.0
      %v3603 = vadd.f32 %v3601, %v3602
      %v3604 = vsel %vm294, %v3489, 0.0
      %v3605 = vadd.f32 %v3603, %v3604
      %v3606 = vsel %vm294, %v3494, 0.0
      %v3607 = vadd.f32 %v3605, %v3606
      %v3608 = vsel %vm294, %v3499, 0.0
      %v3609 = vadd.f32 %v3607, %v3608
      %v3610 = vsel %vm294, %v3504, 0.0
      %v3611 = vadd.f32 %v3609, %v3610
      %v3612 = vsel %vm294, %v3509, 0.0
      %v3613 = vadd.f32 %v3611, %v3612
      %v3614 = vsel %vm294, %v3514, 0.0
      %v3615 = vadd.f32 %v3613, %v3614
      %v3616 = vsel %vm294, %v3519, 0.0
      %v3617 = vadd.f32 %v3615, %v3616
      %v3618 = vsel %vm294, %v3524, 0.0
      %v3619 = vadd.f32 %v3617, %v3618
      %v3620 = vsel %vm294, %v3529, 0.0
      %v3621 = vadd.f32 %v3619, %v3620
      %v3622 = vsel %vm294, %v3534, 0.0
      %v3623 = vadd.f32 %v3621, %v3622
      %v3624 = vsel %vm294, %v3539, 0.0
      %v3625 = vadd.f32 %v3623, %v3624
      %v3626 = vsel %vm294, %v3544, 0.0
      %v3627 = vadd.f32 %v3625, %v3626
      %v3628 = vsel %vm294, %v3549, 0.0
      %v3629 = vadd.f32 %v3627, %v3628
      %v3630 = vsel %vm294, %v3554, 0.0
      %v3631 = vadd.f32 %v3629, %v3630
      %v3632 = vsel %vm294, %v3559, 0.0
      %v3633 = vadd.f32 %v3631, %v3632
      %v3634 = vsel %vm294, %v3564, 0.0
      %v3635 = vadd.f32 %v3633, %v3634
      %v3636 = vsel %vm294, %v3569, 0.0
      %v3637 = vadd.f32 %v3635, %v3636
      %v3638 = vsel %vm294, %v3574, 0.0
      %v3639 = vadd.f32 %v3637, %v3638
      %v3640 = vrot.slane %v3639, 4
      %v3641 = vadd.f32 %v3639, %v3640
      %v3642 = vrot.slane %v3641, 2
      %v3643 = vadd.f32 %v3641, %v3642
      %v3644 = vrot.slane %v3643, 1
      %v3645 = vadd.f32 %v3643, %v3644
      %v3646 = vmul.f32 %v3645, 0.00390625
      %v3647 = vmul.f32 %v3419, %v3419
      %v3648 = vmul.f32 %v3424, %v3424
      %v3649 = vmul.f32 %v3429, %v3429
      %v3650 = vmul.f32 %v3434, %v3434
      %v3651 = vmul.f32 %v3439, %v3439
      %v3652 = vmul.f32 %v3444, %v3444
      %v3653 = vmul.f32 %v3449, %v3449
      %v3654 = vmul.f32 %v3454, %v3454
      %v3655 = vmul.f32 %v3459, %v3459
      %v3656 = vmul.f32 %v3464, %v3464
      %v3657 = vmul.f32 %v3469, %v3469
      %v3658 = vmul.f32 %v3474, %v3474
      %v3659 = vmul.f32 %v3479, %v3479
      %v3660 = vmul.f32 %v3484, %v3484
      %v3661 = vmul.f32 %v3489, %v3489
      %v3662 = vmul.f32 %v3494, %v3494
      %v3663 = vmul.f32 %v3499, %v3499
      %v3664 = vmul.f32 %v3504, %v3504
      %v3665 = vmul.f32 %v3509, %v3509
      %v3666 = vmul.f32 %v3514, %v3514
      %v3667 = vmul.f32 %v3519, %v3519
      %v3668 = vmul.f32 %v3524, %v3524
      %v3669 = vmul.f32 %v3529, %v3529
      %v3670 = vmul.f32 %v3534, %v3534
      %v3671 = vmul.f32 %v3539, %v3539
      %v3672 = vmul.f32 %v3544, %v3544
      %v3673 = vmul.f32 %v3549, %v3549
      %v3674 = vmul.f32 %v3554, %v3554
      %v3675 = vmul.f32 %v3559, %v3559
      %v3676 = vmul.f32 %v3564, %v3564
      %v3677 = vmul.f32 %v3569, %v3569
      %v3678 = vmul.f32 %v3574, %v3574
      %v3679 = vsel %vm294, %v3647, 0.0
      %v3680 = vsel %vm294, %v3648, 0.0
      %v3681 = vadd.f32 %v3679, %v3680
      %v3682 = vsel %vm294, %v3649, 0.0
      %v3683 = vadd.f32 %v3681, %v3682
      %v3684 = vsel %vm294, %v3650, 0.0
      %v3685 = vadd.f32 %v3683, %v3684
      %v3686 = vsel %vm294, %v3651, 0.0
      %v3687 = vadd.f32 %v3685, %v3686
      %v3688 = vsel %vm294, %v3652, 0.0
      %v3689 = vadd.f32 %v3687, %v3688
      %v3690 = vsel %vm294, %v3653, 0.0
      %v3691 = vadd.f32 %v3689, %v3690
      %v3692 = vsel %vm294, %v3654, 0.0
      %v3693 = vadd.f32 %v3691, %v3692
      %v3694 = vsel %vm294, %v3655, 0.0
      %v3695 = vadd.f32 %v3693, %v3694
      %v3696 = vsel %vm294, %v3656, 0.0
      %v3697 = vadd.f32 %v3695, %v3696
      %v3698 = vsel %vm294, %v3657, 0.0
      %v3699 = vadd.f32 %v3697, %v3698
      %v3700 = vsel %vm294, %v3658, 0.0
      %v3701 = vadd.f32 %v3699, %v3700
      %v3702 = vsel %vm294, %v3659, 0.0
      %v3703 = vadd.f32 %v3701, %v3702
      %v3704 = vsel %vm294, %v3660, 0.0
      %v3705 = vadd.f32 %v3703, %v3704
      %v3706 = vsel %vm294, %v3661, 0.0
      %v3707 = vadd.f32 %v3705, %v3706
      %v3708 = vsel %vm294, %v3662, 0.0
      %v3709 = vadd.f32 %v3707, %v3708
      %v3710 = vsel %vm294, %v3663, 0.0
      %v3711 = vadd.f32 %v3709, %v3710
      %v3712 = vsel %vm294, %v3664, 0.0
      %v3713 = vadd.f32 %v3711, %v3712
      %v3714 = vsel %vm294, %v3665, 0.0
      %v3715 = vadd.f32 %v3713, %v3714
      %v3716 = vsel %vm294, %v3666, 0.0
      %v3717 = vadd.f32 %v3715, %v3716
      %v3718 = vsel %vm294, %v3667, 0.0
      %v3719 = vadd.f32 %v3717, %v3718
      %v3720 = vsel %vm294, %v3668, 0.0
      %v3721 = vadd.f32 %v3719, %v3720
      %v3722 = vsel %vm294, %v3669, 0.0
      %v3723 = vadd.f32 %v3721, %v3722
      %v3724 = vsel %vm294, %v3670, 0.0
      %v3725 = vadd.f32 %v3723, %v3724
      %v3726 = vsel %vm294, %v3671, 0.0
      %v3727 = vadd.f32 %v3725, %v3726
      %v3728 = vsel %vm294, %v3672, 0.0
      %v3729 = vadd.f32 %v3727, %v3728
      %v3730 = vsel %vm294, %v3673, 0.0
      %v3731 = vadd.f32 %v3729, %v3730
      %v3732 = vsel %vm294, %v3674, 0.0
      %v3733 = vadd.f32 %v3731, %v3732
      %v3734 = vsel %vm294, %v3675, 0.0
      %v3735 = vadd.f32 %v3733, %v3734
      %v3736 = vsel %vm294, %v3676, 0.0
      %v3737 = vadd.f32 %v3735, %v3736
      %v3738 = vsel %vm294, %v3677, 0.0
      %v3739 = vadd.f32 %v3737, %v3738
      %v3740 = vsel %vm294, %v3678, 0.0
      %v3741 = vadd.f32 %v3739, %v3740
      %v3742 = vrot.slane %v3741, 4
      %v3743 = vadd.f32 %v3741, %v3742
      %v3744 = vrot.slane %v3743, 2
      %v3745 = vadd.f32 %v3743, %v3744
      %v3746 = vrot.slane %v3745, 1
      %v3747 = vadd.f32 %v3745, %v3746
      %v3748 = vmul.f32 %v3747, 0.00390625
      %v3749 = vmul.f32 %v3646, %v3646
      %v3750 = vsub.f32 %v3748, %v3749
      %v3751 = vmax.f32 %v3750, 0.0
      %v3752 = vadd.f32 %v3751, 1e-05
      %v3753 = vrsqrt.pop %v3752
      %v3754 = vmul.f32 %v3247, %v3753
      %v3755 = vmul.f32 %v3646, %v3754
      %v3756 = vsub.f32 %v3248, %v3755
      %v3757 = vlaneseq
      %v3758 = vshrl.u32 %v3757, 7
      %v3759 = vsub.s32 0, %v3758
      %v3760 = vrot.slane %v3754, %v3759
      %v3761 = vmul.f32 %v3419, %v3760
      %v3762 = vmul.f32 %v3424, %v3760
      %v3763 = vmul.f32 %v3429, %v3760
      %v3764 = vmul.f32 %v3434, %v3760
      %v3765 = vmul.f32 %v3439, %v3760
      %v3766 = vmul.f32 %v3444, %v3760
      %v3767 = vmul.f32 %v3449, %v3760
      %v3768 = vmul.f32 %v3454, %v3760
      %v3769 = vmul.f32 %v3459, %v3760
      %v3770 = vmul.f32 %v3464, %v3760
      %v3771 = vmul.f32 %v3469, %v3760
      %v3772 = vmul.f32 %v3474, %v3760
      %v3773 = vmul.f32 %v3479, %v3760
      %v3774 = vmul.f32 %v3484, %v3760
      %v3775 = vmul.f32 %v3489, %v3760
      %v3776 = vmul.f32 %v3494, %v3760
      %v3777 = vmul.f32 %v3499, %v3760
      %v3778 = vmul.f32 %v3504, %v3760
      %v3779 = vmul.f32 %v3509, %v3760
      %v3780 = vmul.f32 %v3514, %v3760
      %v3781 = vmul.f32 %v3519, %v3760
      %v3782 = vmul.f32 %v3524, %v3760
      %v3783 = vmul.f32 %v3529, %v3760
      %v3784 = vmul.f32 %v3534, %v3760
      %v3785 = vmul.f32 %v3539, %v3760
      %v3786 = vmul.f32 %v3544, %v3760
      %v3787 = vmul.f32 %v3549, %v3760
      %v3788 = vmul.f32 %v3554, %v3760
      %v3789 = vmul.f32 %v3559, %v3760
      %v3790 = vmul.f32 %v3564, %v3760
      %v3791 = vmul.f32 %v3569, %v3760
      %v3792 = vmul.f32 %v3574, %v3760
      %v3793 = vlaneseq
      %v3794 = vshrl.u32 %v3793, 7
      %v3795 = vsub.s32 0, %v3794
      %v3796 = vrot.slane %v3756, %v3795
      %v3797 = vadd.f32 %v3761, %v3796
      %v3798 = vadd.f32 %v3762, %v3796
      %v3799 = vadd.f32 %v3763, %v3796
      %v3800 = vadd.f32 %v3764, %v3796
      %v3801 = vadd.f32 %v3765, %v3796
      %v3802 = vadd.f32 %v3766, %v3796
      %v3803 = vadd.f32 %v3767, %v3796
      %v3804 = vadd.f32 %v3768, %v3796
      %v3805 = vadd.f32 %v3769, %v3796
      %v3806 = vadd.f32 %v3770, %v3796
      %v3807 = vadd.f32 %v3771, %v3796
      %v3808 = vadd.f32 %v3772, %v3796
      %v3809 = vadd.f32 %v3773, %v3796
      %v3810 = vadd.f32 %v3774, %v3796
      %v3811 = vadd.f32 %v3775, %v3796
      %v3812 = vadd.f32 %v3776, %v3796
      %v3813 = vadd.f32 %v3777, %v3796
      %v3814 = vadd.f32 %v3778, %v3796
      %v3815 = vadd.f32 %v3779, %v3796
      %v3816 = vadd.f32 %v3780, %v3796
      %v3817 = vadd.f32 %v3781, %v3796
      %v3818 = vadd.f32 %v3782, %v3796
      %v3819 = vadd.f32 %v3783, %v3796
      %v3820 = vadd.f32 %v3784, %v3796
      %v3821 = vadd.f32 %v3785, %v3796
      %v3822 = vadd.f32 %v3786, %v3796
      %v3823 = vadd.f32 %v3787, %v3796
      %v3824 = vadd.f32 %v3788, %v3796
      %v3825 = vadd.f32 %v3789, %v3796
      %v3826 = vadd.f32 %v3790, %v3796
      %v3827 = vadd.f32 %v3791, %v3796
      %v3828 = vadd.f32 %v3792, %v3796
      %3829 = vxpose.xlu0.b32.start [1/16] %v3797, 128
      %3830 = vxpose.xlu0.b32.cont [2/16] %v3798, 128
      %3831 = vxpose.xlu0.b32.cont [3/16] %v3799, 128
      %3832 = vxpose.xlu0.b32.cont [4/16] %v3800, 128
      %3833 = vxpose.xlu0.b32.cont [5/16] %v3801, 128
      %3834 = vxpose.xlu0.b32.cont [6/16] %v3802, 128
      %3835 = vxpose.xlu0.b32.cont [7/16] %v3803, 128
      %3836 = vxpose.xlu0.b32.cont [8/16] %v3804, 128
      %3837 = vxpose.xlu0.b32.cont [9/16] %v3805, 128
      %3838 = vxpose.xlu0.b32.cont [10/16] %v3806, 128
      %3839 = vxpose.xlu0.b32.cont [11/16] %v3807, 128
      %3840 = vxpose.xlu0.b32.cont [12/16] %v3808, 128
      %3841 = vxpose.xlu0.b32.cont [13/16] %v3809, 128
      %3842 = vxpose.xlu0.b32.cont [14/16] %v3810, 128
      %3843 = vxpose.xlu0.b32.cont [15/16] %v3811, 128
      %3844 = vxpose.xlu0.b32.end [16/16] %v3812, 128
      %v3845 = vpop.trf.xlu0
      %v3846 = vpop.trf.xlu0
      %v3847 = vpop.trf.xlu0
      %v3848 = vpop.trf.xlu0
      %v3849 = vpop.trf.xlu0
      %v3850 = vpop.trf.xlu0
      %v3851 = vpop.trf.xlu0
      %v3852 = vpop.trf.xlu0
      %v3853 = vpop.trf.xlu0
      %v3854 = vpop.trf.xlu0
      %v3855 = vpop.trf.xlu0
      %v3856 = vpop.trf.xlu0
      %v3857 = vpop.trf.xlu0
      %v3858 = vpop.trf.xlu0
      %v3859 = vpop.trf.xlu0
      %v3860 = vpop.trf.xlu0
      %3861 = vxpose.xlu0.b32.start [1/16] %v3813, 128
      %3862 = vxpose.xlu0.b32.cont [2/16] %v3814, 128
      %3863 = vxpose.xlu0.b32.cont [3/16] %v3815, 128
      %3864 = vxpose.xlu0.b32.cont [4/16] %v3816, 128
      %3865 = vxpose.xlu0.b32.cont [5/16] %v3817, 128
      %3866 = vxpose.xlu0.b32.cont [6/16] %v3818, 128
      %3867 = vxpose.xlu0.b32.cont [7/16] %v3819, 128
      %3868 = vxpose.xlu0.b32.cont [8/16] %v3820, 128
      %3869 = vxpose.xlu0.b32.cont [9/16] %v3821, 128
      %3870 = vxpose.xlu0.b32.cont [10/16] %v3822, 128
      %3871 = vxpose.xlu0.b32.cont [11/16] %v3823, 128
      %3872 = vxpose.xlu0.b32.cont [12/16] %v3824, 128
      %3873 = vxpose.xlu0.b32.cont [13/16] %v3825, 128
      %3874 = vxpose.xlu0.b32.cont [14/16] %v3826, 128
      %3875 = vxpose.xlu0.b32.cont [15/16] %v3827, 128
      %3876 = vxpose.xlu0.b32.end [16/16] %v3828, 128
      %v3877 = vpop.trf.xlu0
      %v3878 = vpop.trf.xlu0
      %v3879 = vpop.trf.xlu0
      %v3880 = vpop.trf.xlu0
      %v3881 = vpop.trf.xlu0
      %v3882 = vpop.trf.xlu0
      %v3883 = vpop.trf.xlu0
      %v3884 = vpop.trf.xlu0
      %v3885 = vpop.trf.xlu0
      %v3886 = vpop.trf.xlu0
      %v3887 = vpop.trf.xlu0
      %v3888 = vpop.trf.xlu0
      %v3889 = vpop.trf.xlu0
      %v3890 = vpop.trf.xlu0
      %v3891 = vpop.trf.xlu0
      %v3892 = vpop.trf.xlu0
      %v3895 = vcombine.low %v3845, %v3877
      %v3897 = vadd.f32 %v225, %v3895
      %3898 = vst [vmem:[%s224] sm:$0xff] %v3897
      %p3899 = scmp.lt.s32.totalorder %s16, 1
      %s3900 = scalar_select %p3899, %s16, 1
      %s3901 = smul.addr %s3900, 2
      %s3902 = smul.addr %s3901, 4
      %s3903 = scalar_lea.vmem %s5, %s3902
      // Predicated region
      $region41: #{resnet_block_pallas.1} parent=39 // pred_check
        %p3904 = pneg %p144
      $region42: #{resnet_block_pallas.1} parent=39 // pred_check_branch
        %3906 = sbr.rel (%p3904) target = $region44
      $region43: #{resnet_block_pallas.1} parent=39 // pred_region
        _
      $region44: #{resnet_block_pallas.1} parent=39 // pred_fallthru
        _
    $region40: #{resnet_block_pallas.1} parent=5 // pred_fallthru
      _
    %p3907 = scmp.le.s32.totalorder 2, %s11
    // Predicated region
    $region45: #{resnet_block_pallas.1} parent=5 // pred_check
      %p3908 = pneg %p3907
    $region46: #{resnet_block_pallas.1} parent=5 // pred_check_branch
      %3910 = sbr.rel (%p3908) target = $region48
    $region47: #{resnet_block_pallas.1} parent=5 // pred_region
      %s3911 = ssub.s32 %s11, 2
      // Predicated region
      $region49: #{resnet_block_pallas.1} parent=47 // pred_check
        %p3912 = pneg %p150
      $region50: #{resnet_block_pallas.1} parent=47 // pred_check_branch
        %3914 = sbr.rel (%p3912) target = $region52
      $region51: #{resnet_block_pallas.1} parent=47 // pred_region
        %p3915 = scmp.lt.s32.totalorder %s17, 1
        %s3916 = scalar_select %p3915, %s17, 1
        %s3917 = smul.addr %s3916, 2
        %s3918 = smul.addr %s3917, 4
        %s3919 = scalar_lea.vmem %s5, %s3918
      $region52: #{resnet_block_pallas.1} parent=47 // pred_fallthru
        _
    $region48: #{resnet_block_pallas.1} parent=5 // pred_fallthru
      _
  $region6: #{resnet_block_pallas.1} parent=0 // loop_footer
    %s15 = sadd.s32 1, %s11
  $region7: #{resnet_block_pallas.1} parent=0 // loop_footer_branch
    %10 = sbr.rel target = $region3
  $region8: #{resnet_block_pallas.1} parent=0 // loop_exit
    _

</llo_original>
